<compile_context>
chip_gen: v5e
topology: v5e:2x2
jax: 0.10.0
libtpu: 0.0.40
codegen_flags: <defaults>
</compile_context>

<pallas_src>
import functools

import jax
import jax.numpy as jnp
from jax.experimental import pallas as pl
from jax.experimental.pallas import tpu as pltpu


def _pick_spatial_tile(dhw, cin, s_ch, in_bytes, c_bytes, budget=6 * 2**20):
    """Largest token tile (lane axis) dividing D*H*W that fits a VMEM budget."""
    per_tok = 2 * (cin * in_bytes + s_ch * c_bytes)   # double-buffered in + out
    cap = max(128, budget // max(per_tok, 1))
    if dhw <= cap:
        return dhw
    t = (cap // 128) * 128
    while t >= 128:                                   # prefer multiples of 128
        if dhw % t == 0:
            return t
        t -= 128
    for t in range(min(cap, dhw), 0, -1):
        if dhw % t == 0:
            return t
    return dhw


def _vmem_limit(need_bytes):
    # explicit, generation-safe scoped-VMEM cap (v7x physical VMEM is 64 MiB)
    return int(min(max(4 * need_bytes, 16 * 2**20), 48 * 2**20))


def _shift_lanes(x, delta):
    """result[:, t] = x[:, (t + delta) mod n]; wrapped entries are masked later."""
    n = x.shape[1]
    i = delta % n
    if i == 0:
        return x
    return jnp.concatenate([x[:, i:], x[:, :i]], axis=1)


def fire_module_3d(x_ncdhw, params, eps=1e-5, compute_dtype=jnp.bfloat16):
    N, Cin, D, H, W = x_ncdhw.shape
    S = params["w_sq"].shape[1]
    E = params["w_e1"].shape[1]
    DHW = D * H * W
    HW = H * W
    P = N * DHW
    cdt = compute_dtype
    csz = jnp.dtype(cdt).itemsize
    f32 = jnp.float32

    x3 = x_ncdhw.reshape(N, Cin, DHW)                  # free view of NCDHW

    # ---------------- kernel 1: squeeze 1x1x1 + bias + ReLU + BN partial stats
    T = _pick_spatial_tile(DHW, Cin, S, x_ncdhw.dtype.itemsize, csz)
    nT = DHW // T

    w_sq = params["w_sq"].T.astype(cdt)                # (S, Cin)
    b_sq = params["b_sq"].reshape(S, 1).astype(f32)    # (S, 1)

    def squeeze_kernel(x_ref, w_ref, b_ref, s_ref, sum_ref, sq_ref):
        x = x_ref[0].astype(w_ref.dtype)                               # (Cin, T)
        s = jnp.dot(w_ref[...], x, preferred_element_type=f32)         # (S, T)
        s = jnp.maximum(s + b_ref[...], 0.0)
        s_ref[0] = s.astype(s_ref.dtype)
        sum_ref[0, 0] = jnp.sum(s, axis=1, keepdims=True)              # (S, 1)
        sq_ref[0, 0] = jnp.sum(s * s, axis=1, keepdims=True)           # (S, 1)

    need1 = 2 * (T * Cin * x_ncdhw.dtype.itemsize + T * S * csz) + 4 * S * (Cin + 8)
    s_act, part_sum, part_sq = pl.pallas_call(
        squeeze_kernel,
        out_shape=(
            jax.ShapeDtypeStruct((N, S, DHW), cdt),
            jax.ShapeDtypeStruct((N, nT, S, 1), f32),
            jax.ShapeDtypeStruct((N, nT, S, 1), f32),
        ),
        grid_spec=pltpu.PrefetchScalarGridSpec(
            num_scalar_prefetch=0,
            grid=(N, nT),
            in_specs=[
                pl.BlockSpec((1, Cin, T), lambda n, j: (n, 0, j)),
                pl.BlockSpec((S, Cin), lambda n, j: (0, 0)),
                pl.BlockSpec((S, 1), lambda n, j: (0, 0)),
            ],
            out_specs=[
                pl.BlockSpec((1, S, T), lambda n, j: (n, 0, j)),
                pl.BlockSpec((1, 1, S, 1), lambda n, j: (n, j, 0, 0)),
                pl.BlockSpec((1, 1, S, 1), lambda n, j: (n, j, 0, 0)),
            ],
        ),
        compiler_params=pltpu.CompilerParams(
            dimension_semantics=("parallel", "parallel"),
            vmem_limit_bytes=_vmem_limit(need1),
        ),
    )(x3, w_sq, b_sq)

    # -------- training-mode BatchNorm3d stats + fold affine into expand weights
    ssum = part_sum.sum(axis=(0, 1))[:, 0]             # (S,)
    ssq = part_sq.sum(axis=(0, 1))[:, 0]               # (S,)
    mean = ssum / P
    var = jnp.maximum(ssq / P - mean * mean, 0.0)      # biased variance
    inv_std = jax.lax.rsqrt(var + eps)
    scale = params["gamma"].astype(f32) * inv_std      # (S,)
    shift = params["beta"].astype(f32) - mean * scale  # (S,)

    w1 = params["w_e1"].astype(f32)                    # (S, E)
    w1f = (w1 * scale[:, None]).T.astype(cdt)          # (E, S)
    b1f = (params["b_e1"].astype(f32) + shift @ w1).reshape(E, 1)

    # torch Conv3d weight (E, S, kd, kh, kw) -> (27, E, S), kd-major tap order
    w3 = jnp.transpose(params["w_e3"].astype(f32), (2, 3, 4, 0, 1)).reshape(27, E, S)
    w3f = (w3 * scale[None, None, :]).astype(cdt)      # (27, E, S)
    b3f = (params["b_e3"].astype(f32) + shift @ w3.sum(axis=0).T).reshape(E, 1)

    # Out-of-range taps must see xn == 0  =>  substitute s == -shift/scale.
    # (scale > 0: BatchNorm3d default affine has gamma == 1.)
    pad_col = (-shift / scale).reshape(S, 1).astype(cdt)

    # ---------------- kernel 2: fused expand1x1 + expand3x3 + channel concat
    def expand_kernel(s_ref, w1_ref, w3_ref, b1_ref, b3_ref, pad_ref, out_ref):
        sq = s_ref[0]                                                  # (S, DHW)

        # left branch: 1x1x1 conv (BN folded) + ReLU
        left = jnp.dot(w1_ref[...], sq, preferred_element_type=f32)    # (E, DHW)
        left = jnp.maximum(left + b1_ref[...], 0.0)
        out_ref[0, 0] = left.astype(out_ref.dtype)

        # token -> (d, h, w) coordinates (float math avoids vector int div)
        t = jax.lax.broadcasted_iota(jnp.int32, (1, DHW), 1).astype(f32)
        d = jnp.floor(t / float(HW))
        r = t - d * float(HW)
        h = jnp.floor(r / float(W))
        w = r - h * float(W)

        pad_full = jnp.broadcast_to(pad_ref[...], (S, DHW))            # hoisted
        md = {-1: d >= 1.0, 0: None, 1: d <= float(D - 2)}
        mh = {-1: h >= 1.0, 0: None, 1: h <= float(H - 2)}
        mw = {-1: w >= 1.0, 0: None, 1: w <= float(W - 2)}

        # right branch: 27 lane-shifted windows (VMEM im2col) + masked taps
        acc = jnp.zeros((E, DHW), f32)
        k = 0
        for kd in (-1, 0, 1):
            for kh in (-1, 0, 1):
                for kw in (-1, 0, 1):
                    delta = kd * HW + kh * W + kw
                    win = _shift_lanes(sq, delta)                      # (S, DHW)
                    masks = [m for m in (md[kd], mh[kh], mw[kw]) if m is not None]
                    if masks:
                        valid = functools.reduce(jnp.logical_and, masks)
                        win = jnp.where(valid, win, pad_full)
                    acc = acc + jnp.dot(w3_ref[k], win,
                                        preferred_element_type=f32)
                    k += 1
        right = jnp.maximum(acc + b3_ref[...], 0.0)
        out_ref[0, 1] = right.astype(out_ref.dtype)

    need2 = (2 * (S * DHW * csz + 2 * E * DHW * 4)
             + 28 * E * S * csz + 3 * S * DHW * csz
             + 3 * E * DHW * 4 + 8 * DHW * 4)
    out = pl.pallas_call(
        expand_kernel,
        out_shape=jax.ShapeDtypeStruct((N, 2, E, DHW), f32),
        grid_spec=pltpu.PrefetchScalarGridSpec(
            num_scalar_prefetch=0,
            grid=(N,),
            in_specs=[
                pl.BlockSpec((1, S, DHW), lambda n: (n, 0, 0)),
                pl.BlockSpec((E, S), lambda n: (0, 0)),
                pl.BlockSpec((27, E, S), lambda n: (0, 0, 0)),
                pl.BlockSpec((E, 1), lambda n: (0, 0)),
                pl.BlockSpec((E, 1), lambda n: (0, 0)),
                pl.BlockSpec((S, 1), lambda n: (0, 0)),
            ],
            out_specs=pl.BlockSpec((1, 2, E, DHW), lambda n: (n, 0, 0, 0)),
        ),
        compiler_params=pltpu.CompilerParams(
            dimension_semantics=("parallel",),
            vmem_limit_bytes=_vmem_limit(need2),
        ),
    )(s_act, w1f, w3f, b1f, b3f, pad_col)

    # (N, 2, E, DHW) -> NCDHW: pure view, no data movement.
    return out.reshape(N, 2 * E, D, H, W)


# ---------------------------------------------------------------------------
# Pure-JAX reference (lax conv, f32) for verification
# ---------------------------------------------------------------------------
def reference(x, params, eps=1e-5):
    Cin = params["w_sq"].shape[0]
    S = params["w_sq"].shape[1]
    E = params["w_e1"].shape[1]

    def conv(lhs, w, pad):
        dn = jax.lax.conv_dimension_numbers(lhs.shape, w.shape,
                                            ("NCDHW", "OIDHW", "NCDHW"))
        return jax.lax.conv_general_dilated(lhs, w, (1, 1, 1), pad,
                                            dimension_numbers=dn)

    w_sq = jnp.transpose(params["w_sq"], (1, 0)).reshape(S, Cin, 1, 1, 1)
    s = conv(x, w_sq, "VALID") + params["b_sq"].reshape(1, S, 1, 1, 1)
    s = jnp.maximum(s, 0.0)

    mean = jnp.mean(s, axis=(0, 2, 3, 4), keepdims=True)
    var = jnp.mean((s - mean) ** 2, axis=(0, 2, 3, 4), keepdims=True)
    xn = (s - mean) / jnp.sqrt(var + eps)
    xn = xn * params["gamma"].reshape(1, S, 1, 1, 1) + params["beta"].reshape(1, S, 1, 1, 1)

    w1 = jnp.transpose(params["w_e1"], (1, 0)).reshape(E, S, 1, 1, 1)
    left = jnp.maximum(conv(xn, w1, "VALID") + params["b_e1"].reshape(1, E, 1, 1, 1), 0.0)
    right = jnp.maximum(
        conv(xn, params["w_e3"], ((1, 1), (1, 1), (1, 1)))
        + params["b_e3"].reshape(1, E, 1, 1, 1), 0.0)
    return jnp.concatenate([left, right], axis=1)


if __name__ == "__main__":
    Cin, S, E = 4, 4, 8            # channels_in=4, squeeze=4, expand=8
    N, D, H, W = 2, 8, 8, 8

    key = jax.random.PRNGKey(0)
    ks = jax.random.split(key, 8)
    params = dict(
        w_sq=jax.random.normal(ks[0], (Cin, S), jnp.float32) * 0.5,
        b_sq=jax.random.normal(ks[1], (S,), jnp.float32) * 0.1,
        gamma=jnp.ones((S,), jnp.float32),      # BatchNorm3d default affine
        beta=jnp.zeros((S,), jnp.float32),
        w_e1=jax.random.normal(ks[2], (S, E), jnp.float32) * 0.5,
        b_e1=jax.random.normal(ks[3], (E,), jnp.float32) * 0.1,
        w_e3=jax.random.normal(ks[4], (E, S, 3, 3, 3), jnp.float32) * 0.2,
        b_e3=jax.random.normal(ks[5], (E,), jnp.float32) * 0.1,
    )
    x = jax.random.normal(ks[6], (N, Cin, D, H, W), jnp.float32)

    ref = jax.block_until_ready(reference(x, params))

    # exactness check: f32 compute path must match the reference tightly
    fwd32 = jax.jit(functools.partial(fire_module_3d, params=params,
                                      compute_dtype=jnp.float32))
    out32 = jax.block_until_ready(fwd32(x))
    assert out32.shape == (N, 2 * E, D, H, W), out32.shape
    assert jnp.allclose(out32, ref, atol=5e-4, rtol=5e-4), \
        float(jnp.max(jnp.abs(out32 - ref)))

    # performance path: bf16 MXU operands, f32 accumulation
    fwd_bf16 = jax.jit(functools.partial(fire_module_3d, params=params,
                                         compute_dtype=jnp.bfloat16))
    out_bf16 = jax.block_until_ready(fwd_bf16(x))
    assert out_bf16.shape == (N, 2 * E, D, H, W), out_bf16.shape
    assert jnp.allclose(out_bf16, ref, atol=1e-1, rtol=5e-2), \
        float(jnp.max(jnp.abs(out_bf16 - ref)))

    print("KERNEL_OK")
</pallas_src>

<mosaic_0001>
module attributes {stable_mosaic.version = 11 : i64} {
  func.func @squeeze_kernel(%arg0: i32, %arg1: i32, %arg2: memref<1x4x512xf32, #tpu.memory_space<vmem>>, %arg3: memref<4x4xf32, #tpu.memory_space<vmem>>, %arg4: memref<4x1xf32, #tpu.memory_space<vmem>>, %arg5: memref<1x4x512xf32, #tpu.memory_space<vmem>>, %arg6: memref<1x1x4x1xf32, #tpu.memory_space<vmem>>, %arg7: memref<1x1x4x1xf32, #tpu.memory_space<vmem>>) attributes {dimension_semantics = [#tpu.dimension_semantics<parallel>, #tpu.dimension_semantics<parallel>], iteration_bounds = array<i64: 2, 1>, scalar_prefetch = 0 : i64, scratch_operands = 0 : i64, tpu.core_type = #tpu.core_type<tc>, window_params = [{transform_indices = @transform_0, window_bounds = array<i64: 1, 4, 512>}, {pipeline_mode = #tpu.pipeline_mode<synchronous>, transform_indices = @transform_1, window_bounds = array<i64: 4, 4>}, {pipeline_mode = #tpu.pipeline_mode<synchronous>, transform_indices = @transform_2, window_bounds = array<i64: 4, 1>}, {transform_indices = @transform_3, window_bounds = array<i64: 1, 4, 512>}, {transform_indices = @transform_4, window_bounds = array<i64: 1, 1, 4, 1>}, {transform_indices = @transform_5, window_bounds = array<i64: 1, 1, 4, 1>}]} {
    %c0 = arith.constant 0 : index
    %c0_0 = arith.constant 0 : index
    %c0_1 = arith.constant 0 : index
    %0 = vector.load %arg2[%c0, %c0_0, %c0_1] : memref<1x4x512xf32, #tpu.memory_space<vmem>>, vector<1x4x512xf32>
    %1 = vector.shape_cast %0 : vector<1x4x512xf32> to vector<4x512xf32>
    %c0_2 = arith.constant 0 : index
    %c0_3 = arith.constant 0 : index
    %2 = vector.load %arg3[%c0_2, %c0_3] : memref<4x4xf32, #tpu.memory_space<vmem>>, vector<4x4xf32>
    %cst = arith.constant dense<0.000000e+00> : vector<4x512xf32>
    %3 = tpu.matmul %2, %1, %cst {dimension_numbers = #tpu.dot_dimension_numbers<[1], [0], [0], [1], [0, 0, 1, 1], [], []>} : vector<4x4xf32>, vector<4x512xf32>, vector<4x512xf32> -> vector<4x512xf32>
    %c0_4 = arith.constant 0 : index
    %c0_5 = arith.constant 0 : index
    %4 = vector.load %arg4[%c0_4, %c0_5] : memref<4x1xf32, #tpu.memory_space<vmem>>, vector<4x1xf32>
    %5 = vector.broadcast %4 : vector<4x1xf32> to vector<4x512xf32>
    %6 = arith.addf %3, %5 : vector<4x512xf32>
    %cst_6 = arith.constant 0.000000e+00 : f32
    %7 = vector.broadcast %cst_6 : f32 to vector<4x512xf32>
    %8 = arith.maximumf %6, %7 : vector<4x512xf32>
    %c0_7 = arith.constant 0 : index
    %c0_8 = arith.constant 0 : index
    %c0_9 = arith.constant 0 : index
    %9 = vector.load %arg5[%c0_7, %c0_8, %c0_9] : memref<1x4x512xf32, #tpu.memory_space<vmem>>, vector<1x4x512xf32>
    %10 = vector.shape_cast %9 : vector<1x4x512xf32> to vector<4x512xf32>
    %11 = vector.shape_cast %8 : vector<4x512xf32> to vector<1x4x512xf32>
    tpu.vector_store %arg5[%c0_7, %c0_8, %c0_9], %11 {strides = array<i32>} : memref<1x4x512xf32, #tpu.memory_space<vmem>>, vector<1x4x512xf32>,
    %cst_10 = arith.constant dense<0.000000e+00> : vector<4xf32>
    %12 = vector.multi_reduction <add>, %8, %cst_10 [1] : vector<4x512xf32> to vector<4xf32>
    %13 = vector.shape_cast %12 : vector<4xf32> to vector<4x1xf32>
    %c0_11 = arith.constant 0 : index
    %c0_12 = arith.constant 0 : index
    %c0_13 = arith.constant 0 : index
    %c0_14 = arith.constant 0 : index
    %14 = vector.load %arg6[%c0_11, %c0_12, %c0_13, %c0_14] : memref<1x1x4x1xf32, #tpu.memory_space<vmem>>, vector<1x1x4x1xf32>
    %15 = vector.shape_cast %14 : vector<1x1x4x1xf32> to vector<4x1xf32>
    %16 = vector.shape_cast %13 : vector<4x1xf32> to vector<1x1x4x1xf32>
    tpu.vector_store %arg6[%c0_11, %c0_12, %c0_13, %c0_14], %16 {strides = array<i32>} : memref<1x1x4x1xf32, #tpu.memory_space<vmem>>, vector<1x1x4x1xf32>,
    %17 = arith.mulf %8, %8 : vector<4x512xf32>
    %cst_15 = arith.constant dense<0.000000e+00> : vector<4xf32>
    %18 = vector.multi_reduction <add>, %17, %cst_15 [1] : vector<4x512xf32> to vector<4xf32>
    %19 = vector.shape_cast %18 : vector<4xf32> to vector<4x1xf32>
    %c0_16 = arith.constant 0 : index
    %c0_17 = arith.constant 0 : index
    %c0_18 = arith.constant 0 : index
    %c0_19 = arith.constant 0 : index
    %20 = vector.load %arg7[%c0_16, %c0_17, %c0_18, %c0_19] : memref<1x1x4x1xf32, #tpu.memory_space<vmem>>, vector<1x1x4x1xf32>
    %21 = vector.shape_cast %20 : vector<1x1x4x1xf32> to vector<4x1xf32>
    %22 = vector.shape_cast %19 : vector<4x1xf32> to vector<1x1x4x1xf32>
    tpu.vector_store %arg7[%c0_16, %c0_17, %c0_18, %c0_19], %22 {strides = array<i32>} : memref<1x1x4x1xf32, #tpu.memory_space<vmem>>, vector<1x1x4x1xf32>,
    return
  }
  func.func @transform_0(%arg0: i32, %arg1: i32) -> (i32, i32, i32) {
    %c0_i32 = arith.constant 0 : i32
    %c0_i32_0 = arith.constant 0 : i32
    return %arg0, %c0_i32, %arg1 : i32, i32, i32
  }
  func.func @transform_1(%arg0: i32, %arg1: i32) -> (i32, i32) {
    %c0_i32 = arith.constant 0 : i32
    %c0_i32_0 = arith.constant 0 : i32
    %c0_i32_1 = arith.constant 0 : i32
    return %c0_i32, %c0_i32_0 : i32, i32
  }
  func.func @transform_2(%arg0: i32, %arg1: i32) -> (i32, i32) {
    %c0_i32 = arith.constant 0 : i32
    %c0_i32_0 = arith.constant 0 : i32
    %c0_i32_1 = arith.constant 0 : i32
    return %c0_i32, %c0_i32_0 : i32, i32
  }
  func.func @transform_3(%arg0: i32, %arg1: i32) -> (i32, i32, i32) {
    %c0_i32 = arith.constant 0 : i32
    %c0_i32_0 = arith.constant 0 : i32
    return %arg0, %c0_i32, %arg1 : i32, i32, i32
  }
  func.func @transform_4(%arg0: i32, %arg1: i32) -> (i32, i32, i32, i32) {
    %c0_i32 = arith.constant 0 : i32
    %c0_i32_0 = arith.constant 0 : i32
    %c0_i32_1 = arith.constant 0 : i32
    return %arg0, %arg1, %c0_i32, %c0_i32_0 : i32, i32, i32, i32
  }
  func.func @transform_5(%arg0: i32, %arg1: i32) -> (i32, i32, i32, i32) {
    %c0_i32 = arith.constant 0 : i32
    %c0_i32_0 = arith.constant 0 : i32
    %c0_i32_1 = arith.constant 0 : i32
    return %arg0, %arg1, %c0_i32, %c0_i32_0 : i32, i32, i32, i32
  }
}

module attributes {stable_mosaic.version = 11 : i64} {
  func.func @expand_kernel(%arg0: i32, %arg1: memref<1x4x512xf32, #tpu.memory_space<vmem>>, %arg2: memref<8x4xf32, #tpu.memory_space<vmem>>, %arg3: memref<27x8x4xf32, #tpu.memory_space<vmem>>, %arg4: memref<8x1xf32, #tpu.memory_space<vmem>>, %arg5: memref<8x1xf32, #tpu.memory_space<vmem>>, %arg6: memref<4x1xf32, #tpu.memory_space<vmem>>, %arg7: memref<1x2x8x512xf32, #tpu.memory_space<vmem>>) attributes {dimension_semantics = [#tpu.dimension_semantics<parallel>], iteration_bounds = array<i64: 2>, scalar_prefetch = 0 : i64, scratch_operands = 0 : i64, tpu.core_type = #tpu.core_type<tc>, window_params = [{transform_indices = @transform_0, window_bounds = array<i64: 1, 4, 512>}, {pipeline_mode = #tpu.pipeline_mode<synchronous>, transform_indices = @transform_1, window_bounds = array<i64: 8, 4>}, {pipeline_mode = #tpu.pipeline_mode<synchronous>, transform_indices = @transform_2, window_bounds = array<i64: 27, 8, 4>}, {pipeline_mode = #tpu.pipeline_mode<synchronous>, transform_indices = @transform_3, window_bounds = array<i64: 8, 1>}, {pipeline_mode = #tpu.pipeline_mode<synchronous>, transform_indices = @transform_4, window_bounds = array<i64: 8, 1>}, {pipeline_mode = #tpu.pipeline_mode<synchronous>, transform_indices = @transform_5, window_bounds = array<i64: 4, 1>}, {transform_indices = @transform_6, window_bounds = array<i64: 1, 2, 8, 512>}]} {
    %c0 = arith.constant 0 : index
    %c0_0 = arith.constant 0 : index
    %c0_1 = arith.constant 0 : index
    %0 = vector.load %arg1[%c0, %c0_0, %c0_1] : memref<1x4x512xf32, #tpu.memory_space<vmem>>, vector<1x4x512xf32>
    %1 = vector.shape_cast %0 : vector<1x4x512xf32> to vector<4x512xf32>
    %c0_2 = arith.constant 0 : index
    %c0_3 = arith.constant 0 : index
    %2 = vector.load %arg2[%c0_2, %c0_3] : memref<8x4xf32, #tpu.memory_space<vmem>>, vector<8x4xf32>
    %cst = arith.constant dense<0.000000e+00> : vector<8x512xf32>
    %3 = tpu.matmul %2, %1, %cst {dimension_numbers = #tpu.dot_dimension_numbers<[1], [0], [0], [1], [0, 0, 1, 1], [], []>} : vector<8x4xf32>, vector<4x512xf32>, vector<8x512xf32> -> vector<8x512xf32>
    %c0_4 = arith.constant 0 : index
    %c0_5 = arith.constant 0 : index
    %4 = vector.load %arg4[%c0_4, %c0_5] : memref<8x1xf32, #tpu.memory_space<vmem>>, vector<8x1xf32>
    %5 = vector.broadcast %4 : vector<8x1xf32> to vector<8x512xf32>
    %6 = arith.addf %3, %5 : vector<8x512xf32>
    %cst_6 = arith.constant 0.000000e+00 : f32
    %7 = vector.broadcast %cst_6 : f32 to vector<8x512xf32>
    %8 = arith.maximumf %6, %7 : vector<8x512xf32>
    %c0_7 = arith.constant 0 : index
    %c0_8 = arith.constant 0 : index
    %c0_9 = arith.constant 0 : index
    %c0_10 = arith.constant 0 : index
    %9 = vector.load %arg7[%c0_7, %c0_8, %c0_9, %c0_10] : memref<1x2x8x512xf32, #tpu.memory_space<vmem>>, vector<1x1x8x512xf32>
    %10 = vector.shape_cast %9 : vector<1x1x8x512xf32> to vector<8x512xf32>
    %11 = vector.shape_cast %8 : vector<8x512xf32> to vector<1x1x8x512xf32>
    tpu.vector_store %arg7[%c0_7, %c0_8, %c0_9, %c0_10], %11 {strides = array<i32>} : memref<1x2x8x512xf32, #tpu.memory_space<vmem>>, vector<1x1x8x512xf32>,
    %12 = tpu.iota {dimensions = array<i32: 1>} : vector<1x512xi32>
    %13 = arith.sitofp %12 : vector<1x512xi32> to vector<1x512xf32>
    %cst_11 = arith.constant 6.400000e+01 : f32
    %14 = vector.broadcast %cst_11 : f32 to vector<1x512xf32>
    %15 = arith.divf %13, %14 : vector<1x512xf32>
    %16 = math.floor %15 : vector<1x512xf32>
    %cst_12 = arith.constant 6.400000e+01 : f32
    %17 = vector.broadcast %cst_12 : f32 to vector<1x512xf32>
    %18 = arith.mulf %16, %17 : vector<1x512xf32>
    %19 = arith.subf %13, %18 : vector<1x512xf32>
    %cst_13 = arith.constant 8.000000e+00 : f32
    %20 = vector.broadcast %cst_13 : f32 to vector<1x512xf32>
    %21 = arith.divf %19, %20 : vector<1x512xf32>
    %22 = math.floor %21 : vector<1x512xf32>
    %cst_14 = arith.constant 8.000000e+00 : f32
    %23 = vector.broadcast %cst_14 : f32 to vector<1x512xf32>
    %24 = arith.mulf %22, %23 : vector<1x512xf32>
    %25 = arith.subf %19, %24 : vector<1x512xf32>
    %c0_15 = arith.constant 0 : index
    %c0_16 = arith.constant 0 : index
    %26 = vector.load %arg6[%c0_15, %c0_16] : memref<4x1xf32, #tpu.memory_space<vmem>>, vector<4x1xf32>
    %27 = vector.shape_cast %26 : vector<4x1xf32> to vector<4x1xf32>
    %28 = vector.broadcast %27 : vector<4x1xf32> to vector<4x512xf32>
    %cst_17 = arith.constant 1.000000e+00 : f32
    %29 = vector.broadcast %cst_17 : f32 to vector<1x512xf32>
    %30 = arith.cmpf oge, %16, %29 : vector<1x512xf32>
    %cst_18 = arith.constant 6.000000e+00 : f32
    %31 = vector.broadcast %cst_18 : f32 to vector<1x512xf32>
    %32 = arith.cmpf ole, %16, %31 : vector<1x512xf32>
    %cst_19 = arith.constant 1.000000e+00 : f32
    %33 = vector.broadcast %cst_19 : f32 to vector<1x512xf32>
    %34 = arith.cmpf oge, %22, %33 : vector<1x512xf32>
    %cst_20 = arith.constant 6.000000e+00 : f32
    %35 = vector.broadcast %cst_20 : f32 to vector<1x512xf32>
    %36 = arith.cmpf ole, %22, %35 : vector<1x512xf32>
    %cst_21 = arith.constant 1.000000e+00 : f32
    %37 = vector.broadcast %cst_21 : f32 to vector<1x512xf32>
    %38 = arith.cmpf oge, %25, %37 : vector<1x512xf32>
    %cst_22 = arith.constant 6.000000e+00 : f32
    %39 = vector.broadcast %cst_22 : f32 to vector<1x512xf32>
    %40 = arith.cmpf ole, %25, %39 : vector<1x512xf32>
    %cst_23 = arith.constant 0.000000e+00 : f32
    %41 = vector.broadcast %cst_23 : f32 to vector<8x512xf32>
    %42 = vector.extract_strided_slice %1 {offsets = [0, 439], sizes = [4, 73], strides = [1, 1]} : vector<4x512xf32> to vector<4x73xf32>
    %43 = vector.extract_strided_slice %1 {offsets = [0, 0], sizes = [4, 439], strides = [1, 1]} : vector<4x512xf32> to vector<4x439xf32>
    %44 = tpu.concatenate %42, %43 in 1 : vector<4x73xf32>, vector<4x439xf32> -> vector<4x512xf32>
    %45 = arith.andi %30, %34 : vector<1x512xi1>
    %46 = arith.andi %45, %38 : vector<1x512xi1>
    %47 = vector.shape_cast %46 : vector<1x512xi1> to vector<1x512xi1>
    %48 = vector.broadcast %47 : vector<1x512xi1> to vector<4x512xi1>
    %49 = arith.select %48, %44, %28 : vector<4x512xi1>, vector<4x512xf32>
    %c0_24 = arith.constant 0 : index
    %c0_25 = arith.constant 0 : index
    %c0_26 = arith.constant 0 : index
    %50 = vector.load %arg3[%c0_24, %c0_25, %c0_26] : memref<27x8x4xf32, #tpu.memory_space<vmem>>, vector<1x8x4xf32>
    %51 = vector.shape_cast %50 : vector<1x8x4xf32> to vector<8x4xf32>
    %cst_27 = arith.constant dense<0.000000e+00> : vector<8x512xf32>
    %52 = tpu.matmul %51, %49, %cst_27 {dimension_numbers = #tpu.dot_dimension_numbers<[1], [0], [0], [1], [0, 0, 1, 1], [], []>} : vector<8x4xf32>, vector<4x512xf32>, vector<8x512xf32> -> vector<8x512xf32>
    %53 = arith.addf %41, %52 : vector<8x512xf32>
    %54 = vector.extract_strided_slice %1 {offsets = [0, 440], sizes = [4, 72], strides = [1, 1]} : vector<4x512xf32> to vector<4x72xf32>
    %55 = vector.extract_strided_slice %1 {offsets = [0, 0], sizes = [4, 440], strides = [1, 1]} : vector<4x512xf32> to vector<4x440xf32>
    %56 = tpu.concatenate %54, %55 in 1 : vector<4x72xf32>, vector<4x440xf32> -> vector<4x512xf32>
    %57 = arith.andi %30, %34 : vector<1x512xi1>
    %58 = vector.shape_cast %57 : vector<1x512xi1> to vector<1x512xi1>
    %59 = vector.broadcast %58 : vector<1x512xi1> to vector<4x512xi1>
    %60 = arith.select %59, %56, %28 : vector<4x512xi1>, vector<4x512xf32>
    %c1 = arith.constant 1 : index
    %c0_28 = arith.constant 0 : index
    %c0_29 = arith.constant 0 : index
    %61 = vector.load %arg3[%c1, %c0_28, %c0_29] : memref<27x8x4xf32, #tpu.memory_space<vmem>>, vector<1x8x4xf32>
    %62 = vector.shape_cast %61 : vector<1x8x4xf32> to vector<8x4xf32>
    %cst_30 = arith.constant dense<0.000000e+00> : vector<8x512xf32>
    %63 = tpu.matmul %62, %60, %cst_30 {dimension_numbers = #tpu.dot_dimension_numbers<[1], [0], [0], [1], [0, 0, 1, 1], [], []>} : vector<8x4xf32>, vector<4x512xf32>, vector<8x512xf32> -> vector<8x512xf32>
    %64 = arith.addf %53, %63 : vector<8x512xf32>
    %65 = vector.extract_strided_slice %1 {offsets = [0, 441], sizes = [4, 71], strides = [1, 1]} : vector<4x512xf32> to vector<4x71xf32>
    %66 = vector.extract_strided_slice %1 {offsets = [0, 0], sizes = [4, 441], strides = [1, 1]} : vector<4x512xf32> to vector<4x441xf32>
    %67 = tpu.concatenate %65, %66 in 1 : vector<4x71xf32>, vector<4x441xf32> -> vector<4x512xf32>
    %68 = arith.andi %30, %34 : vector<1x512xi1>
    %69 = arith.andi %68, %40 : vector<1x512xi1>
    %70 = vector.shape_cast %69 : vector<1x512xi1> to vector<1x512xi1>
    %71 = vector.broadcast %70 : vector<1x512xi1> to vector<4x512xi1>
    %72 = arith.select %71, %67, %28 : vector<4x512xi1>, vector<4x512xf32>
    %c2 = arith.constant 2 : index
    %c0_31 = arith.constant 0 : index
    %c0_32 = arith.constant 0 : index
    %73 = vector.load %arg3[%c2, %c0_31, %c0_32] : memref<27x8x4xf32, #tpu.memory_space<vmem>>, vector<1x8x4xf32>
    %74 = vector.shape_cast %73 : vector<1x8x4xf32> to vector<8x4xf32>
    %cst_33 = arith.constant dense<0.000000e+00> : vector<8x512xf32>
    %75 = tpu.matmul %74, %72, %cst_33 {dimension_numbers = #tpu.dot_dimension_numbers<[1], [0], [0], [1], [0, 0, 1, 1], [], []>} : vector<8x4xf32>, vector<4x512xf32>, vector<8x512xf32> -> vector<8x512xf32>
    %76 = arith.addf %64, %75 : vector<8x512xf32>
    %77 = vector.extract_strided_slice %1 {offsets = [0, 447], sizes = [4, 65], strides = [1, 1]} : vector<4x512xf32> to vector<4x65xf32>
    %78 = vector.extract_strided_slice %1 {offsets = [0, 0], sizes = [4, 447], strides = [1, 1]} : vector<4x512xf32> to vector<4x447xf32>
    %79 = tpu.concatenate %77, %78 in 1 : vector<4x65xf32>, vector<4x447xf32> -> vector<4x512xf32>
    %80 = arith.andi %30, %38 : vector<1x512xi1>
    %81 = vector.shape_cast %80 : vector<1x512xi1> to vector<1x512xi1>
    %82 = vector.broadcast %81 : vector<1x512xi1> to vector<4x512xi1>
    %83 = arith.select %82, %79, %28 : vector<4x512xi1>, vector<4x512xf32>
    %c3 = arith.constant 3 : index
    %c0_34 = arith.constant 0 : index
    %c0_35 = arith.constant 0 : index
    %84 = vector.load %arg3[%c3, %c0_34, %c0_35] : memref<27x8x4xf32, #tpu.memory_space<vmem>>, vector<1x8x4xf32>
    %85 = vector.shape_cast %84 : vector<1x8x4xf32> to vector<8x4xf32>
    %cst_36 = arith.constant dense<0.000000e+00> : vector<8x512xf32>
    %86 = tpu.matmul %85, %83, %cst_36 {dimension_numbers = #tpu.dot_dimension_numbers<[1], [0], [0], [1], [0, 0, 1, 1], [], []>} : vector<8x4xf32>, vector<4x512xf32>, vector<8x512xf32> -> vector<8x512xf32>
    %87 = arith.addf %76, %86 : vector<8x512xf32>
    %88 = vector.extract_strided_slice %1 {offsets = [0, 448], sizes = [4, 64], strides = [1, 1]} : vector<4x512xf32> to vector<4x64xf32>
    %89 = vector.extract_strided_slice %1 {offsets = [0, 0], sizes = [4, 448], strides = [1, 1]} : vector<4x512xf32> to vector<4x448xf32>
    %90 = tpu.concatenate %88, %89 in 1 : vector<4x64xf32>, vector<4x448xf32> -> vector<4x512xf32>
    %91 = vector.shape_cast %30 : vector<1x512xi1> to vector<1x512xi1>
    %92 = vector.broadcast %91 : vector<1x512xi1> to vector<4x512xi1>
    %93 = arith.select %92, %90, %28 : vector<4x512xi1>, vector<4x512xf32>
    %c4 = arith.constant 4 : index
    %c0_37 = arith.constant 0 : index
    %c0_38 = arith.constant 0 : index
    %94 = vector.load %arg3[%c4, %c0_37, %c0_38] : memref<27x8x4xf32, #tpu.memory_space<vmem>>, vector<1x8x4xf32>
    %95 = vector.shape_cast %94 : vector<1x8x4xf32> to vector<8x4xf32>
    %cst_39 = arith.constant dense<0.000000e+00> : vector<8x512xf32>
    %96 = tpu.matmul %95, %93, %cst_39 {dimension_numbers = #tpu.dot_dimension_numbers<[1], [0], [0], [1], [0, 0, 1, 1], [], []>} : vector<8x4xf32>, vector<4x512xf32>, vector<8x512xf32> -> vector<8x512xf32>
    %97 = arith.addf %87, %96 : vector<8x512xf32>
    %98 = vector.extract_strided_slice %1 {offsets = [0, 449], sizes = [4, 63], strides = [1, 1]} : vector<4x512xf32> to vector<4x63xf32>
    %99 = vector.extract_strided_slice %1 {offsets = [0, 0], sizes = [4, 449], strides = [1, 1]} : vector<4x512xf32> to vector<4x449xf32>
    %100 = tpu.concatenate %98, %99 in 1 : vector<4x63xf32>, vector<4x449xf32> -> vector<4x512xf32>
    %101 = arith.andi %30, %40 : vector<1x512xi1>
    %102 = vector.shape_cast %101 : vector<1x512xi1> to vector<1x512xi1>
    %103 = vector.broadcast %102 : vector<1x512xi1> to vector<4x512xi1>
    %104 = arith.select %103, %100, %28 : vector<4x512xi1>, vector<4x512xf32>
    %c5 = arith.constant 5 : index
    %c0_40 = arith.constant 0 : index
    %c0_41 = arith.constant 0 : index
    %105 = vector.load %arg3[%c5, %c0_40, %c0_41] : memref<27x8x4xf32, #tpu.memory_space<vmem>>, vector<1x8x4xf32>
    %106 = vector.shape_cast %105 : vector<1x8x4xf32> to vector<8x4xf32>
    %cst_42 = arith.constant dense<0.000000e+00> : vector<8x512xf32>
    %107 = tpu.matmul %106, %104, %cst_42 {dimension_numbers = #tpu.dot_dimension_numbers<[1], [0], [0], [1], [0, 0, 1, 1], [], []>} : vector<8x4xf32>, vector<4x512xf32>, vector<8x512xf32> -> vector<8x512xf32>
    %108 = arith.addf %97, %107 : vector<8x512xf32>
    %109 = vector.extract_strided_slice %1 {offsets = [0, 455], sizes = [4, 57], strides = [1, 1]} : vector<4x512xf32> to vector<4x57xf32>
    %110 = vector.extract_strided_slice %1 {offsets = [0, 0], sizes = [4, 455], strides = [1, 1]} : vector<4x512xf32> to vector<4x455xf32>
    %111 = tpu.concatenate %109, %110 in 1 : vector<4x57xf32>, vector<4x455xf32> -> vector<4x512xf32>
    %112 = arith.andi %30, %36 : vector<1x512xi1>
    %113 = arith.andi %112, %38 : vector<1x512xi1>
    %114 = vector.shape_cast %113 : vector<1x512xi1> to vector<1x512xi1>
    %115 = vector.broadcast %114 : vector<1x512xi1> to vector<4x512xi1>
    %116 = arith.select %115, %111, %28 : vector<4x512xi1>, vector<4x512xf32>
    %c6 = arith.constant 6 : index
    %c0_43 = arith.constant 0 : index
    %c0_44 = arith.constant 0 : index
    %117 = vector.load %arg3[%c6, %c0_43, %c0_44] : memref<27x8x4xf32, #tpu.memory_space<vmem>>, vector<1x8x4xf32>
    %118 = vector.shape_cast %117 : vector<1x8x4xf32> to vector<8x4xf32>
    %cst_45 = arith.constant dense<0.000000e+00> : vector<8x512xf32>
    %119 = tpu.matmul %118, %116, %cst_45 {dimension_numbers = #tpu.dot_dimension_numbers<[1], [0], [0], [1], [0, 0, 1, 1], [], []>} : vector<8x4xf32>, vector<4x512xf32>, vector<8x512xf32> -> vector<8x512xf32>
    %120 = arith.addf %108, %119 : vector<8x512xf32>
    %121 = vector.extract_strided_slice %1 {offsets = [0, 456], sizes = [4, 56], strides = [1, 1]} : vector<4x512xf32> to vector<4x56xf32>
    %122 = vector.extract_strided_slice %1 {offsets = [0, 0], sizes = [4, 456], strides = [1, 1]} : vector<4x512xf32> to vector<4x456xf32>
    %123 = tpu.concatenate %121, %122 in 1 : vector<4x56xf32>, vector<4x456xf32> -> vector<4x512xf32>
    %124 = arith.andi %30, %36 : vector<1x512xi1>
    %125 = vector.shape_cast %124 : vector<1x512xi1> to vector<1x512xi1>
    %126 = vector.broadcast %125 : vector<1x512xi1> to vector<4x512xi1>
    %127 = arith.select %126, %123, %28 : vector<4x512xi1>, vector<4x512xf32>
    %c7 = arith.constant 7 : index
    %c0_46 = arith.constant 0 : index
    %c0_47 = arith.constant 0 : index
    %128 = vector.load %arg3[%c7, %c0_46, %c0_47] : memref<27x8x4xf32, #tpu.memory_space<vmem>>, vector<1x8x4xf32>
    %129 = vector.shape_cast %128 : vector<1x8x4xf32> to vector<8x4xf32>
    %cst_48 = arith.constant dense<0.000000e+00> : vector<8x512xf32>
    %130 = tpu.matmul %129, %127, %cst_48 {dimension_numbers = #tpu.dot_dimension_numbers<[1], [0], [0], [1], [0, 0, 1, 1], [], []>} : vector<8x4xf32>, vector<4x512xf32>, vector<8x512xf32> -> vector<8x512xf32>
    %131 = arith.addf %120, %130 : vector<8x512xf32>
    %132 = vector.extract_strided_slice %1 {offsets = [0, 457], sizes = [4, 55], strides = [1, 1]} : vector<4x512xf32> to vector<4x55xf32>
    %133 = vector.extract_strided_slice %1 {offsets = [0, 0], sizes = [4, 457], strides = [1, 1]} : vector<4x512xf32> to vector<4x457xf32>
    %134 = tpu.concatenate %132, %133 in 1 : vector<4x55xf32>, vector<4x457xf32> -> vector<4x512xf32>
    %135 = arith.andi %30, %36 : vector<1x512xi1>
    %136 = arith.andi %135, %40 : vector<1x512xi1>
    %137 = vector.shape_cast %136 : vector<1x512xi1> to vector<1x512xi1>
    %138 = vector.broadcast %137 : vector<1x512xi1> to vector<4x512xi1>
    %139 = arith.select %138, %134, %28 : vector<4x512xi1>, vector<4x512xf32>
    %c8 = arith.constant 8 : index
    %c0_49 = arith.constant 0 : index
    %c0_50 = arith.constant 0 : index
    %140 = vector.load %arg3[%c8, %c0_49, %c0_50] : memref<27x8x4xf32, #tpu.memory_space<vmem>>, vector<1x8x4xf32>
    %141 = vector.shape_cast %140 : vector<1x8x4xf32> to vector<8x4xf32>
    %cst_51 = arith.constant dense<0.000000e+00> : vector<8x512xf32>
    %142 = tpu.matmul %141, %139, %cst_51 {dimension_numbers = #tpu.dot_dimension_numbers<[1], [0], [0], [1], [0, 0, 1, 1], [], []>} : vector<8x4xf32>, vector<4x512xf32>, vector<8x512xf32> -> vector<8x512xf32>
    %143 = arith.addf %131, %142 : vector<8x512xf32>
    %144 = vector.extract_strided_slice %1 {offsets = [0, 503], sizes = [4, 9], strides = [1, 1]} : vector<4x512xf32> to vector<4x9xf32>
    %145 = vector.extract_strided_slice %1 {offsets = [0, 0], sizes = [4, 503], strides = [1, 1]} : vector<4x512xf32> to vector<4x503xf32>
    %146 = tpu.concatenate %144, %145 in 1 : vector<4x9xf32>, vector<4x503xf32> -> vector<4x512xf32>
    %147 = arith.andi %34, %38 : vector<1x512xi1>
    %148 = vector.shape_cast %147 : vector<1x512xi1> to vector<1x512xi1>
    %149 = vector.broadcast %148 : vector<1x512xi1> to vector<4x512xi1>
    %150 = arith.select %149, %146, %28 : vector<4x512xi1>, vector<4x512xf32>
    %c9 = arith.constant 9 : index
    %c0_52 = arith.constant 0 : index
    %c0_53 = arith.constant 0 : index
    %151 = vector.load %arg3[%c9, %c0_52, %c0_53] : memref<27x8x4xf32, #tpu.memory_space<vmem>>, vector<1x8x4xf32>
    %152 = vector.shape_cast %151 : vector<1x8x4xf32> to vector<8x4xf32>
    %cst_54 = arith.constant dense<0.000000e+00> : vector<8x512xf32>
    %153 = tpu.matmul %152, %150, %cst_54 {dimension_numbers = #tpu.dot_dimension_numbers<[1], [0], [0], [1], [0, 0, 1, 1], [], []>} : vector<8x4xf32>, vector<4x512xf32>, vector<8x512xf32> -> vector<8x512xf32>
    %154 = arith.addf %143, %153 : vector<8x512xf32>
    %155 = vector.extract_strided_slice %1 {offsets = [0, 504], sizes = [4, 8], strides = [1, 1]} : vector<4x512xf32> to vector<4x8xf32>
    %156 = vector.extract_strided_slice %1 {offsets = [0, 0], sizes = [4, 504], strides = [1, 1]} : vector<4x512xf32> to vector<4x504xf32>
    %157 = tpu.concatenate %155, %156 in 1 : vector<4x8xf32>, vector<4x504xf32> -> vector<4x512xf32>
    %158 = vector.shape_cast %34 : vector<1x512xi1> to vector<1x512xi1>
    %159 = vector.broadcast %158 : vector<1x512xi1> to vector<4x512xi1>
    %160 = arith.select %159, %157, %28 : vector<4x512xi1>, vector<4x512xf32>
    %c10 = arith.constant 10 : index
    %c0_55 = arith.constant 0 : index
    %c0_56 = arith.constant 0 : index
    %161 = vector.load %arg3[%c10, %c0_55, %c0_56] : memref<27x8x4xf32, #tpu.memory_space<vmem>>, vector<1x8x4xf32>
    %162 = vector.shape_cast %161 : vector<1x8x4xf32> to vector<8x4xf32>
    %cst_57 = arith.constant dense<0.000000e+00> : vector<8x512xf32>
    %163 = tpu.matmul %162, %160, %cst_57 {dimension_numbers = #tpu.dot_dimension_numbers<[1], [0], [0], [1], [0, 0, 1, 1], [], []>} : vector<8x4xf32>, vector<4x512xf32>, vector<8x512xf32> -> vector<8x512xf32>
    %164 = arith.addf %154, %163 : vector<8x512xf32>
    %165 = vector.extract_strided_slice %1 {offsets = [0, 505], sizes = [4, 7], strides = [1, 1]} : vector<4x512xf32> to vector<4x7xf32>
    %166 = vector.extract_strided_slice %1 {offsets = [0, 0], sizes = [4, 505], strides = [1, 1]} : vector<4x512xf32> to vector<4x505xf32>
    %167 = tpu.concatenate %165, %166 in 1 : vector<4x7xf32>, vector<4x505xf32> -> vector<4x512xf32>
    %168 = arith.andi %34, %40 : vector<1x512xi1>
    %169 = vector.shape_cast %168 : vector<1x512xi1> to vector<1x512xi1>
    %170 = vector.broadcast %169 : vector<1x512xi1> to vector<4x512xi1>
    %171 = arith.select %170, %167, %28 : vector<4x512xi1>, vector<4x512xf32>
    %c11 = arith.constant 11 : index
    %c0_58 = arith.constant 0 : index
    %c0_59 = arith.constant 0 : index
    %172 = vector.load %arg3[%c11, %c0_58, %c0_59] : memref<27x8x4xf32, #tpu.memory_space<vmem>>, vector<1x8x4xf32>
    %173 = vector.shape_cast %172 : vector<1x8x4xf32> to vector<8x4xf32>
    %cst_60 = arith.constant dense<0.000000e+00> : vector<8x512xf32>
    %174 = tpu.matmul %173, %171, %cst_60 {dimension_numbers = #tpu.dot_dimension_numbers<[1], [0], [0], [1], [0, 0, 1, 1], [], []>} : vector<8x4xf32>, vector<4x512xf32>, vector<8x512xf32> -> vector<8x512xf32>
    %175 = arith.addf %164, %174 : vector<8x512xf32>
    %176 = vector.extract_strided_slice %1 {offsets = [0, 511], sizes = [4, 1], strides = [1, 1]} : vector<4x512xf32> to vector<4x1xf32>
    %177 = vector.extract_strided_slice %1 {offsets = [0, 0], sizes = [4, 511], strides = [1, 1]} : vector<4x512xf32> to vector<4x511xf32>
    %178 = tpu.concatenate %176, %177 in 1 : vector<4x1xf32>, vector<4x511xf32> -> vector<4x512xf32>
    %179 = vector.shape_cast %38 : vector<1x512xi1> to vector<1x512xi1>
    %180 = vector.broadcast %179 : vector<1x512xi1> to vector<4x512xi1>
    %181 = arith.select %180, %178, %28 : vector<4x512xi1>, vector<4x512xf32>
    %c12 = arith.constant 12 : index
    %c0_61 = arith.constant 0 : index
    %c0_62 = arith.constant 0 : index
    %182 = vector.load %arg3[%c12, %c0_61, %c0_62] : memref<27x8x4xf32, #tpu.memory_space<vmem>>, vector<1x8x4xf32>
    %183 = vector.shape_cast %182 : vector<1x8x4xf32> to vector<8x4xf32>
    %cst_63 = arith.constant dense<0.000000e+00> : vector<8x512xf32>
    %184 = tpu.matmul %183, %181, %cst_63 {dimension_numbers = #tpu.dot_dimension_numbers<[1], [0], [0], [1], [0, 0, 1, 1], [], []>} : vector<8x4xf32>, vector<4x512xf32>, vector<8x512xf32> -> vector<8x512xf32>
    %185 = arith.addf %175, %184 : vector<8x512xf32>
    %c13 = arith.constant 13 : index
    %c0_64 = arith.constant 0 : index
    %c0_65 = arith.constant 0 : index
    %186 = vector.load %arg3[%c13, %c0_64, %c0_65] : memref<27x8x4xf32, #tpu.memory_space<vmem>>, vector<1x8x4xf32>
    %187 = vector.shape_cast %186 : vector<1x8x4xf32> to vector<8x4xf32>
    %cst_66 = arith.constant dense<0.000000e+00> : vector<8x512xf32>
    %188 = tpu.matmul %187, %1, %cst_66 {dimension_numbers = #tpu.dot_dimension_numbers<[1], [0], [0], [1], [0, 0, 1, 1], [], []>} : vector<8x4xf32>, vector<4x512xf32>, vector<8x512xf32> -> vector<8x512xf32>
    %189 = arith.addf %185, %188 : vector<8x512xf32>
    %190 = vector.extract_strided_slice %1 {offsets = [0, 1], sizes = [4, 511], strides = [1, 1]} : vector<4x512xf32> to vector<4x511xf32>
    %191 = vector.extract_strided_slice %1 {offsets = [0, 0], sizes = [4, 1], strides = [1, 1]} : vector<4x512xf32> to vector<4x1xf32>
    %192 = tpu.concatenate %190, %191 in 1 : vector<4x511xf32>, vector<4x1xf32> -> vector<4x512xf32>
    %193 = vector.shape_cast %40 : vector<1x512xi1> to vector<1x512xi1>
    %194 = vector.broadcast %193 : vector<1x512xi1> to vector<4x512xi1>
    %195 = arith.select %194, %192, %28 : vector<4x512xi1>, vector<4x512xf32>
    %c14 = arith.constant 14 : index
    %c0_67 = arith.constant 0 : index
    %c0_68 = arith.constant 0 : index
    %196 = vector.load %arg3[%c14, %c0_67, %c0_68] : memref<27x8x4xf32, #tpu.memory_space<vmem>>, vector<1x8x4xf32>
    %197 = vector.shape_cast %196 : vector<1x8x4xf32> to vector<8x4xf32>
    %cst_69 = arith.constant dense<0.000000e+00> : vector<8x512xf32>
    %198 = tpu.matmul %197, %195, %cst_69 {dimension_numbers = #tpu.dot_dimension_numbers<[1], [0], [0], [1], [0, 0, 1, 1], [], []>} : vector<8x4xf32>, vector<4x512xf32>, vector<8x512xf32> -> vector<8x512xf32>
    %199 = arith.addf %189, %198 : vector<8x512xf32>
    %200 = vector.extract_strided_slice %1 {offsets = [0, 7], sizes = [4, 505], strides = [1, 1]} : vector<4x512xf32> to vector<4x505xf32>
    %201 = vector.extract_strided_slice %1 {offsets = [0, 0], sizes = [4, 7], strides = [1, 1]} : vector<4x512xf32> to vector<4x7xf32>
    %202 = tpu.concatenate %200, %201 in 1 : vector<4x505xf32>, vector<4x7xf32> -> vector<4x512xf32>
    %203 = arith.andi %36, %38 : vector<1x512xi1>
    %204 = vector.shape_cast %203 : vector<1x512xi1> to vector<1x512xi1>
    %205 = vector.broadcast %204 : vector<1x512xi1> to vector<4x512xi1>
    %206 = arith.select %205, %202, %28 : vector<4x512xi1>, vector<4x512xf32>
    %c15 = arith.constant 15 : index
    %c0_70 = arith.constant 0 : index
    %c0_71 = arith.constant 0 : index
    %207 = vector.load %arg3[%c15, %c0_70, %c0_71] : memref<27x8x4xf32, #tpu.memory_space<vmem>>, vector<1x8x4xf32>
    %208 = vector.shape_cast %207 : vector<1x8x4xf32> to vector<8x4xf32>
    %cst_72 = arith.constant dense<0.000000e+00> : vector<8x512xf32>
    %209 = tpu.matmul %208, %206, %cst_72 {dimension_numbers = #tpu.dot_dimension_numbers<[1], [0], [0], [1], [0, 0, 1, 1], [], []>} : vector<8x4xf32>, vector<4x512xf32>, vector<8x512xf32> -> vector<8x512xf32>
    %210 = arith.addf %199, %209 : vector<8x512xf32>
    %211 = vector.extract_strided_slice %1 {offsets = [0, 8], sizes = [4, 504], strides = [1, 1]} : vector<4x512xf32> to vector<4x504xf32>
    %212 = vector.extract_strided_slice %1 {offsets = [0, 0], sizes = [4, 8], strides = [1, 1]} : vector<4x512xf32> to vector<4x8xf32>
    %213 = tpu.concatenate %211, %212 in 1 : vector<4x504xf32>, vector<4x8xf32> -> vector<4x512xf32>
    %214 = vector.shape_cast %36 : vector<1x512xi1> to vector<1x512xi1>
    %215 = vector.broadcast %214 : vector<1x512xi1> to vector<4x512xi1>
    %216 = arith.select %215, %213, %28 : vector<4x512xi1>, vector<4x512xf32>
    %c16 = arith.constant 16 : index
    %c0_73 = arith.constant 0 : index
    %c0_74 = arith.constant 0 : index
    %217 = vector.load %arg3[%c16, %c0_73, %c0_74] : memref<27x8x4xf32, #tpu.memory_space<vmem>>, vector<1x8x4xf32>
    %218 = vector.shape_cast %217 : vector<1x8x4xf32> to vector<8x4xf32>
    %cst_75 = arith.constant dense<0.000000e+00> : vector<8x512xf32>
    %219 = tpu.matmul %218, %216, %cst_75 {dimension_numbers = #tpu.dot_dimension_numbers<[1], [0], [0], [1], [0, 0, 1, 1], [], []>} : vector<8x4xf32>, vector<4x512xf32>, vector<8x512xf32> -> vector<8x512xf32>
    %220 = arith.addf %210, %219 : vector<8x512xf32>
    %221 = vector.extract_strided_slice %1 {offsets = [0, 9], sizes = [4, 503], strides = [1, 1]} : vector<4x512xf32> to vector<4x503xf32>
    %222 = vector.extract_strided_slice %1 {offsets = [0, 0], sizes = [4, 9], strides = [1, 1]} : vector<4x512xf32> to vector<4x9xf32>
    %223 = tpu.concatenate %221, %222 in 1 : vector<4x503xf32>, vector<4x9xf32> -> vector<4x512xf32>
    %224 = arith.andi %36, %40 : vector<1x512xi1>
    %225 = vector.shape_cast %224 : vector<1x512xi1> to vector<1x512xi1>
    %226 = vector.broadcast %225 : vector<1x512xi1> to vector<4x512xi1>
    %227 = arith.select %226, %223, %28 : vector<4x512xi1>, vector<4x512xf32>
    %c17 = arith.constant 17 : index
    %c0_76 = arith.constant 0 : index
    %c0_77 = arith.constant 0 : index
    %228 = vector.load %arg3[%c17, %c0_76, %c0_77] : memref<27x8x4xf32, #tpu.memory_space<vmem>>, vector<1x8x4xf32>
    %229 = vector.shape_cast %228 : vector<1x8x4xf32> to vector<8x4xf32>
    %cst_78 = arith.constant dense<0.000000e+00> : vector<8x512xf32>
    %230 = tpu.matmul %229, %227, %cst_78 {dimension_numbers = #tpu.dot_dimension_numbers<[1], [0], [0], [1], [0, 0, 1, 1], [], []>} : vector<8x4xf32>, vector<4x512xf32>, vector<8x512xf32> -> vector<8x512xf32>
    %231 = arith.addf %220, %230 : vector<8x512xf32>
    %232 = vector.extract_strided_slice %1 {offsets = [0, 55], sizes = [4, 457], strides = [1, 1]} : vector<4x512xf32> to vector<4x457xf32>
    %233 = vector.extract_strided_slice %1 {offsets = [0, 0], sizes = [4, 55], strides = [1, 1]} : vector<4x512xf32> to vector<4x55xf32>
    %234 = tpu.concatenate %232, %233 in 1 : vector<4x457xf32>, vector<4x55xf32> -> vector<4x512xf32>
    %235 = arith.andi %32, %34 : vector<1x512xi1>
    %236 = arith.andi %235, %38 : vector<1x512xi1>
    %237 = vector.shape_cast %236 : vector<1x512xi1> to vector<1x512xi1>
    %238 = vector.broadcast %237 : vector<1x512xi1> to vector<4x512xi1>
    %239 = arith.select %238, %234, %28 : vector<4x512xi1>, vector<4x512xf32>
    %c18 = arith.constant 18 : index
    %c0_79 = arith.constant 0 : index
    %c0_80 = arith.constant 0 : index
    %240 = vector.load %arg3[%c18, %c0_79, %c0_80] : memref<27x8x4xf32, #tpu.memory_space<vmem>>, vector<1x8x4xf32>
    %241 = vector.shape_cast %240 : vector<1x8x4xf32> to vector<8x4xf32>
    %cst_81 = arith.constant dense<0.000000e+00> : vector<8x512xf32>
    %242 = tpu.matmul %241, %239, %cst_81 {dimension_numbers = #tpu.dot_dimension_numbers<[1], [0], [0], [1], [0, 0, 1, 1], [], []>} : vector<8x4xf32>, vector<4x512xf32>, vector<8x512xf32> -> vector<8x512xf32>
    %243 = arith.addf %231, %242 : vector<8x512xf32>
    %244 = vector.extract_strided_slice %1 {offsets = [0, 56], sizes = [4, 456], strides = [1, 1]} : vector<4x512xf32> to vector<4x456xf32>
    %245 = vector.extract_strided_slice %1 {offsets = [0, 0], sizes = [4, 56], strides = [1, 1]} : vector<4x512xf32> to vector<4x56xf32>
    %246 = tpu.concatenate %244, %245 in 1 : vector<4x456xf32>, vector<4x56xf32> -> vector<4x512xf32>
    %247 = arith.andi %32, %34 : vector<1x512xi1>
    %248 = vector.shape_cast %247 : vector<1x512xi1> to vector<1x512xi1>
    %249 = vector.broadcast %248 : vector<1x512xi1> to vector<4x512xi1>
    %250 = arith.select %249, %246, %28 : vector<4x512xi1>, vector<4x512xf32>
    %c19 = arith.constant 19 : index
    %c0_82 = arith.constant 0 : index
    %c0_83 = arith.constant 0 : index
    %251 = vector.load %arg3[%c19, %c0_82, %c0_83] : memref<27x8x4xf32, #tpu.memory_space<vmem>>, vector<1x8x4xf32>
    %252 = vector.shape_cast %251 : vector<1x8x4xf32> to vector<8x4xf32>
    %cst_84 = arith.constant dense<0.000000e+00> : vector<8x512xf32>
    %253 = tpu.matmul %252, %250, %cst_84 {dimension_numbers = #tpu.dot_dimension_numbers<[1], [0], [0], [1], [0, 0, 1, 1], [], []>} : vector<8x4xf32>, vector<4x512xf32>, vector<8x512xf32> -> vector<8x512xf32>
    %254 = arith.addf %243, %253 : vector<8x512xf32>
    %255 = vector.extract_strided_slice %1 {offsets = [0, 57], sizes = [4, 455], strides = [1, 1]} : vector<4x512xf32> to vector<4x455xf32>
    %256 = vector.extract_strided_slice %1 {offsets = [0, 0], sizes = [4, 57], strides = [1, 1]} : vector<4x512xf32> to vector<4x57xf32>
    %257 = tpu.concatenate %255, %256 in 1 : vector<4x455xf32>, vector<4x57xf32> -> vector<4x512xf32>
    %258 = arith.andi %32, %34 : vector<1x512xi1>
    %259 = arith.andi %258, %40 : vector<1x512xi1>
    %260 = vector.shape_cast %259 : vector<1x512xi1> to vector<1x512xi1>
    %261 = vector.broadcast %260 : vector<1x512xi1> to vector<4x512xi1>
    %262 = arith.select %261, %257, %28 : vector<4x512xi1>, vector<4x512xf32>
    %c20 = arith.constant 20 : index
    %c0_85 = arith.constant 0 : index
    %c0_86 = arith.constant 0 : index
    %263 = vector.load %arg3[%c20, %c0_85, %c0_86] : memref<27x8x4xf32, #tpu.memory_space<vmem>>, vector<1x8x4xf32>
    %264 = vector.shape_cast %263 : vector<1x8x4xf32> to vector<8x4xf32>
    %cst_87 = arith.constant dense<0.000000e+00> : vector<8x512xf32>
    %265 = tpu.matmul %264, %262, %cst_87 {dimension_numbers = #tpu.dot_dimension_numbers<[1], [0], [0], [1], [0, 0, 1, 1], [], []>} : vector<8x4xf32>, vector<4x512xf32>, vector<8x512xf32> -> vector<8x512xf32>
    %266 = arith.addf %254, %265 : vector<8x512xf32>
    %267 = vector.extract_strided_slice %1 {offsets = [0, 63], sizes = [4, 449], strides = [1, 1]} : vector<4x512xf32> to vector<4x449xf32>
    %268 = vector.extract_strided_slice %1 {offsets = [0, 0], sizes = [4, 63], strides = [1, 1]} : vector<4x512xf32> to vector<4x63xf32>
    %269 = tpu.concatenate %267, %268 in 1 : vector<4x449xf32>, vector<4x63xf32> -> vector<4x512xf32>
    %270 = arith.andi %32, %38 : vector<1x512xi1>
    %271 = vector.shape_cast %270 : vector<1x512xi1> to vector<1x512xi1>
    %272 = vector.broadcast %271 : vector<1x512xi1> to vector<4x512xi1>
    %273 = arith.select %272, %269, %28 : vector<4x512xi1>, vector<4x512xf32>
    %c21 = arith.constant 21 : index
    %c0_88 = arith.constant 0 : index
    %c0_89 = arith.constant 0 : index
    %274 = vector.load %arg3[%c21, %c0_88, %c0_89] : memref<27x8x4xf32, #tpu.memory_space<vmem>>, vector<1x8x4xf32>
    %275 = vector.shape_cast %274 : vector<1x8x4xf32> to vector<8x4xf32>
    %cst_90 = arith.constant dense<0.000000e+00> : vector<8x512xf32>
    %276 = tpu.matmul %275, %273, %cst_90 {dimension_numbers = #tpu.dot_dimension_numbers<[1], [0], [0], [1], [0, 0, 1, 1], [], []>} : vector<8x4xf32>, vector<4x512xf32>, vector<8x512xf32> -> vector<8x512xf32>
    %277 = arith.addf %266, %276 : vector<8x512xf32>
    %278 = vector.extract_strided_slice %1 {offsets = [0, 64], sizes = [4, 448], strides = [1, 1]} : vector<4x512xf32> to vector<4x448xf32>
    %279 = vector.extract_strided_slice %1 {offsets = [0, 0], sizes = [4, 64], strides = [1, 1]} : vector<4x512xf32> to vector<4x64xf32>
    %280 = tpu.concatenate %278, %279 in 1 : vector<4x448xf32>, vector<4x64xf32> -> vector<4x512xf32>
    %281 = vector.shape_cast %32 : vector<1x512xi1> to vector<1x512xi1>
    %282 = vector.broadcast %281 : vector<1x512xi1> to vector<4x512xi1>
    %283 = arith.select %282, %280, %28 : vector<4x512xi1>, vector<4x512xf32>
    %c22 = arith.constant 22 : index
    %c0_91 = arith.constant 0 : index
    %c0_92 = arith.constant 0 : index
    %284 = vector.load %arg3[%c22, %c0_91, %c0_92] : memref<27x8x4xf32, #tpu.memory_space<vmem>>, vector<1x8x4xf32>
    %285 = vector.shape_cast %284 : vector<1x8x4xf32> to vector<8x4xf32>
    %cst_93 = arith.constant dense<0.000000e+00> : vector<8x512xf32>
    %286 = tpu.matmul %285, %283, %cst_93 {dimension_numbers = #tpu.dot_dimension_numbers<[1], [0], [0], [1], [0, 0, 1, 1], [], []>} : vector<8x4xf32>, vector<4x512xf32>, vector<8x512xf32> -> vector<8x512xf32>
    %287 = arith.addf %277, %286 : vector<8x512xf32>
    %288 = vector.extract_strided_slice %1 {offsets = [0, 65], sizes = [4, 447], strides = [1, 1]} : vector<4x512xf32> to vector<4x447xf32>
    %289 = vector.extract_strided_slice %1 {offsets = [0, 0], sizes = [4, 65], strides = [1, 1]} : vector<4x512xf32> to vector<4x65xf32>
    %290 = tpu.concatenate %288, %289 in 1 : vector<4x447xf32>, vector<4x65xf32> -> vector<4x512xf32>
    %291 = arith.andi %32, %40 : vector<1x512xi1>
    %292 = vector.shape_cast %291 : vector<1x512xi1> to vector<1x512xi1>
    %293 = vector.broadcast %292 : vector<1x512xi1> to vector<4x512xi1>
    %294 = arith.select %293, %290, %28 : vector<4x512xi1>, vector<4x512xf32>
    %c23 = arith.constant 23 : index
    %c0_94 = arith.constant 0 : index
    %c0_95 = arith.constant 0 : index
    %295 = vector.load %arg3[%c23, %c0_94, %c0_95] : memref<27x8x4xf32, #tpu.memory_space<vmem>>, vector<1x8x4xf32>
    %296 = vector.shape_cast %295 : vector<1x8x4xf32> to vector<8x4xf32>
    %cst_96 = arith.constant dense<0.000000e+00> : vector<8x512xf32>
    %297 = tpu.matmul %296, %294, %cst_96 {dimension_numbers = #tpu.dot_dimension_numbers<[1], [0], [0], [1], [0, 0, 1, 1], [], []>} : vector<8x4xf32>, vector<4x512xf32>, vector<8x512xf32> -> vector<8x512xf32>
    %298 = arith.addf %287, %297 : vector<8x512xf32>
    %299 = vector.extract_strided_slice %1 {offsets = [0, 71], sizes = [4, 441], strides = [1, 1]} : vector<4x512xf32> to vector<4x441xf32>
    %300 = vector.extract_strided_slice %1 {offsets = [0, 0], sizes = [4, 71], strides = [1, 1]} : vector<4x512xf32> to vector<4x71xf32>
    %301 = tpu.concatenate %299, %300 in 1 : vector<4x441xf32>, vector<4x71xf32> -> vector<4x512xf32>
    %302 = arith.andi %32, %36 : vector<1x512xi1>
    %303 = arith.andi %302, %38 : vector<1x512xi1>
    %304 = vector.shape_cast %303 : vector<1x512xi1> to vector<1x512xi1>
    %305 = vector.broadcast %304 : vector<1x512xi1> to vector<4x512xi1>
    %306 = arith.select %305, %301, %28 : vector<4x512xi1>, vector<4x512xf32>
    %c24 = arith.constant 24 : index
    %c0_97 = arith.constant 0 : index
    %c0_98 = arith.constant 0 : index
    %307 = vector.load %arg3[%c24, %c0_97, %c0_98] : memref<27x8x4xf32, #tpu.memory_space<vmem>>, vector<1x8x4xf32>
    %308 = vector.shape_cast %307 : vector<1x8x4xf32> to vector<8x4xf32>
    %cst_99 = arith.constant dense<0.000000e+00> : vector<8x512xf32>
    %309 = tpu.matmul %308, %306, %cst_99 {dimension_numbers = #tpu.dot_dimension_numbers<[1], [0], [0], [1], [0, 0, 1, 1], [], []>} : vector<8x4xf32>, vector<4x512xf32>, vector<8x512xf32> -> vector<8x512xf32>
    %310 = arith.addf %298, %309 : vector<8x512xf32>
    %311 = vector.extract_strided_slice %1 {offsets = [0, 72], sizes = [4, 440], strides = [1, 1]} : vector<4x512xf32> to vector<4x440xf32>
    %312 = vector.extract_strided_slice %1 {offsets = [0, 0], sizes = [4, 72], strides = [1, 1]} : vector<4x512xf32> to vector<4x72xf32>
    %313 = tpu.concatenate %311, %312 in 1 : vector<4x440xf32>, vector<4x72xf32> -> vector<4x512xf32>
    %314 = arith.andi %32, %36 : vector<1x512xi1>
    %315 = vector.shape_cast %314 : vector<1x512xi1> to vector<1x512xi1>
    %316 = vector.broadcast %315 : vector<1x512xi1> to vector<4x512xi1>
    %317 = arith.select %316, %313, %28 : vector<4x512xi1>, vector<4x512xf32>
    %c25 = arith.constant 25 : index
    %c0_100 = arith.constant 0 : index
    %c0_101 = arith.constant 0 : index
    %318 = vector.load %arg3[%c25, %c0_100, %c0_101] : memref<27x8x4xf32, #tpu.memory_space<vmem>>, vector<1x8x4xf32>
    %319 = vector.shape_cast %318 : vector<1x8x4xf32> to vector<8x4xf32>
    %cst_102 = arith.constant dense<0.000000e+00> : vector<8x512xf32>
    %320 = tpu.matmul %319, %317, %cst_102 {dimension_numbers = #tpu.dot_dimension_numbers<[1], [0], [0], [1], [0, 0, 1, 1], [], []>} : vector<8x4xf32>, vector<4x512xf32>, vector<8x512xf32> -> vector<8x512xf32>
    %321 = arith.addf %310, %320 : vector<8x512xf32>
    %322 = vector.extract_strided_slice %1 {offsets = [0, 73], sizes = [4, 439], strides = [1, 1]} : vector<4x512xf32> to vector<4x439xf32>
    %323 = vector.extract_strided_slice %1 {offsets = [0, 0], sizes = [4, 73], strides = [1, 1]} : vector<4x512xf32> to vector<4x73xf32>
    %324 = tpu.concatenate %322, %323 in 1 : vector<4x439xf32>, vector<4x73xf32> -> vector<4x512xf32>
    %325 = arith.andi %32, %36 : vector<1x512xi1>
    %326 = arith.andi %325, %40 : vector<1x512xi1>
    %327 = vector.shape_cast %326 : vector<1x512xi1> to vector<1x512xi1>
    %328 = vector.broadcast %327 : vector<1x512xi1> to vector<4x512xi1>
    %329 = arith.select %328, %324, %28 : vector<4x512xi1>, vector<4x512xf32>
    %c26 = arith.constant 26 : index
    %c0_103 = arith.constant 0 : index
    %c0_104 = arith.constant 0 : index
    %330 = vector.load %arg3[%c26, %c0_103, %c0_104] : memref<27x8x4xf32, #tpu.memory_space<vmem>>, vector<1x8x4xf32>
    %331 = vector.shape_cast %330 : vector<1x8x4xf32> to vector<8x4xf32>
    %cst_105 = arith.constant dense<0.000000e+00> : vector<8x512xf32>
    %332 = tpu.matmul %331, %329, %cst_105 {dimension_numbers = #tpu.dot_dimension_numbers<[1], [0], [0], [1], [0, 0, 1, 1], [], []>} : vector<8x4xf32>, vector<4x512xf32>, vector<8x512xf32> -> vector<8x512xf32>
    %333 = arith.addf %321, %332 : vector<8x512xf32>
    %c0_106 = arith.constant 0 : index
    %c0_107 = arith.constant 0 : index
    %334 = vector.load %arg5[%c0_106, %c0_107] : memref<8x1xf32, #tpu.memory_space<vmem>>, vector<8x1xf32>
    %335 = vector.broadcast %334 : vector<8x1xf32> to vector<8x512xf32>
    %336 = arith.addf %333, %335 : vector<8x512xf32>
    %cst_108 = arith.constant 0.000000e+00 : f32
    %337 = vector.broadcast %cst_108 : f32 to vector<8x512xf32>
    %338 = arith.maximumf %336, %337 : vector<8x512xf32>
    %c0_109 = arith.constant 0 : index
    %c1_110 = arith.constant 1 : index
    %c0_111 = arith.constant 0 : index
    %c0_112 = arith.constant 0 : index
    %339 = vector.load %arg7[%c0_109, %c1_110, %c0_111, %c0_112] : memref<1x2x8x512xf32, #tpu.memory_space<vmem>>, vector<1x1x8x512xf32>
    %340 = vector.shape_cast %339 : vector<1x1x8x512xf32> to vector<8x512xf32>
    %341 = vector.shape_cast %338 : vector<8x512xf32> to vector<1x1x8x512xf32>
    tpu.vector_store %arg7[%c0_109, %c1_110, %c0_111, %c0_112], %341 {strides = array<i32>} : memref<1x2x8x512xf32, #tpu.memory_space<vmem>>, vector<1x1x8x512xf32>,
    return
  }
  func.func @transform_0(%arg0: i32) -> (i32, i32, i32) {
    %c0_i32 = arith.constant 0 : i32
    %c0_i32_0 = arith.constant 0 : i32
    %c0_i32_1 = arith.constant 0 : i32
    return %arg0, %c0_i32, %c0_i32_0 : i32, i32, i32
  }
  func.func @transform_1(%arg0: i32) -> (i32, i32) {
    %c0_i32 = arith.constant 0 : i32
    %c0_i32_0 = arith.constant 0 : i32
    %c0_i32_1 = arith.constant 0 : i32
    return %c0_i32, %c0_i32_0 : i32, i32
  }
  func.func @transform_2(%arg0: i32) -> (i32, i32, i32) {
    %c0_i32 = arith.constant 0 : i32
    %c0_i32_0 = arith.constant 0 : i32
    %c0_i32_1 = arith.constant 0 : i32
    %c0_i32_2 = arith.constant 0 : i32
    return %c0_i32, %c0_i32_0, %c0_i32_1 : i32, i32, i32
  }
  func.func @transform_3(%arg0: i32) -> (i32, i32) {
    %c0_i32 = arith.constant 0 : i32
    %c0_i32_0 = arith.constant 0 : i32
    %c0_i32_1 = arith.constant 0 : i32
    return %c0_i32, %c0_i32_0 : i32, i32
  }
  func.func @transform_4(%arg0: i32) -> (i32, i32) {
    %c0_i32 = arith.constant 0 : i32
    %c0_i32_0 = arith.constant 0 : i32
    %c0_i32_1 = arith.constant 0 : i32
    return %c0_i32, %c0_i32_0 : i32, i32
  }
  func.func @transform_5(%arg0: i32) -> (i32, i32) {
    %c0_i32 = arith.constant 0 : i32
    %c0_i32_0 = arith.constant 0 : i32
    %c0_i32_1 = arith.constant 0 : i32
    return %c0_i32, %c0_i32_0 : i32, i32
  }
  func.func @transform_6(%arg0: i32) -> (i32, i32, i32, i32) {
    %c0_i32 = arith.constant 0 : i32
    %c0_i32_0 = arith.constant 0 : i32
    %c0_i32_1 = arith.constant 0 : i32
    %c0_i32_2 = arith.constant 0 : i32
    return %arg0, %c0_i32, %c0_i32_0, %c0_i32_1 : i32, i32, i32, i32
  }
}

</mosaic_0001>

<llo_original>
// kernel: fire_module_3d.2
$region0: #{fire_module_3d.2}
  #allocation0 [shape = 'u32[]', space=smem, size = 0x4, offset = 0x4, fixed_abs, tag = 'smem constant byte address 0x4 - core index']
  #allocation1 [shape = 'u32[72,128]{1,0:T(1,128)}', space=vmem, size = 0x9000, scoped, tag = 'internal scratch']
  %s0 = inlined_call_operand.vmem [shape: f32[2,4,512], index: 0, kind: input, shape index: {}]
  %s1 = inlined_call_operand.vmem [shape: f32[4,4], index: 1, kind: input, shape index: {}]
  %s2 = inlined_call_operand.vmem [shape: f32[4,1], index: 2, kind: input, shape index: {}]
  %s3 = inlined_call_operand.vmem [shape: f32[2,4,512], index: 3, kind: output, shape index: {0}]
  %s4 = inlined_call_operand.vmem [shape: f32[2,1,4,1], index: 4, kind: output, shape index: {1}]
  %s5 = inlined_call_operand.vmem [shape: f32[2,1,4,1], index: 5, kind: output, shape index: {2}]
  %6 = xla_tuple %s3, %s4, %s5
  %s7 = sld [smem:[#allocation0]]
  $region61: #{fire_module_3d.2} parent=0
    _
  %s9 = ssub.s32 1, %s7
  %s10 = scalar_select 0, %s9, %s7
  loop: start=0, step=1, limit=4
  $region2: #{fire_module_3d.2} parent=0 // loop_pre_header
    _
  $region3: #{fire_module_3d.2} parent=0 // loop_header
    %s12 = sphi 0, %s16
    %p13 = scmp.ge.s32.totalorder %s12, 4
    %s19 = sphi 0, %s31
    %s20 = sphi 0, %s27
    %s21 = sphi 0, %s19
    %s22 = sphi 0, %s20
    %s23 = sphi 0, %s21
    %s24 = sphi 0, %s22
    %s36 = sphi 0, %s38
    %s39 = sphi 0, %s36
    %s40 = sphi 0, %s39
    %s56 = sphi 0, %s40
    %s60 = sphi 0, %s60
    %s62 = sphi 0, %s60
    %s63 = sphi 0, %s62
    %s77 = sphi 0, %s63
    %s81 = sphi 0, %s81
    %s83 = sphi 0, %s81
    %s84 = sphi 0, %s83
    %s98 = sphi 0, %s84
    %s106 = sphi 0, %s108
    %s109 = sphi 0, %s106
    %s110 = sphi 0, %s109
    %s126 = sphi 0, %s110
    %s134 = sphi 0, %s136
    %s137 = sphi 0, %s134
    %s138 = sphi 0, %s137
    %s154 = sphi 0, %s138
    %s162 = sphi 0, %s164
    %s165 = sphi 0, %s162
    %s166 = sphi 0, %s165
    %s182 = sphi 0, %s166
  $region4: #{fire_module_3d.2} parent=0 // loop_header_branch
    %15 = sbr.rel (%p13) target = $region8
  $region5: #{fire_module_3d.2} parent=0 // loop_body
    %s17 = ssub.s32 %s12, 1
    %s18 = ssub.s32 %s12, 2
    %s25 = sadd.s32 1, %s20
    %p26 = scmp.ge.s32.totalorder %s25, 1
    %s27 = scalar_select %p26, 0, %s25
    %s28 = sadd.s32 1, %s19
    %s29 = scalar_select %p26, %s28, %s19
    %p30 = scmp.ge.s32.totalorder %s29, 2
    %s31 = scalar_select %p30, 0, %s29
    %s32 = ssub.s32 %s19, %s31
    %s33 = ssub.s32 %s20, %s27
    %s34 = sor.u32 %s32, %s33
    %p35 = scmp.eq.s32.totalorder %s34, 0
    %s37 = sadd.s32 %s36, 1
    %s38 = scalar_select %p35, %s36, %s37
    %p41 = pneg %p35
    %p42 = scmp.eq.s32.totalorder %s12, 1
    %p43 = por %p41, %p42
    %p44 = scmp.ne.s32.totalorder %s36, %s39
    %p45 = scmp.eq.s32.totalorder %s12, 0
    %p46 = por %p44, %p45
    %p47 = scmp.ne.s32.totalorder %s36, %s39
    %p48 = scmp.eq.s32.totalorder %s17, 1
    %p49 = por %p47, %p48
    %p50 = scmp.ne.s32.totalorder %s39, %s40
    %p51 = scmp.eq.s32.totalorder %s17, 0
    %p52 = por %p50, %p51
    %p53 = scmp.ne.s32.totalorder %s39, %s40
    %p54 = scmp.eq.s32.totalorder %s18, 1
    %p55 = por %p53, %p54
    %p57 = scmp.ne.s32.totalorder %s40, %s56
    %p58 = scmp.eq.s32.totalorder %s18, 0
    %p59 = por %p57, %p58
    %s61 = sadd.s32 %s60, 1
    %p64 = scmp.eq.s32.totalorder %s12, 1
    %p65 = scmp.ne.s32.totalorder %s60, %s62
    %p66 = scmp.eq.s32.totalorder %s12, 0
    %p67 = por %p65, %p66
    %p68 = scmp.ne.s32.totalorder %s60, %s62
    %p69 = scmp.eq.s32.totalorder %s17, 1
    %p70 = por %p68, %p69
    %p71 = scmp.ne.s32.totalorder %s62, %s63
    %p72 = scmp.eq.s32.totalorder %s17, 0
    %p73 = por %p71, %p72
    %p74 = scmp.ne.s32.totalorder %s62, %s63
    %p75 = scmp.eq.s32.totalorder %s18, 1
    %p76 = por %p74, %p75
    %p78 = scmp.ne.s32.totalorder %s63, %s77
    %p79 = scmp.eq.s32.totalorder %s18, 0
    %p80 = por %p78, %p79
    %s82 = sadd.s32 %s81, 1
    %p85 = scmp.eq.s32.totalorder %s12, 1
    %p86 = scmp.ne.s32.totalorder %s81, %s83
    %p87 = scmp.eq.s32.totalorder %s12, 0
    %p88 = por %p86, %p87
    %p89 = scmp.ne.s32.totalorder %s81, %s83
    %p90 = scmp.eq.s32.totalorder %s17, 1
    %p91 = por %p89, %p90
    %p92 = scmp.ne.s32.totalorder %s83, %s84
    %p93 = scmp.eq.s32.totalorder %s17, 0
    %p94 = por %p92, %p93
    %p95 = scmp.ne.s32.totalorder %s83, %s84
    %p96 = scmp.eq.s32.totalorder %s18, 1
    %p97 = por %p95, %p96
    %p99 = scmp.ne.s32.totalorder %s84, %s98
    %p100 = scmp.eq.s32.totalorder %s18, 0
    %p101 = por %p99, %p100
    %s102 = ssub.s32 %s19, %s31
    %s103 = ssub.s32 %s20, %s27
    %s104 = sor.u32 %s102, %s103
    %p105 = scmp.eq.s32.totalorder %s104, 0
    %s107 = sadd.s32 %s106, 1
    %s108 = scalar_select %p105, %s106, %s107
    %p111 = pneg %p105
    %p112 = scmp.eq.s32.totalorder %s12, 1
    %p113 = por %p111, %p112
    %p114 = scmp.ne.s32.totalorder %s106, %s109
    %p115 = scmp.eq.s32.totalorder %s12, 0
    %p116 = por %p114, %p115
    %p117 = scmp.ne.s32.totalorder %s106, %s109
    %p118 = scmp.eq.s32.totalorder %s17, 1
    %p119 = por %p117, %p118
    %p120 = scmp.ne.s32.totalorder %s109, %s110
    %p121 = scmp.eq.s32.totalorder %s17, 0
    %p122 = por %p120, %p121
    %p123 = scmp.ne.s32.totalorder %s109, %s110
    %p124 = scmp.eq.s32.totalorder %s18, 1
    %p125 = por %p123, %p124
    %p127 = scmp.ne.s32.totalorder %s110, %s126
    %p128 = scmp.eq.s32.totalorder %s18, 0
    %p129 = por %p127, %p128
    %s130 = ssub.s32 %s19, %s31
    %s131 = ssub.s32 %s20, %s27
    %s132 = sor.u32 %s130, %s131
    %p133 = scmp.eq.s32.totalorder %s132, 0
    %s135 = sadd.s32 %s134, 1
    %s136 = scalar_select %p133, %s134, %s135
    %p139 = pneg %p133
    %p140 = scmp.eq.s32.totalorder %s12, 1
    %p141 = por %p139, %p140
    %p142 = scmp.ne.s32.totalorder %s134, %s137
    %p143 = scmp.eq.s32.totalorder %s12, 0
    %p144 = por %p142, %p143
    %p145 = scmp.ne.s32.totalorder %s134, %s137
    %p146 = scmp.eq.s32.totalorder %s17, 1
    %p147 = por %p145, %p146
    %p148 = scmp.ne.s32.totalorder %s137, %s138
    %p149 = scmp.eq.s32.totalorder %s17, 0
    %p150 = por %p148, %p149
    %p151 = scmp.ne.s32.totalorder %s137, %s138
    %p152 = scmp.eq.s32.totalorder %s18, 1
    %p153 = por %p151, %p152
    %p155 = scmp.ne.s32.totalorder %s138, %s154
    %p156 = scmp.eq.s32.totalorder %s18, 0
    %p157 = por %p155, %p156
    %s158 = ssub.s32 %s19, %s31
    %s159 = ssub.s32 %s20, %s27
    %s160 = sor.u32 %s158, %s159
    %p161 = scmp.eq.s32.totalorder %s160, 0
    %s163 = sadd.s32 %s162, 1
    %s164 = scalar_select %p161, %s162, %s163
    %p167 = pneg %p161
    %p168 = scmp.eq.s32.totalorder %s12, 1
    %p169 = por %p167, %p168
    %p170 = scmp.ne.s32.totalorder %s162, %s165
    %p171 = scmp.eq.s32.totalorder %s12, 0
    %p172 = por %p170, %p171
    %p173 = scmp.ne.s32.totalorder %s162, %s165
    %p174 = scmp.eq.s32.totalorder %s17, 1
    %p175 = por %p173, %p174
    %p176 = scmp.ne.s32.totalorder %s165, %s166
    %p177 = scmp.eq.s32.totalorder %s17, 0
    %p178 = por %p176, %p177
    %p179 = scmp.ne.s32.totalorder %s165, %s166
    %p180 = scmp.eq.s32.totalorder %s18, 1
    %p181 = por %p179, %p180
    %p183 = scmp.ne.s32.totalorder %s166, %s182
    %p184 = scmp.eq.s32.totalorder %s18, 0
    %p185 = por %p183, %p184
    %p186 = scmp.le.s32.totalorder 1, %s12
    %p187 = scmp.lt.s32.totalorder %s12, 3
    %p188 = pnand %p186, %p187
    %p189 = pneg %p188
    // Predicated region
    $region9: #{fire_module_3d.2} parent=5 // pred_check
      _
    $region10: #{fire_module_3d.2} parent=5 // pred_check_branch
      %191 = sbr.rel (%p188) target = $region12
    $region11: #{fire_module_3d.2} parent=5 // pred_region
      %s192 = ssub.s32 %s12, 1
      // Predicated region
      $region13: #{fire_module_3d.2} parent=11 // pred_check
        %p193 = pneg %p73
      $region14: #{fire_module_3d.2} parent=11 // pred_check_branch
        %195 = sbr.rel (%p193) target = $region16
      $region15: #{fire_module_3d.2} parent=11 // pred_region
        _
      $region16: #{fire_module_3d.2} parent=11 // pred_fallthru
        _
      // Predicated region
      $region17: #{fire_module_3d.2} parent=11 // pred_check
        %p196 = pneg %p94
      $region18: #{fire_module_3d.2} parent=11 // pred_check_branch
        %198 = sbr.rel (%p196) target = $region20
      $region19: #{fire_module_3d.2} parent=11 // pred_region
        _
      $region20: #{fire_module_3d.2} parent=11 // pred_fallthru
        _
    $region12: #{fire_module_3d.2} parent=5 // pred_fallthru
      _
    %p199 = scmp.lt.s32.totalorder %s12, 2
    // Predicated region
    $region21: #{fire_module_3d.2} parent=5 // pred_check
      %p200 = pneg %p199
    $region22: #{fire_module_3d.2} parent=5 // pred_check_branch
      %202 = sbr.rel (%p200) target = $region24
    $region23: #{fire_module_3d.2} parent=5 // pred_region
      // Predicated region
      $region25: #{fire_module_3d.2} parent=23 // pred_check
        %p203 = pneg %p46
      $region26: #{fire_module_3d.2} parent=23 // pred_check_branch
        %205 = sbr.rel (%p203) target = $region28
      $region27: #{fire_module_3d.2} parent=23 // pred_region
        %s206 = smul.u32 4, %s20
        %p207 = scmp.lt.s32.totalorder %s19, 1
        %s208 = scalar_select %p207, %s19, 1
        %p209 = scmp.lt.s32.totalorder %s206, 3
        %s210 = scalar_select %p209, %s206, 3
        %s211 = smul.addr %s208, 4
        %s212 = sadd.s32 %s210, %s211
        %s213 = smul.addr %s212, 4
        %s214 = scalar_lea.vmem %s0, %s213
        %s215 = smul.u32 4, %s20
      $region28: #{fire_module_3d.2} parent=23 // pred_fallthru
        _
    $region24: #{fire_module_3d.2} parent=5 // pred_fallthru
      _
    %p216 = scmp.le.s32.totalorder 1, %s12
    %p217 = scmp.lt.s32.totalorder %s12, 3
    %p218 = pnand %p216, %p217
    %p219 = pneg %p218
    // Predicated region
    $region29: #{fire_module_3d.2} parent=5 // pred_check
      _
    $region30: #{fire_module_3d.2} parent=5 // pred_check_branch
      %221 = sbr.rel (%p218) target = $region32
    $region31: #{fire_module_3d.2} parent=5 // pred_region
      %s222 = ssub.s32 %s12, 1
      %s223 = smul.u32 4, %s22
      %p224 = scmp.lt.s32.totalorder %s21, 1
      %s225 = scalar_select %p224, %s21, 1
      %p226 = scmp.lt.s32.totalorder %s223, 3
      %s227 = scalar_select %p226, %s223, 3
      %s228 = smul.addr %s225, 4
      %s229 = sadd.s32 %s227, %s228
      %s230 = smul.addr %s229, 4
      %s231 = scalar_lea.vmem %s0, %s230
      %p232 = pneg %p52
      %p233 = pneg %p49
      %p234 = pneg %p73
      %p235 = pneg %p70
      %p236 = pneg %p94
      %p237 = pneg %p91
      %p238 = pneg %p122
      %p239 = pneg %p119
      %s240 = smul.u32 4, %s22
      %p241 = scmp.lt.s32.totalorder %s21, 1
      %s242 = scalar_select %p241, %s21, 1
      %p243 = scmp.lt.s32.totalorder %s240, 3
      %s244 = scalar_select %p243, %s240, 3
      %s245 = smul.addr %s242, 4
      %s246 = sadd.s32 %s244, %s245
      %s247 = smul.addr %s246, 4
      %s248 = scalar_lea.vmem %s3, %s247
      %p249 = pneg %p150
      %p250 = pneg %p147
      %p251 = scmp.lt.s32.totalorder %s21, 1
      %s252 = scalar_select %p251, %s21, 1
      %p253 = scmp.lt.s32.totalorder %s22, 0
      %s254 = scalar_select %p253, %s22, 0
      %s255 = sadd.s32 %s254, %s252
      %s256 = smul.addr %s255, 4
      %s257 = scalar_lea.vmem %s4, %s256
      %p258 = pneg %p178
      %p259 = pneg %p175
      %p260 = scmp.lt.s32.totalorder %s21, 1
      %s261 = scalar_select %p260, %s21, 1
      %p262 = scmp.lt.s32.totalorder %s22, 0
      %s263 = scalar_select %p262, %s22, 0
      %s264 = sadd.s32 %s263, %s261
      %s265 = smul.addr %s264, 4
      %s266 = scalar_lea.vmem %s5, %s265
      %s267 = smul.u32 4, %s22
      %p268 = scmp.lt.s32.totalorder %s21, 1
      %s269 = scalar_select %p268, %s21, 1
      %p270 = scmp.lt.s32.totalorder %s267, 3
      %s271 = scalar_select %p270, %s267, 3
      %s272 = smul.addr %s269, 4
      %s273 = sadd.s32 %s271, %s272
      %s274 = smul.addr %s273, 4
      %s275 = scalar_lea.vmem %s0, %s274
      %s276 = smul.u32 4, %s22
      %s277 = smul.u32 4, %s22
      %p278 = scmp.lt.s32.totalorder %s21, 1
      %s279 = scalar_select %p278, %s21, 1
      %p280 = scmp.lt.s32.totalorder %s277, 3
      %s281 = scalar_select %p280, %s277, 3
      %s282 = smul.addr %s279, 4
      %s283 = sadd.s32 %s281, %s282
      %s284 = smul.addr %s283, 4
      %s285 = scalar_lea.vmem %s3, %s284
      %s286 = smul.u32 4, %s22
      %p287 = scmp.lt.s32.totalorder %s21, 1
      %s288 = scalar_select %p287, %s21, 1
      %p289 = scmp.lt.s32.totalorder %s22, 0
      %s290 = scalar_select %p289, %s22, 0
      %s291 = sadd.s32 %s290, %s288
      %s292 = smul.addr %s291, 4
      %s293 = scalar_lea.vmem %s4, %s292
      %p294 = scmp.lt.s32.totalorder %s21, 1
      %s295 = scalar_select %p294, %s21, 1
      %p296 = scmp.lt.s32.totalorder %s22, 0
      %s297 = scalar_select %p296, %s22, 0
      %s298 = sadd.s32 %s297, %s295
      %s299 = smul.addr %s298, 4
      %s300 = scalar_lea.vmem %s5, %s299
      %v301 = vld [vmem:[%s275] sm:$0xff]
      %v302 = vld [vmem:[%s275 + $0x8] sm:$0xff]
      %v303 = vld [vmem:[%s1] sm:$0xf]
      %v304 = vld [vmem:[%s2] sm:$0xf]
      %306 = vset.pattern.permute.xlu0 0
      %307 = vperm.xlu0 %306, %v304
      %v308 = vpop.permute.xlu0 %307
      %312 = vst [vmem:[#allocation1] ss:$2 sm:$0xff] %v301
      %s313 = scalar_lea.vmem [#allocation1], 16
      %314 = vst [vmem:[%s313] ss:$2 sm:$0xff] %v302
      %v315 = vld.sshfl [vmem:[#allocation1] sm:$0xff pattern:$0x75316420]
      %v316 = vld.sshfl [vmem:[#allocation1 + $0x8] sm:$0xff pattern:$0x75316420]
      %v317 = vld.sshfl [vmem:[#allocation1 + $0x10] sm:$0xff pattern:$0x75316420]
      %v318 = vld.sshfl [vmem:[#allocation1 + $0x18] sm:$0xff pattern:$0x75316420]
      %vm319 = vcmask 31744
      %v321 = vsel %vm319, %v303, 0
      %vm323 = vcmask 1043456
      %v324 = vsel %vm323, %v315, 0
      %v326 = vsel %vm323, %v316, 0
      %v328 = vsel %vm323, %v317, 0
      %v330 = vsel %vm323, %v318, 0
      %332 = vmatpush.msra.mxu0 0.0
      %333 = vmatpush.msra.mxu0 0.0
      %334 = vmatpush.msra.mxu0 0.0
      %335 = vmatpush.msra.mxu0 0.0
      %336 = vmatpush.msra.mxu0 0.0
      %337 = vmatpush.msra.mxu0 0.0
      %338 = vmatpush.msra.mxu0 0.0
      %339 = vmatpush.msra.mxu0 0.0
      %340 = vmatpush.msra.mxu0 0.0
      %341 = vmatpush.msra.mxu0 0.0
      %342 = vmatpush.msra.mxu0 0.0
      %343 = vmatpush.msra.mxu0 0.0
      %344 = vmatpush.msra.mxu0 0.0
      %345 = vmatpush.msra.mxu0 0.0
      %346 = vmatpush.msra.mxu0 0.0
      %347 = vmatpush.msra.mxu0 %v324
      %348 = vmatmul.f32.gmra.mxu0 %v321
      %v349 = vpop.f32.mrf.mxu0
      %v350 = vadd.f32 %v308, %v349
      %351 = vdwg.mxu0
      %352 = vmatpush.msra.mxu0 0.0
      %353 = vmatpush.msra.mxu0 0.0
      %354 = vmatpush.msra.mxu0 0.0
      %355 = vmatpush.msra.mxu0 0.0
      %356 = vmatpush.msra.mxu0 0.0
      %357 = vmatpush.msra.mxu0 0.0
      %358 = vmatpush.msra.mxu0 0.0
      %359 = vmatpush.msra.mxu0 0.0
      %360 = vmatpush.msra.mxu0 0.0
      %361 = vmatpush.msra.mxu0 0.0
      %362 = vmatpush.msra.mxu0 0.0
      %363 = vmatpush.msra.mxu0 0.0
      %364 = vmatpush.msra.mxu0 0.0
      %365 = vmatpush.msra.mxu0 0.0
      %366 = vmatpush.msra.mxu0 0.0
      %367 = vmatpush.msra.mxu0 %v326
      %368 = vmatmul.f32.gmra.mxu0 %v321
      %v369 = vpop.f32.mrf.mxu0
      %v370 = vadd.f32 %v308, %v369
      %371 = vdwg.mxu0
      %372 = vmatpush.msra.mxu0 0.0
      %373 = vmatpush.msra.mxu0 0.0
      %374 = vmatpush.msra.mxu0 0.0
      %375 = vmatpush.msra.mxu0 0.0
      %376 = vmatpush.msra.mxu0 0.0
      %377 = vmatpush.msra.mxu0 0.0
      %378 = vmatpush.msra.mxu0 0.0
      %379 = vmatpush.msra.mxu0 0.0
      %380 = vmatpush.msra.mxu0 0.0
      %381 = vmatpush.msra.mxu0 0.0
      %382 = vmatpush.msra.mxu0 0.0
      %383 = vmatpush.msra.mxu0 0.0
      %384 = vmatpush.msra.mxu0 0.0
      %385 = vmatpush.msra.mxu0 0.0
      %386 = vmatpush.msra.mxu0 0.0
      %387 = vmatpush.msra.mxu0 %v328
      %388 = vmatmul.f32.gmra.mxu0 %v321
      %v389 = vpop.f32.mrf.mxu0
      %v390 = vadd.f32 %v308, %v389
      %391 = vdwg.mxu0
      %392 = vmatpush.msra.mxu0 0.0
      %393 = vmatpush.msra.mxu0 0.0
      %394 = vmatpush.msra.mxu0 0.0
      %395 = vmatpush.msra.mxu0 0.0
      %396 = vmatpush.msra.mxu0 0.0
      %397 = vmatpush.msra.mxu0 0.0
      %398 = vmatpush.msra.mxu0 0.0
      %399 = vmatpush.msra.mxu0 0.0
      %400 = vmatpush.msra.mxu0 0.0
      %401 = vmatpush.msra.mxu0 0.0
      %402 = vmatpush.msra.mxu0 0.0
      %403 = vmatpush.msra.mxu0 0.0
      %404 = vmatpush.msra.mxu0 0.0
      %405 = vmatpush.msra.mxu0 0.0
      %406 = vmatpush.msra.mxu0 0.0
      %407 = vmatpush.msra.mxu0 %v330
      %408 = vmatmul.f32.gmra.mxu0 %v321
      %v409 = vpop.f32.mrf.mxu0
      %v410 = vadd.f32 %v308, %v409
      %411 = vdwg.mxu0
      %v412 = vmax.f32 %v350, 0.0
      %v413 = vmax.f32 %v370, 0.0
      %v414 = vmax.f32 %v390, 0.0
      %v415 = vmax.f32 %v410, 0.0
      %v420 = vrot.slane %v413, 4
      %v421 = vrot.slane %v415, 4
      %v422 = vsel %vm323, %v412, %v420
      %v423 = vsel %vm323, %v414, %v421
      %426 = vst [vmem:[%s285] sm:$0xff] %v422
      %427 = vst [vmem:[%s285 + $0x8] sm:$0xff] %v423
      %v428 = vsel %vm323, %v412, 0.0
      %v429 = vsel %vm323, %v413, 0.0
      %v430 = vadd.f32 %v428, %v429
      %v431 = vsel %vm323, %v414, 0.0
      %v432 = vadd.f32 %v430, %v431
      %v433 = vsel %vm323, %v415, 0.0
      %v434 = vadd.f32 %v432, %v433
      %435 = vadd.xlane.f32.xlu0 %v434
      %v436 = vpop.xlane.xlu0 %435
      %vm437 = vcmask 3072
      %438 = vst.msk [vmem:[%s293] sm:$0xf] %vm437, %v436
      %v439 = vmul.f32 %v412, %v412
      %v440 = vmul.f32 %v413, %v413
      %v441 = vmul.f32 %v414, %v414
      %v442 = vmul.f32 %v415, %v415
      %v443 = vsel %vm323, %v439, 0.0
      %v444 = vsel %vm323, %v440, 0.0
      %v445 = vadd.f32 %v443, %v444
      %v446 = vsel %vm323, %v441, 0.0
      %v447 = vadd.f32 %v445, %v446
      %v448 = vsel %vm323, %v442, 0.0
      %v449 = vadd.f32 %v447, %v448
      %450 = vadd.xlane.f32.xlu0 %v449
      %v451 = vpop.xlane.xlu0 %450
      %452 = vst.msk [vmem:[%s300] sm:$0xf] %vm437, %v451
      %s453 = smul.u32 4, %s22
      %p454 = scmp.lt.s32.totalorder %s21, 1
      %s455 = scalar_select %p454, %s21, 1
      %p456 = scmp.lt.s32.totalorder %s453, 3
      %s457 = scalar_select %p456, %s453, 3
      %s458 = smul.addr %s455, 4
      %s459 = sadd.s32 %s457, %s458
      %s460 = smul.addr %s459, 4
      %s461 = scalar_lea.vmem %s3, %s460
      %p462 = scmp.lt.s32.totalorder %s21, 1
      %s463 = scalar_select %p462, %s21, 1
      %p464 = scmp.lt.s32.totalorder %s22, 0
      %s465 = scalar_select %p464, %s22, 0
      %s466 = sadd.s32 %s465, %s463
      %s467 = smul.addr %s466, 4
      %s468 = scalar_lea.vmem %s4, %s467
      %p469 = scmp.lt.s32.totalorder %s21, 1
      %s470 = scalar_select %p469, %s21, 1
      %p471 = scmp.lt.s32.totalorder %s22, 0
      %s472 = scalar_select %p471, %s22, 0
      %s473 = sadd.s32 %s472, %s470
      %s474 = smul.addr %s473, 4
      %s475 = scalar_lea.vmem %s5, %s474
      // Predicated region
      $region33: #{fire_module_3d.2} parent=31 // pred_check
        %p476 = pneg %p119
      $region34: #{fire_module_3d.2} parent=31 // pred_check_branch
        %478 = sbr.rel (%p476) target = $region36
      $region35: #{fire_module_3d.2} parent=31 // pred_region
        %s479 = smul.u32 4, %s22
      $region36: #{fire_module_3d.2} parent=31 // pred_fallthru
        _
      // Predicated region
      $region37: #{fire_module_3d.2} parent=31 // pred_check
        %p480 = pneg %p147
      $region38: #{fire_module_3d.2} parent=31 // pred_check_branch
        %482 = sbr.rel (%p480) target = $region40
      $region39: #{fire_module_3d.2} parent=31 // pred_region
        _
      $region40: #{fire_module_3d.2} parent=31 // pred_fallthru
        _
      // Predicated region
      $region41: #{fire_module_3d.2} parent=31 // pred_check
        %p483 = pneg %p175
      $region42: #{fire_module_3d.2} parent=31 // pred_check_branch
        %485 = sbr.rel (%p483) target = $region44
      $region43: #{fire_module_3d.2} parent=31 // pred_region
        _
      $region44: #{fire_module_3d.2} parent=31 // pred_fallthru
        _
    $region32: #{fire_module_3d.2} parent=5 // pred_fallthru
      _
    %p486 = scmp.le.s32.totalorder 2, %s12
    // Predicated region
    $region45: #{fire_module_3d.2} parent=5 // pred_check
      %p487 = pneg %p486
    $region46: #{fire_module_3d.2} parent=5 // pred_check_branch
      %489 = sbr.rel (%p487) target = $region48
    $region47: #{fire_module_3d.2} parent=5 // pred_region
      %s490 = ssub.s32 %s12, 2
      // Predicated region
      $region49: #{fire_module_3d.2} parent=47 // pred_check
        %p491 = pneg %p125
      $region50: #{fire_module_3d.2} parent=47 // pred_check_branch
        %493 = sbr.rel (%p491) target = $region52
      $region51: #{fire_module_3d.2} parent=47 // pred_region
        %s494 = smul.u32 4, %s24
        %p495 = scmp.lt.s32.totalorder %s23, 1
        %s496 = scalar_select %p495, %s23, 1
        %p497 = scmp.lt.s32.totalorder %s494, 3
        %s498 = scalar_select %p497, %s494, 3
        %s499 = smul.addr %s496, 4
        %s500 = sadd.s32 %s498, %s499
        %s501 = smul.addr %s500, 4
        %s502 = scalar_lea.vmem %s3, %s501
      $region52: #{fire_module_3d.2} parent=47 // pred_fallthru
        _
      // Predicated region
      $region53: #{fire_module_3d.2} parent=47 // pred_check
        %p503 = pneg %p153
      $region54: #{fire_module_3d.2} parent=47 // pred_check_branch
        %505 = sbr.rel (%p503) target = $region56
      $region55: #{fire_module_3d.2} parent=47 // pred_region
        %p506 = scmp.lt.s32.totalorder %s23, 1
        %s507 = scalar_select %p506, %s23, 1
        %p508 = scmp.lt.s32.totalorder %s24, 0
        %s509 = scalar_select %p508, %s24, 0
        %s510 = sadd.s32 %s509, %s507
        %s511 = smul.addr %s510, 4
        %s512 = scalar_lea.vmem %s4, %s511
      $region56: #{fire_module_3d.2} parent=47 // pred_fallthru
        _
      // Predicated region
      $region57: #{fire_module_3d.2} parent=47 // pred_check
        %p513 = pneg %p181
      $region58: #{fire_module_3d.2} parent=47 // pred_check_branch
        %515 = sbr.rel (%p513) target = $region60
      $region59: #{fire_module_3d.2} parent=47 // pred_region
        %p516 = scmp.lt.s32.totalorder %s23, 1
        %s517 = scalar_select %p516, %s23, 1
        %p518 = scmp.lt.s32.totalorder %s24, 0
        %s519 = scalar_select %p518, %s24, 0
        %s520 = sadd.s32 %s519, %s517
        %s521 = smul.addr %s520, 4
        %s522 = scalar_lea.vmem %s5, %s521
      $region60: #{fire_module_3d.2} parent=47 // pred_fallthru
        _
    $region48: #{fire_module_3d.2} parent=5 // pred_fallthru
      _
  $region6: #{fire_module_3d.2} parent=0 // loop_footer
    %s16 = sadd.s32 1, %s12
  $region7: #{fire_module_3d.2} parent=0 // loop_footer_branch
    %11 = sbr.rel target = $region3
  $region8: #{fire_module_3d.2} parent=0 // loop_exit
    _

// kernel: fire_module_3d.3
$region0: #{fire_module_3d.3}
  #allocation0 [shape = 'u32[]', space=smem, size = 0x4, offset = 0x4, fixed_abs, tag = 'smem constant byte address 0x4 - core index']
  #allocation1 [shape = 'u32[72,128]{1,0:T(1,128)}', space=vmem, size = 0x9000, scoped, tag = 'internal scratch']
  %s0 = inlined_call_operand.vmem [shape: f32[2,4,512], index: 0, kind: input, shape index: {}]
  %s1 = inlined_call_operand.vmem [shape: f32[8,4], index: 1, kind: input, shape index: {}]
  %s2 = inlined_call_operand.vmem [shape: f32[27,8,4], index: 2, kind: input, shape index: {}]
  %s3 = inlined_call_operand.vmem [shape: f32[8,1], index: 3, kind: input, shape index: {}]
  %s4 = inlined_call_operand.vmem [shape: f32[8,1], index: 4, kind: input, shape index: {}]
  %s5 = inlined_call_operand.vmem [shape: f32[4,1], index: 5, kind: input, shape index: {}]
  %s6 = inlined_call_operand.vmem [shape: f32[2,2,8,512], index: 6, kind: output, shape index: {}]
  %s7 = sld [smem:[#allocation0]]
  $region57: #{fire_module_3d.3} parent=0
    _
  %s9 = ssub.s32 1, %s7
  %s10 = scalar_select 0, %s9, %s7
  loop: start=0, step=1, limit=4
  $region2: #{fire_module_3d.3} parent=0 // loop_pre_header
    _
  $region3: #{fire_module_3d.3} parent=0 // loop_header
    %s12 = sphi 0, %s16
    %p13 = scmp.ge.s32.totalorder %s12, 4
    %s22 = sphi 0, %s24
    %s25 = sphi 0, %s22
    %s26 = sphi 0, %s25
    %s42 = sphi 0, %s26
    %s46 = sphi 0, %s46
    %s48 = sphi 0, %s46
    %s49 = sphi 0, %s48
    %s63 = sphi 0, %s49
    %s67 = sphi 0, %s67
    %s69 = sphi 0, %s67
    %s70 = sphi 0, %s69
    %s84 = sphi 0, %s70
    %s88 = sphi 0, %s88
    %s90 = sphi 0, %s88
    %s91 = sphi 0, %s90
    %s105 = sphi 0, %s91
    %s109 = sphi 0, %s109
    %s111 = sphi 0, %s109
    %s112 = sphi 0, %s111
    %s126 = sphi 0, %s112
    %s130 = sphi 0, %s130
    %s132 = sphi 0, %s130
    %s133 = sphi 0, %s132
    %s147 = sphi 0, %s133
    %s153 = sphi 0, %s155
    %s156 = sphi 0, %s153
    %s157 = sphi 0, %s156
    %s173 = sphi 0, %s157
  $region4: #{fire_module_3d.3} parent=0 // loop_header_branch
    %15 = sbr.rel (%p13) target = $region8
  $region5: #{fire_module_3d.3} parent=0 // loop_body
    %s17 = ssub.s32 %s12, 1
    %s18 = ssub.s32 %s12, 2
    %s19 = sadd.s32 %s12, 1
    %s20 = ssub.s32 %s12, %s19
    %p21 = scmp.eq.s32.totalorder %s20, 0
    %s23 = sadd.s32 %s22, 1
    %s24 = scalar_select %p21, %s22, %s23
    %p27 = pneg %p21
    %p28 = scmp.eq.s32.totalorder %s12, 1
    %p29 = por %p27, %p28
    %p30 = scmp.ne.s32.totalorder %s22, %s25
    %p31 = scmp.eq.s32.totalorder %s12, 0
    %p32 = por %p30, %p31
    %p33 = scmp.ne.s32.totalorder %s22, %s25
    %p34 = scmp.eq.s32.totalorder %s17, 1
    %p35 = por %p33, %p34
    %p36 = scmp.ne.s32.totalorder %s25, %s26
    %p37 = scmp.eq.s32.totalorder %s17, 0
    %p38 = por %p36, %p37
    %p39 = scmp.ne.s32.totalorder %s25, %s26
    %p40 = scmp.eq.s32.totalorder %s18, 1
    %p41 = por %p39, %p40
    %p43 = scmp.ne.s32.totalorder %s26, %s42
    %p44 = scmp.eq.s32.totalorder %s18, 0
    %p45 = por %p43, %p44
    %s47 = sadd.s32 %s46, 1
    %p50 = scmp.eq.s32.totalorder %s12, 1
    %p51 = scmp.ne.s32.totalorder %s46, %s48
    %p52 = scmp.eq.s32.totalorder %s12, 0
    %p53 = por %p51, %p52
    %p54 = scmp.ne.s32.totalorder %s46, %s48
    %p55 = scmp.eq.s32.totalorder %s17, 1
    %p56 = por %p54, %p55
    %p57 = scmp.ne.s32.totalorder %s48, %s49
    %p58 = scmp.eq.s32.totalorder %s17, 0
    %p59 = por %p57, %p58
    %p60 = scmp.ne.s32.totalorder %s48, %s49
    %p61 = scmp.eq.s32.totalorder %s18, 1
    %p62 = por %p60, %p61
    %p64 = scmp.ne.s32.totalorder %s49, %s63
    %p65 = scmp.eq.s32.totalorder %s18, 0
    %p66 = por %p64, %p65
    %s68 = sadd.s32 %s67, 1
    %p71 = scmp.eq.s32.totalorder %s12, 1
    %p72 = scmp.ne.s32.totalorder %s67, %s69
    %p73 = scmp.eq.s32.totalorder %s12, 0
    %p74 = por %p72, %p73
    %p75 = scmp.ne.s32.totalorder %s67, %s69
    %p76 = scmp.eq.s32.totalorder %s17, 1
    %p77 = por %p75, %p76
    %p78 = scmp.ne.s32.totalorder %s69, %s70
    %p79 = scmp.eq.s32.totalorder %s17, 0
    %p80 = por %p78, %p79
    %p81 = scmp.ne.s32.totalorder %s69, %s70
    %p82 = scmp.eq.s32.totalorder %s18, 1
    %p83 = por %p81, %p82
    %p85 = scmp.ne.s32.totalorder %s70, %s84
    %p86 = scmp.eq.s32.totalorder %s18, 0
    %p87 = por %p85, %p86
    %s89 = sadd.s32 %s88, 1
    %p92 = scmp.eq.s32.totalorder %s12, 1
    %p93 = scmp.ne.s32.totalorder %s88, %s90
    %p94 = scmp.eq.s32.totalorder %s12, 0
    %p95 = por %p93, %p94
    %p96 = scmp.ne.s32.totalorder %s88, %s90
    %p97 = scmp.eq.s32.totalorder %s17, 1
    %p98 = por %p96, %p97
    %p99 = scmp.ne.s32.totalorder %s90, %s91
    %p100 = scmp.eq.s32.totalorder %s17, 0
    %p101 = por %p99, %p100
    %p102 = scmp.ne.s32.totalorder %s90, %s91
    %p103 = scmp.eq.s32.totalorder %s18, 1
    %p104 = por %p102, %p103
    %p106 = scmp.ne.s32.totalorder %s91, %s105
    %p107 = scmp.eq.s32.totalorder %s18, 0
    %p108 = por %p106, %p107
    %s110 = sadd.s32 %s109, 1
    %p113 = scmp.eq.s32.totalorder %s12, 1
    %p114 = scmp.ne.s32.totalorder %s109, %s111
    %p115 = scmp.eq.s32.totalorder %s12, 0
    %p116 = por %p114, %p115
    %p117 = scmp.ne.s32.totalorder %s109, %s111
    %p118 = scmp.eq.s32.totalorder %s17, 1
    %p119 = por %p117, %p118
    %p120 = scmp.ne.s32.totalorder %s111, %s112
    %p121 = scmp.eq.s32.totalorder %s17, 0
    %p122 = por %p120, %p121
    %p123 = scmp.ne.s32.totalorder %s111, %s112
    %p124 = scmp.eq.s32.totalorder %s18, 1
    %p125 = por %p123, %p124
    %p127 = scmp.ne.s32.totalorder %s112, %s126
    %p128 = scmp.eq.s32.totalorder %s18, 0
    %p129 = por %p127, %p128
    %s131 = sadd.s32 %s130, 1
    %p134 = scmp.eq.s32.totalorder %s12, 1
    %p135 = scmp.ne.s32.totalorder %s130, %s132
    %p136 = scmp.eq.s32.totalorder %s12, 0
    %p137 = por %p135, %p136
    %p138 = scmp.ne.s32.totalorder %s130, %s132
    %p139 = scmp.eq.s32.totalorder %s17, 1
    %p140 = por %p138, %p139
    %p141 = scmp.ne.s32.totalorder %s132, %s133
    %p142 = scmp.eq.s32.totalorder %s17, 0
    %p143 = por %p141, %p142
    %p144 = scmp.ne.s32.totalorder %s132, %s133
    %p145 = scmp.eq.s32.totalorder %s18, 1
    %p146 = por %p144, %p145
    %p148 = scmp.ne.s32.totalorder %s133, %s147
    %p149 = scmp.eq.s32.totalorder %s18, 0
    %p150 = por %p148, %p149
    %s151 = ssub.s32 %s12, %s19
    %p152 = scmp.eq.s32.totalorder %s151, 0
    %s154 = sadd.s32 %s153, 1
    %s155 = scalar_select %p152, %s153, %s154
    %p158 = pneg %p152
    %p159 = scmp.eq.s32.totalorder %s12, 1
    %p160 = por %p158, %p159
    %p161 = scmp.ne.s32.totalorder %s153, %s156
    %p162 = scmp.eq.s32.totalorder %s12, 0
    %p163 = por %p161, %p162
    %p164 = scmp.ne.s32.totalorder %s153, %s156
    %p165 = scmp.eq.s32.totalorder %s17, 1
    %p166 = por %p164, %p165
    %p167 = scmp.ne.s32.totalorder %s156, %s157
    %p168 = scmp.eq.s32.totalorder %s17, 0
    %p169 = por %p167, %p168
    %p170 = scmp.ne.s32.totalorder %s156, %s157
    %p171 = scmp.eq.s32.totalorder %s18, 1
    %p172 = por %p170, %p171
    %p174 = scmp.ne.s32.totalorder %s157, %s173
    %p175 = scmp.eq.s32.totalorder %s18, 0
    %p176 = por %p174, %p175
    %p177 = scmp.le.s32.totalorder 1, %s12
    %p178 = scmp.lt.s32.totalorder %s12, 3
    %p179 = pnand %p177, %p178
    %p180 = pneg %p179
    // Predicated region
    $region9: #{fire_module_3d.3} parent=5 // pred_check
      _
    $region10: #{fire_module_3d.3} parent=5 // pred_check_branch
      %182 = sbr.rel (%p179) target = $region12
    $region11: #{fire_module_3d.3} parent=5 // pred_region
      %s183 = ssub.s32 %s12, 1
      // Predicated region
      $region13: #{fire_module_3d.3} parent=11 // pred_check
        %p184 = pneg %p59
      $region14: #{fire_module_3d.3} parent=11 // pred_check_branch
        %186 = sbr.rel (%p184) target = $region16
      $region15: #{fire_module_3d.3} parent=11 // pred_region
        _
      $region16: #{fire_module_3d.3} parent=11 // pred_fallthru
        _
      // Predicated region
      $region17: #{fire_module_3d.3} parent=11 // pred_check
        %p187 = pneg %p80
      $region18: #{fire_module_3d.3} parent=11 // pred_check_branch
        %189 = sbr.rel (%p187) target = $region20
      $region19: #{fire_module_3d.3} parent=11 // pred_region
        _
      $region20: #{fire_module_3d.3} parent=11 // pred_fallthru
        _
      // Predicated region
      $region21: #{fire_module_3d.3} parent=11 // pred_check
        %p190 = pneg %p101
      $region22: #{fire_module_3d.3} parent=11 // pred_check_branch
        %192 = sbr.rel (%p190) target = $region24
      $region23: #{fire_module_3d.3} parent=11 // pred_region
        _
      $region24: #{fire_module_3d.3} parent=11 // pred_fallthru
        _
      // Predicated region
      $region25: #{fire_module_3d.3} parent=11 // pred_check
        %p193 = pneg %p122
      $region26: #{fire_module_3d.3} parent=11 // pred_check_branch
        %195 = sbr.rel (%p193) target = $region28
      $region27: #{fire_module_3d.3} parent=11 // pred_region
        _
      $region28: #{fire_module_3d.3} parent=11 // pred_fallthru
        _
      // Predicated region
      $region29: #{fire_module_3d.3} parent=11 // pred_check
        %p196 = pneg %p143
      $region30: #{fire_module_3d.3} parent=11 // pred_check_branch
        %198 = sbr.rel (%p196) target = $region32
      $region31: #{fire_module_3d.3} parent=11 // pred_region
        _
      $region32: #{fire_module_3d.3} parent=11 // pred_fallthru
        _
    $region12: #{fire_module_3d.3} parent=5 // pred_fallthru
      _
    %p199 = scmp.lt.s32.totalorder %s12, 2
    // Predicated region
    $region33: #{fire_module_3d.3} parent=5 // pred_check
      %p200 = pneg %p199
    $region34: #{fire_module_3d.3} parent=5 // pred_check_branch
      %202 = sbr.rel (%p200) target = $region36
    $region35: #{fire_module_3d.3} parent=5 // pred_region
      // Predicated region
      $region37: #{fire_module_3d.3} parent=35 // pred_check
        %p203 = pneg %p32
      $region38: #{fire_module_3d.3} parent=35 // pred_check_branch
        %205 = sbr.rel (%p203) target = $region40
      $region39: #{fire_module_3d.3} parent=35 // pred_region
        %p206 = scmp.lt.s32.totalorder %s12, 1
        %s207 = scalar_select %p206, %s12, 1
        %s208 = smul.addr %s207, 4
        %s209 = smul.addr %s208, 4
        %s210 = scalar_lea.vmem %s0, %s209
      $region40: #{fire_module_3d.3} parent=35 // pred_fallthru
        _
    $region36: #{fire_module_3d.3} parent=5 // pred_fallthru
      _
    %p211 = scmp.le.s32.totalorder 1, %s12
    %p212 = scmp.lt.s32.totalorder %s12, 3
    %p213 = pnand %p211, %p212
    %p214 = pneg %p213
    // Predicated region
    $region41: #{fire_module_3d.3} parent=5 // pred_check
      _
    $region42: #{fire_module_3d.3} parent=5 // pred_check_branch
      %216 = sbr.rel (%p213) target = $region44
    $region43: #{fire_module_3d.3} parent=5 // pred_region
      %s217 = ssub.s32 %s12, 1
      %p218 = scmp.lt.s32.totalorder %s17, 1
      %s219 = scalar_select %p218, %s17, 1
      %s220 = smul.addr %s219, 4
      %s221 = smul.addr %s220, 4
      %s222 = scalar_lea.vmem %s0, %s221
      %p223 = pneg %p38
      %p224 = pneg %p35
      %p225 = pneg %p59
      %p226 = pneg %p56
      %p227 = pneg %p80
      %p228 = pneg %p77
      %p229 = pneg %p101
      %p230 = pneg %p98
      %p231 = pneg %p122
      %p232 = pneg %p119
      %p233 = pneg %p143
      %p234 = pneg %p140
      %p235 = pneg %p169
      %p236 = pneg %p166
      %p237 = scmp.lt.s32.totalorder %s17, 1
      %s238 = scalar_select %p237, %s17, 1
      %s239 = smul.addr %s238, 8
      %s240 = smul.addr %s239, 8
      %s241 = scalar_lea.vmem %s6, %s240
      %p242 = scmp.lt.s32.totalorder %s17, 1
      %s243 = scalar_select %p242, %s17, 1
      %s244 = smul.addr %s243, 4
      %s245 = smul.addr %s244, 4
      %s246 = scalar_lea.vmem %s0, %s245
      %p247 = scmp.lt.s32.totalorder %s17, 1
      %s248 = scalar_select %p247, %s17, 1
      %s249 = smul.addr %s248, 8
      %s250 = smul.addr %s249, 8
      %s251 = scalar_lea.vmem %s6, %s250
      %v252 = vld [vmem:[%s246] sm:$0xff]
      %v253 = vld [vmem:[%s246 + $0x8] sm:$0xff]
      %v254 = vld [vmem:[%s1] sm:$0xff]
      %v255 = vld [vmem:[%s3] sm:$0xff]
      %257 = vset.pattern.permute.xlu0 0
      %258 = vperm.xlu0 %257, %v255
      %v259 = vpop.permute.xlu0 %258
      %263 = vst [vmem:[#allocation1] ss:$2 sm:$0xff] %v252
      %s264 = scalar_lea.vmem [#allocation1], 16
      %265 = vst [vmem:[%s264] ss:$2 sm:$0xff] %v253
      %v266 = vld.sshfl [vmem:[#allocation1] sm:$0xff pattern:$0x75316420]
      %v267 = vld.sshfl [vmem:[#allocation1 + $0x8] sm:$0xff pattern:$0x75316420]
      %v268 = vld.sshfl [vmem:[#allocation1 + $0x10] sm:$0xff pattern:$0x75316420]
      %v269 = vld.sshfl [vmem:[#allocation1 + $0x18] sm:$0xff pattern:$0x75316420]
      %vm270 = vcmask 31744
      %v272 = vsel %vm270, %v254, 0
      %vm274 = vcmask 1043456
      %v275 = vsel %vm274, %v266, 0
      %v277 = vsel %vm274, %v267, 0
      %v279 = vsel %vm274, %v268, 0
      %v281 = vsel %vm274, %v269, 0
      %283 = vmatpush.msra.mxu0 0.0
      %284 = vmatpush.msra.mxu0 0.0
      %285 = vmatpush.msra.mxu0 0.0
      %286 = vmatpush.msra.mxu0 0.0
      %287 = vmatpush.msra.mxu0 0.0
      %288 = vmatpush.msra.mxu0 0.0
      %289 = vmatpush.msra.mxu0 0.0
      %290 = vmatpush.msra.mxu0 0.0
      %291 = vmatpush.msra.mxu0 0.0
      %292 = vmatpush.msra.mxu0 0.0
      %293 = vmatpush.msra.mxu0 0.0
      %294 = vmatpush.msra.mxu0 0.0
      %295 = vmatpush.msra.mxu0 0.0
      %296 = vmatpush.msra.mxu0 0.0
      %297 = vmatpush.msra.mxu0 0.0
      %298 = vmatpush.msra.mxu0 %v275
      %299 = vmatmul.f32.gmra.mxu0 %v272
      %v300 = vpop.f32.mrf.mxu0
      %v301 = vadd.f32 %v259, %v300
      %302 = vdwg.mxu0
      %303 = vmatpush.msra.mxu0 0.0
      %304 = vmatpush.msra.mxu0 0.0
      %305 = vmatpush.msra.mxu0 0.0
      %306 = vmatpush.msra.mxu0 0.0
      %307 = vmatpush.msra.mxu0 0.0
      %308 = vmatpush.msra.mxu0 0.0
      %309 = vmatpush.msra.mxu0 0.0
      %310 = vmatpush.msra.mxu0 0.0
      %311 = vmatpush.msra.mxu0 0.0
      %312 = vmatpush.msra.mxu0 0.0
      %313 = vmatpush.msra.mxu0 0.0
      %314 = vmatpush.msra.mxu0 0.0
      %315 = vmatpush.msra.mxu0 0.0
      %316 = vmatpush.msra.mxu0 0.0
      %317 = vmatpush.msra.mxu0 0.0
      %318 = vmatpush.msra.mxu0 %v277
      %319 = vmatmul.f32.gmra.mxu0 %v272
      %v320 = vpop.f32.mrf.mxu0
      %v321 = vadd.f32 %v259, %v320
      %322 = vdwg.mxu0
      %323 = vmatpush.msra.mxu0 0.0
      %324 = vmatpush.msra.mxu0 0.0
      %325 = vmatpush.msra.mxu0 0.0
      %326 = vmatpush.msra.mxu0 0.0
      %327 = vmatpush.msra.mxu0 0.0
      %328 = vmatpush.msra.mxu0 0.0
      %329 = vmatpush.msra.mxu0 0.0
      %330 = vmatpush.msra.mxu0 0.0
      %331 = vmatpush.msra.mxu0 0.0
      %332 = vmatpush.msra.mxu0 0.0
      %333 = vmatpush.msra.mxu0 0.0
      %334 = vmatpush.msra.mxu0 0.0
      %335 = vmatpush.msra.mxu0 0.0
      %336 = vmatpush.msra.mxu0 0.0
      %337 = vmatpush.msra.mxu0 0.0
      %338 = vmatpush.msra.mxu0 %v279
      %339 = vmatmul.f32.gmra.mxu0 %v272
      %v340 = vpop.f32.mrf.mxu0
      %v341 = vadd.f32 %v259, %v340
      %342 = vdwg.mxu0
      %343 = vmatpush.msra.mxu0 0.0
      %344 = vmatpush.msra.mxu0 0.0
      %345 = vmatpush.msra.mxu0 0.0
      %346 = vmatpush.msra.mxu0 0.0
      %347 = vmatpush.msra.mxu0 0.0
      %348 = vmatpush.msra.mxu0 0.0
      %349 = vmatpush.msra.mxu0 0.0
      %350 = vmatpush.msra.mxu0 0.0
      %351 = vmatpush.msra.mxu0 0.0
      %352 = vmatpush.msra.mxu0 0.0
      %353 = vmatpush.msra.mxu0 0.0
      %354 = vmatpush.msra.mxu0 0.0
      %355 = vmatpush.msra.mxu0 0.0
      %356 = vmatpush.msra.mxu0 0.0
      %357 = vmatpush.msra.mxu0 0.0
      %358 = vmatpush.msra.mxu0 %v281
      %359 = vmatmul.f32.gmra.mxu0 %v272
      %v360 = vpop.f32.mrf.mxu0
      %v361 = vadd.f32 %v259, %v360
      %362 = vdwg.mxu0
      %v363 = vmax.f32 %v301, 0.0
      %v364 = vmax.f32 %v321, 0.0
      %v365 = vmax.f32 %v341, 0.0
      %v366 = vmax.f32 %v361, 0.0
      %367 = vst [vmem:[%s251] sm:$0xff] %v363
      %368 = vst [vmem:[%s251 + $0x8] sm:$0xff] %v364
      %369 = vst [vmem:[%s251 + $0x10] sm:$0xff] %v365
      %370 = vst [vmem:[%s251 + $0x18] sm:$0xff] %v366
      %v371 = vlaneseq
      %v372 = vand.u32 %v371, 127
      %v373 = vadd.s32 %v372, 128
      %v374 = vadd.s32 %v372, 256
      %v375 = vadd.s32 %v372, 384
      %v376 = vcvt.s32.f32 %v372
      %v377 = vcvt.s32.f32 %v373
      %v378 = vcvt.s32.f32 %v374
      %v379 = vcvt.s32.f32 %v375
      %v380 = vrcp.pop 64.0
      %v381 = vmul.f32 64.0, %v380
      %v382 = vsub.f32 1.0, %v381
      %v383 = vmul.f32 %v380, %v382
      %v384 = vadd.f32 %v380, %v383
      %vm385 = vweird.f32 %v380
      %v386 = vsel %vm385, %v380, %v384
      %v387 = vmul.f32 %v376, %v386
      %v388 = vmul.f32 %v377, %v386
      %v389 = vmul.f32 %v378, %v386
      %v390 = vmul.f32 %v379, %v386
      %v391 = vfloor.f32 %v387
      %v392 = vfloor.f32 %v388
      %v393 = vfloor.f32 %v389
      %v394 = vfloor.f32 %v390
      %v395 = vmul.f32 %v391, 64.0
      %v396 = vmul.f32 %v392, 64.0
      %v397 = vmul.f32 %v393, 64.0
      %v398 = vmul.f32 %v394, 64.0
      %v399 = vsub.f32 %v376, %v395
      %v400 = vsub.f32 %v377, %v396
      %v401 = vsub.f32 %v378, %v397
      %v402 = vsub.f32 %v379, %v398
      %v403 = vrcp.pop 8.0
      %v404 = vmul.f32 8.0, %v403
      %v405 = vsub.f32 1.0, %v404
      %v406 = vmul.f32 %v403, %v405
      %v407 = vadd.f32 %v403, %v406
      %vm408 = vweird.f32 %v403
      %v409 = vsel %vm408, %v403, %v407
      %v410 = vmul.f32 %v399, %v409
      %v411 = vmul.f32 %v400, %v409
      %v412 = vmul.f32 %v401, %v409
      %v413 = vmul.f32 %v402, %v409
      %v414 = vfloor.f32 %v410
      %v415 = vfloor.f32 %v411
      %v416 = vfloor.f32 %v412
      %v417 = vfloor.f32 %v413
      %v418 = vmul.f32 %v414, 8.0
      %v419 = vmul.f32 %v415, 8.0
      %v420 = vmul.f32 %v416, 8.0
      %v421 = vmul.f32 %v417, 8.0
      %v422 = vsub.f32 %v399, %v418
      %v423 = vsub.f32 %v400, %v419
      %v424 = vsub.f32 %v401, %v420
      %v425 = vsub.f32 %v402, %v421
      %v426 = vld [vmem:[%s5] sm:$0xf]
      %428 = vset.pattern.permute.xlu0 0
      %429 = vperm.xlu0 %428, %v426
      %v430 = vpop.permute.xlu0 %429
      %vm432 = vcmp.ge.f32.partialorder %v391, 1.0
      %vm433 = vcmp.ge.f32.partialorder %v392, 1.0
      %vm434 = vcmp.ge.f32.partialorder %v393, 1.0
      %vm435 = vcmp.ge.f32.partialorder %v394, 1.0
      %vm436 = vcmp.le.f32.partialorder %v391, 6.0
      %vm437 = vcmp.le.f32.partialorder %v392, 6.0
      %vm438 = vcmp.le.f32.partialorder %v393, 6.0
      %vm439 = vcmp.le.f32.partialorder %v394, 6.0
      %vm440 = vcmp.ge.f32.partialorder %v414, 1.0
      %vm441 = vcmp.ge.f32.partialorder %v415, 1.0
      %vm442 = vcmp.ge.f32.partialorder %v416, 1.0
      %vm443 = vcmp.ge.f32.partialorder %v417, 1.0
      %vm444 = vcmp.le.f32.partialorder %v414, 6.0
      %vm445 = vcmp.le.f32.partialorder %v415, 6.0
      %vm446 = vcmp.le.f32.partialorder %v416, 6.0
      %vm447 = vcmp.le.f32.partialorder %v417, 6.0
      %vm448 = vcmp.ge.f32.partialorder %v422, 1.0
      %vm449 = vcmp.ge.f32.partialorder %v423, 1.0
      %vm450 = vcmp.ge.f32.partialorder %v424, 1.0
      %vm451 = vcmp.ge.f32.partialorder %v425, 1.0
      %vm452 = vcmp.le.f32.partialorder %v422, 6.0
      %vm453 = vcmp.le.f32.partialorder %v423, 6.0
      %vm454 = vcmp.le.f32.partialorder %v424, 6.0
      %vm455 = vcmp.le.f32.partialorder %v425, 6.0
      %456 = vst [vmem:[#allocation1] ss:$2 sm:$0xff] %v253
      %v457 = vld.sshfl [vmem:[#allocation1 + $0x8] sm:$0xff pattern:$0x75316420]
      %458 = vrot.lane.b32.xlu0 %v457, 73
      %v459 = vpop.permute.xlu0 %458
      %461 = vst [vmem:[#allocation1] ss:$2 sm:$0xff] %v252
      %s462 = scalar_lea.vmem [#allocation1], 16
      %463 = vst [vmem:[%s462] ss:$2 sm:$0xff] %v253
      %v464 = vld.sshfl [vmem:[#allocation1] sm:$0xff pattern:$0x75316420]
      %v465 = vld.sshfl [vmem:[#allocation1 + $0x8] sm:$0xff pattern:$0x75316420]
      %v466 = vld.sshfl [vmem:[#allocation1 + $0x10] sm:$0xff pattern:$0x75316420]
      %v467 = vld.sshfl [vmem:[#allocation1 + $0x18] sm:$0xff pattern:$0x75316420]
      %468 = vrot.lane.b32.xlu0 %v464, 73
      %v469 = vpop.permute.xlu0 %468
      %470 = vrot.lane.b32.xlu0 %v465, 73
      %v471 = vpop.permute.xlu0 %470
      %472 = vrot.lane.b32.xlu0 %v466, 73
      %v473 = vpop.permute.xlu0 %472
      %474 = vrot.lane.b32.xlu0 %v467, 73
      %v475 = vpop.permute.xlu0 %474
      %vm476 = vcmask 596992
      %v477 = vsel %vm476, %v469, %v471
      %v478 = vsel %vm476, %v471, %v473
      %v479 = vsel %vm476, %v473, %v475
      %v484 = vsel %vm476, %v459, %v469
      %vm485 = vmand %vm432, %vm440
      %vm486 = vmand %vm433, %vm441
      %vm487 = vmand %vm434, %vm442
      %vm488 = vmand %vm435, %vm443
      %vm489 = vmand %vm485, %vm448
      %vm490 = vmand %vm486, %vm449
      %vm491 = vmand %vm487, %vm450
      %vm492 = vmand %vm488, %vm451
      %v493 = vsel %vm489, 1, 0
      %v494 = vsel %vm490, 1, 0
      %v495 = vsel %vm491, 1, 0
      %v496 = vsel %vm492, 1, 0
      %vm497 = vcmp.eq.s32.totalorder %v493, 1
      %vm498 = vcmp.eq.s32.totalorder %v494, 1
      %vm499 = vcmp.eq.s32.totalorder %v495, 1
      %vm500 = vcmp.eq.s32.totalorder %v496, 1
      %v501 = vsel %vm497, %v484, %v430
      %v502 = vsel %vm498, %v477, %v430
      %v503 = vsel %vm499, %v478, %v430
      %v504 = vsel %vm500, %v479, %v430
      %v505 = vld [vmem:[%s2] sm:$0xff]
      %506 = vst [vmem:[#allocation1] ss:$2 sm:$0xff] %v253
      %v507 = vld.sshfl [vmem:[#allocation1 + $0x8] sm:$0xff pattern:$0x75316420]
      %508 = vrot.lane.b32.xlu0 %v507, 72
      %v509 = vpop.permute.xlu0 %508
      %511 = vst [vmem:[#allocation1] ss:$2 sm:$0xff] %v252
      %s512 = scalar_lea.vmem [#allocation1], 16
      %513 = vst [vmem:[%s512] ss:$2 sm:$0xff] %v253
      %v514 = vld.sshfl [vmem:[#allocation1] sm:$0xff pattern:$0x75316420]
      %v515 = vld.sshfl [vmem:[#allocation1 + $0x8] sm:$0xff pattern:$0x75316420]
      %v516 = vld.sshfl [vmem:[#allocation1 + $0x10] sm:$0xff pattern:$0x75316420]
      %v517 = vld.sshfl [vmem:[#allocation1 + $0x18] sm:$0xff pattern:$0x75316420]
      %518 = vrot.lane.b32.xlu0 %v514, 72
      %v519 = vpop.permute.xlu0 %518
      %520 = vrot.lane.b32.xlu0 %v515, 72
      %v521 = vpop.permute.xlu0 %520
      %522 = vrot.lane.b32.xlu0 %v516, 72
      %v523 = vpop.permute.xlu0 %522
      %524 = vrot.lane.b32.xlu0 %v517, 72
      %v525 = vpop.permute.xlu0 %524
      %vm526 = vcmask 588800
      %v527 = vsel %vm526, %v519, %v521
      %v528 = vsel %vm526, %v521, %v523
      %v529 = vsel %vm526, %v523, %v525
      %v534 = vsel %vm526, %v509, %v519
      %v535 = vsel %vm485, 1, 0
      %v536 = vsel %vm486, 1, 0
      %v537 = vsel %vm487, 1, 0
      %v538 = vsel %vm488, 1, 0
      %vm539 = vcmp.eq.s32.totalorder %v535, 1
      %vm540 = vcmp.eq.s32.totalorder %v536, 1
      %vm541 = vcmp.eq.s32.totalorder %v537, 1
      %vm542 = vcmp.eq.s32.totalorder %v538, 1
      %v543 = vsel %vm539, %v534, %v430
      %v544 = vsel %vm540, %v527, %v430
      %v545 = vsel %vm541, %v528, %v430
      %v546 = vsel %vm542, %v529, %v430
      %s547 = scalar_lea.vmem %s2, 8
      %v548 = vld [vmem:[%s547] sm:$0xff]
      %v550 = vsel %vm270, %v548, 0
      %v553 = vsel %vm274, %v543, 0
      %v556 = vsel %vm274, %v544, 0
      %v559 = vsel %vm274, %v545, 0
      %v562 = vsel %vm274, %v546, 0
      %564 = vmatpush.msra.mxu0 0.0
      %565 = vmatpush.msra.mxu0 0.0
      %566 = vmatpush.msra.mxu0 0.0
      %567 = vmatpush.msra.mxu0 0.0
      %568 = vmatpush.msra.mxu0 0.0
      %569 = vmatpush.msra.mxu0 0.0
      %570 = vmatpush.msra.mxu0 0.0
      %571 = vmatpush.msra.mxu0 0.0
      %572 = vmatpush.msra.mxu0 0.0
      %573 = vmatpush.msra.mxu0 0.0
      %574 = vmatpush.msra.mxu0 0.0
      %575 = vmatpush.msra.mxu0 0.0
      %576 = vmatpush.msra.mxu0 0.0
      %577 = vmatpush.msra.mxu0 0.0
      %578 = vmatpush.msra.mxu0 0.0
      %579 = vmatpush.msra.mxu0 %v553
      %580 = vmatmul.f32.gmra.mxu0 %v550
      %v581 = vpop.f32.mrf.mxu0
      %v582 = vadd.f32 0.0, %v581
      %583 = vdwg.mxu0
      %584 = vmatpush.msra.mxu0 0.0
      %585 = vmatpush.msra.mxu0 0.0
      %586 = vmatpush.msra.mxu0 0.0
      %587 = vmatpush.msra.mxu0 0.0
      %588 = vmatpush.msra.mxu0 0.0
      %589 = vmatpush.msra.mxu0 0.0
      %590 = vmatpush.msra.mxu0 0.0
      %591 = vmatpush.msra.mxu0 0.0
      %592 = vmatpush.msra.mxu0 0.0
      %593 = vmatpush.msra.mxu0 0.0
      %594 = vmatpush.msra.mxu0 0.0
      %595 = vmatpush.msra.mxu0 0.0
      %596 = vmatpush.msra.mxu0 0.0
      %597 = vmatpush.msra.mxu0 0.0
      %598 = vmatpush.msra.mxu0 0.0
      %599 = vmatpush.msra.mxu0 %v556
      %600 = vmatmul.f32.gmra.mxu0 %v550
      %v601 = vpop.f32.mrf.mxu0
      %v602 = vadd.f32 0.0, %v601
      %603 = vdwg.mxu0
      %604 = vmatpush.msra.mxu0 0.0
      %605 = vmatpush.msra.mxu0 0.0
      %606 = vmatpush.msra.mxu0 0.0
      %607 = vmatpush.msra.mxu0 0.0
      %608 = vmatpush.msra.mxu0 0.0
      %609 = vmatpush.msra.mxu0 0.0
      %610 = vmatpush.msra.mxu0 0.0
      %611 = vmatpush.msra.mxu0 0.0
      %612 = vmatpush.msra.mxu0 0.0
      %613 = vmatpush.msra.mxu0 0.0
      %614 = vmatpush.msra.mxu0 0.0
      %615 = vmatpush.msra.mxu0 0.0
      %616 = vmatpush.msra.mxu0 0.0
      %617 = vmatpush.msra.mxu0 0.0
      %618 = vmatpush.msra.mxu0 0.0
      %619 = vmatpush.msra.mxu0 %v559
      %620 = vmatmul.f32.gmra.mxu0 %v550
      %v621 = vpop.f32.mrf.mxu0
      %v622 = vadd.f32 0.0, %v621
      %623 = vdwg.mxu0
      %624 = vmatpush.msra.mxu0 0.0
      %625 = vmatpush.msra.mxu0 0.0
      %626 = vmatpush.msra.mxu0 0.0
      %627 = vmatpush.msra.mxu0 0.0
      %628 = vmatpush.msra.mxu0 0.0
      %629 = vmatpush.msra.mxu0 0.0
      %630 = vmatpush.msra.mxu0 0.0
      %631 = vmatpush.msra.mxu0 0.0
      %632 = vmatpush.msra.mxu0 0.0
      %633 = vmatpush.msra.mxu0 0.0
      %634 = vmatpush.msra.mxu0 0.0
      %635 = vmatpush.msra.mxu0 0.0
      %636 = vmatpush.msra.mxu0 0.0
      %637 = vmatpush.msra.mxu0 0.0
      %638 = vmatpush.msra.mxu0 0.0
      %639 = vmatpush.msra.mxu0 %v562
      %640 = vmatmul.f32.gmra.mxu0 %v550
      %v641 = vpop.f32.mrf.mxu0
      %v642 = vadd.f32 0.0, %v641
      %643 = vdwg.mxu0
      %v645 = vsel %vm270, %v505, 0
      %v648 = vsel %vm274, %v501, 0
      %v651 = vsel %vm274, %v502, 0
      %v654 = vsel %vm274, %v503, 0
      %v657 = vsel %vm274, %v504, 0
      %659 = vmatpush.msra.mxu0 0.0
      %660 = vmatpush.msra.mxu0 0.0
      %661 = vmatpush.msra.mxu0 0.0
      %662 = vmatpush.msra.mxu0 0.0
      %663 = vmatpush.msra.mxu0 0.0
      %664 = vmatpush.msra.mxu0 0.0
      %665 = vmatpush.msra.mxu0 0.0
      %666 = vmatpush.msra.mxu0 0.0
      %667 = vmatpush.msra.mxu0 0.0
      %668 = vmatpush.msra.mxu0 0.0
      %669 = vmatpush.msra.mxu0 0.0
      %670 = vmatpush.msra.mxu0 0.0
      %671 = vmatpush.msra.mxu0 0.0
      %672 = vmatpush.msra.mxu0 0.0
      %673 = vmatpush.msra.mxu0 0.0
      %674 = vmatpush.msra.mxu0 %v648
      %675 = vmatmul.f32.gmra.mxu0 %v645
      %v676 = vpop.f32.mrf.mxu0
      %v677 = vadd.f32 %v582, %v676
      %678 = vdwg.mxu0
      %679 = vmatpush.msra.mxu0 0.0
      %680 = vmatpush.msra.mxu0 0.0
      %681 = vmatpush.msra.mxu0 0.0
      %682 = vmatpush.msra.mxu0 0.0
      %683 = vmatpush.msra.mxu0 0.0
      %684 = vmatpush.msra.mxu0 0.0
      %685 = vmatpush.msra.mxu0 0.0
      %686 = vmatpush.msra.mxu0 0.0
      %687 = vmatpush.msra.mxu0 0.0
      %688 = vmatpush.msra.mxu0 0.0
      %689 = vmatpush.msra.mxu0 0.0
      %690 = vmatpush.msra.mxu0 0.0
      %691 = vmatpush.msra.mxu0 0.0
      %692 = vmatpush.msra.mxu0 0.0
      %693 = vmatpush.msra.mxu0 0.0
      %694 = vmatpush.msra.mxu0 %v651
      %695 = vmatmul.f32.gmra.mxu0 %v645
      %v696 = vpop.f32.mrf.mxu0
      %v697 = vadd.f32 %v602, %v696
      %698 = vdwg.mxu0
      %699 = vmatpush.msra.mxu0 0.0
      %700 = vmatpush.msra.mxu0 0.0
      %701 = vmatpush.msra.mxu0 0.0
      %702 = vmatpush.msra.mxu0 0.0
      %703 = vmatpush.msra.mxu0 0.0
      %704 = vmatpush.msra.mxu0 0.0
      %705 = vmatpush.msra.mxu0 0.0
      %706 = vmatpush.msra.mxu0 0.0
      %707 = vmatpush.msra.mxu0 0.0
      %708 = vmatpush.msra.mxu0 0.0
      %709 = vmatpush.msra.mxu0 0.0
      %710 = vmatpush.msra.mxu0 0.0
      %711 = vmatpush.msra.mxu0 0.0
      %712 = vmatpush.msra.mxu0 0.0
      %713 = vmatpush.msra.mxu0 0.0
      %714 = vmatpush.msra.mxu0 %v654
      %715 = vmatmul.f32.gmra.mxu0 %v645
      %v716 = vpop.f32.mrf.mxu0
      %v717 = vadd.f32 %v622, %v716
      %718 = vdwg.mxu0
      %719 = vmatpush.msra.mxu0 0.0
      %720 = vmatpush.msra.mxu0 0.0
      %721 = vmatpush.msra.mxu0 0.0
      %722 = vmatpush.msra.mxu0 0.0
      %723 = vmatpush.msra.mxu0 0.0
      %724 = vmatpush.msra.mxu0 0.0
      %725 = vmatpush.msra.mxu0 0.0
      %726 = vmatpush.msra.mxu0 0.0
      %727 = vmatpush.msra.mxu0 0.0
      %728 = vmatpush.msra.mxu0 0.0
      %729 = vmatpush.msra.mxu0 0.0
      %730 = vmatpush.msra.mxu0 0.0
      %731 = vmatpush.msra.mxu0 0.0
      %732 = vmatpush.msra.mxu0 0.0
      %733 = vmatpush.msra.mxu0 0.0
      %734 = vmatpush.msra.mxu0 %v657
      %735 = vmatmul.f32.gmra.mxu0 %v645
      %v736 = vpop.f32.mrf.mxu0
      %v737 = vadd.f32 %v642, %v736
      %738 = vdwg.mxu0
      %739 = vst [vmem:[#allocation1] ss:$2 sm:$0xff] %v253
      %v740 = vld.sshfl [vmem:[#allocation1 + $0x8] sm:$0xff pattern:$0x75316420]
      %741 = vrot.lane.b32.xlu0 %v740, 71
      %v742 = vpop.permute.xlu0 %741
      %744 = vst [vmem:[#allocation1] ss:$2 sm:$0xff] %v252
      %s745 = scalar_lea.vmem [#allocation1], 16
      %746 = vst [vmem:[%s745] ss:$2 sm:$0xff] %v253
      %v747 = vld.sshfl [vmem:[#allocation1] sm:$0xff pattern:$0x75316420]
      %v748 = vld.sshfl [vmem:[#allocation1 + $0x8] sm:$0xff pattern:$0x75316420]
      %v749 = vld.sshfl [vmem:[#allocation1 + $0x10] sm:$0xff pattern:$0x75316420]
      %v750 = vld.sshfl [vmem:[#allocation1 + $0x18] sm:$0xff pattern:$0x75316420]
      %751 = vrot.lane.b32.xlu0 %v747, 71
      %v752 = vpop.permute.xlu0 %751
      %753 = vrot.lane.b32.xlu0 %v748, 71
      %v754 = vpop.permute.xlu0 %753
      %755 = vrot.lane.b32.xlu0 %v749, 71
      %v756 = vpop.permute.xlu0 %755
      %757 = vrot.lane.b32.xlu0 %v750, 71
      %v758 = vpop.permute.xlu0 %757
      %vm759 = vcmask 580608
      %v760 = vsel %vm759, %v752, %v754
      %v761 = vsel %vm759, %v754, %v756
      %v762 = vsel %vm759, %v756, %v758
      %v767 = vsel %vm759, %v742, %v752
      %vm768 = vmand %vm485, %vm452
      %vm769 = vmand %vm486, %vm453
      %vm770 = vmand %vm487, %vm454
      %vm771 = vmand %vm488, %vm455
      %v772 = vsel %vm768, 1, 0
      %v773 = vsel %vm769, 1, 0
      %v774 = vsel %vm770, 1, 0
      %v775 = vsel %vm771, 1, 0
      %vm776 = vcmp.eq.s32.totalorder %v772, 1
      %vm777 = vcmp.eq.s32.totalorder %v773, 1
      %vm778 = vcmp.eq.s32.totalorder %v774, 1
      %vm779 = vcmp.eq.s32.totalorder %v775, 1
      %v780 = vsel %vm776, %v767, %v430
      %v781 = vsel %vm777, %v760, %v430
      %v782 = vsel %vm778, %v761, %v430
      %v783 = vsel %vm779, %v762, %v430
      %s784 = scalar_lea.vmem %s2, 16
      %v785 = vld [vmem:[%s784] sm:$0xff]
      %v787 = vsel %vm270, %v785, 0
      %v790 = vsel %vm274, %v780, 0
      %v793 = vsel %vm274, %v781, 0
      %v796 = vsel %vm274, %v782, 0
      %v799 = vsel %vm274, %v783, 0
      %801 = vmatpush.msra.mxu0 0.0
      %802 = vmatpush.msra.mxu0 0.0
      %803 = vmatpush.msra.mxu0 0.0
      %804 = vmatpush.msra.mxu0 0.0
      %805 = vmatpush.msra.mxu0 0.0
      %806 = vmatpush.msra.mxu0 0.0
      %807 = vmatpush.msra.mxu0 0.0
      %808 = vmatpush.msra.mxu0 0.0
      %809 = vmatpush.msra.mxu0 0.0
      %810 = vmatpush.msra.mxu0 0.0
      %811 = vmatpush.msra.mxu0 0.0
      %812 = vmatpush.msra.mxu0 0.0
      %813 = vmatpush.msra.mxu0 0.0
      %814 = vmatpush.msra.mxu0 0.0
      %815 = vmatpush.msra.mxu0 0.0
      %816 = vmatpush.msra.mxu0 %v790
      %817 = vmatmul.f32.gmra.mxu0 %v787
      %v818 = vpop.f32.mrf.mxu0
      %v819 = vadd.f32 0.0, %v818
      %820 = vdwg.mxu0
      %821 = vmatpush.msra.mxu0 0.0
      %822 = vmatpush.msra.mxu0 0.0
      %823 = vmatpush.msra.mxu0 0.0
      %824 = vmatpush.msra.mxu0 0.0
      %825 = vmatpush.msra.mxu0 0.0
      %826 = vmatpush.msra.mxu0 0.0
      %827 = vmatpush.msra.mxu0 0.0
      %828 = vmatpush.msra.mxu0 0.0
      %829 = vmatpush.msra.mxu0 0.0
      %830 = vmatpush.msra.mxu0 0.0
      %831 = vmatpush.msra.mxu0 0.0
      %832 = vmatpush.msra.mxu0 0.0
      %833 = vmatpush.msra.mxu0 0.0
      %834 = vmatpush.msra.mxu0 0.0
      %835 = vmatpush.msra.mxu0 0.0
      %836 = vmatpush.msra.mxu0 %v793
      %837 = vmatmul.f32.gmra.mxu0 %v787
      %v838 = vpop.f32.mrf.mxu0
      %v839 = vadd.f32 0.0, %v838
      %840 = vdwg.mxu0
      %841 = vmatpush.msra.mxu0 0.0
      %842 = vmatpush.msra.mxu0 0.0
      %843 = vmatpush.msra.mxu0 0.0
      %844 = vmatpush.msra.mxu0 0.0
      %845 = vmatpush.msra.mxu0 0.0
      %846 = vmatpush.msra.mxu0 0.0
      %847 = vmatpush.msra.mxu0 0.0
      %848 = vmatpush.msra.mxu0 0.0
      %849 = vmatpush.msra.mxu0 0.0
      %850 = vmatpush.msra.mxu0 0.0
      %851 = vmatpush.msra.mxu0 0.0
      %852 = vmatpush.msra.mxu0 0.0
      %853 = vmatpush.msra.mxu0 0.0
      %854 = vmatpush.msra.mxu0 0.0
      %855 = vmatpush.msra.mxu0 0.0
      %856 = vmatpush.msra.mxu0 %v796
      %857 = vmatmul.f32.gmra.mxu0 %v787
      %v858 = vpop.f32.mrf.mxu0
      %v859 = vadd.f32 0.0, %v858
      %860 = vdwg.mxu0
      %861 = vmatpush.msra.mxu0 0.0
      %862 = vmatpush.msra.mxu0 0.0
      %863 = vmatpush.msra.mxu0 0.0
      %864 = vmatpush.msra.mxu0 0.0
      %865 = vmatpush.msra.mxu0 0.0
      %866 = vmatpush.msra.mxu0 0.0
      %867 = vmatpush.msra.mxu0 0.0
      %868 = vmatpush.msra.mxu0 0.0
      %869 = vmatpush.msra.mxu0 0.0
      %870 = vmatpush.msra.mxu0 0.0
      %871 = vmatpush.msra.mxu0 0.0
      %872 = vmatpush.msra.mxu0 0.0
      %873 = vmatpush.msra.mxu0 0.0
      %874 = vmatpush.msra.mxu0 0.0
      %875 = vmatpush.msra.mxu0 0.0
      %876 = vmatpush.msra.mxu0 %v799
      %877 = vmatmul.f32.gmra.mxu0 %v787
      %v878 = vpop.f32.mrf.mxu0
      %v879 = vadd.f32 0.0, %v878
      %880 = vdwg.mxu0
      %v881 = vadd.f32 %v677, %v819
      %v882 = vadd.f32 %v697, %v839
      %v883 = vadd.f32 %v717, %v859
      %v884 = vadd.f32 %v737, %v879
      %885 = vst [vmem:[#allocation1] ss:$2 sm:$0xff] %v253
      %v886 = vld.sshfl [vmem:[#allocation1 + $0x8] sm:$0xff pattern:$0x75316420]
      %887 = vrot.lane.b32.xlu0 %v886, 65
      %v888 = vpop.permute.xlu0 %887
      %890 = vst [vmem:[#allocation1] ss:$2 sm:$0xff] %v252
      %s891 = scalar_lea.vmem [#allocation1], 16
      %892 = vst [vmem:[%s891] ss:$2 sm:$0xff] %v253
      %v893 = vld.sshfl [vmem:[#allocation1] sm:$0xff pattern:$0x75316420]
      %v894 = vld.sshfl [vmem:[#allocation1 + $0x8] sm:$0xff pattern:$0x75316420]
      %v895 = vld.sshfl [vmem:[#allocation1 + $0x10] sm:$0xff pattern:$0x75316420]
      %v896 = vld.sshfl [vmem:[#allocation1 + $0x18] sm:$0xff pattern:$0x75316420]
      %897 = vrot.lane.b32.xlu0 %v893, 65
      %v898 = vpop.permute.xlu0 %897
      %899 = vrot.lane.b32.xlu0 %v894, 65
      %v900 = vpop.permute.xlu0 %899
      %901 = vrot.lane.b32.xlu0 %v895, 65
      %v902 = vpop.permute.xlu0 %901
      %903 = vrot.lane.b32.xlu0 %v896, 65
      %v904 = vpop.permute.xlu0 %903
      %vm905 = vcmask 531456
      %v906 = vsel %vm905, %v898, %v900
      %v907 = vsel %vm905, %v900, %v902
      %v908 = vsel %vm905, %v902, %v904
      %v913 = vsel %vm905, %v888, %v898
      %vm914 = vmand %vm432, %vm448
      %vm915 = vmand %vm433, %vm449
      %vm916 = vmand %vm434, %vm450
      %vm917 = vmand %vm435, %vm451
      %v918 = vsel %vm914, 1, 0
      %v919 = vsel %vm915, 1, 0
      %v920 = vsel %vm916, 1, 0
      %v921 = vsel %vm917, 1, 0
      %vm922 = vcmp.eq.s32.totalorder %v918, 1
      %vm923 = vcmp.eq.s32.totalorder %v919, 1
      %vm924 = vcmp.eq.s32.totalorder %v920, 1
      %vm925 = vcmp.eq.s32.totalorder %v921, 1
      %v926 = vsel %vm922, %v913, %v430
      %v927 = vsel %vm923, %v906, %v430
      %v928 = vsel %vm924, %v907, %v430
      %v929 = vsel %vm925, %v908, %v430
      %s930 = scalar_lea.vmem %s2, 24
      %v931 = vld [vmem:[%s930] sm:$0xff]
      %v933 = vsel %vm270, %v931, 0
      %v936 = vsel %vm274, %v926, 0
      %v939 = vsel %vm274, %v927, 0
      %v942 = vsel %vm274, %v928, 0
      %v945 = vsel %vm274, %v929, 0
      %947 = vmatpush.msra.mxu0 0.0
      %948 = vmatpush.msra.mxu0 0.0
      %949 = vmatpush.msra.mxu0 0.0
      %950 = vmatpush.msra.mxu0 0.0
      %951 = vmatpush.msra.mxu0 0.0
      %952 = vmatpush.msra.mxu0 0.0
      %953 = vmatpush.msra.mxu0 0.0
      %954 = vmatpush.msra.mxu0 0.0
      %955 = vmatpush.msra.mxu0 0.0
      %956 = vmatpush.msra.mxu0 0.0
      %957 = vmatpush.msra.mxu0 0.0
      %958 = vmatpush.msra.mxu0 0.0
      %959 = vmatpush.msra.mxu0 0.0
      %960 = vmatpush.msra.mxu0 0.0
      %961 = vmatpush.msra.mxu0 0.0
      %962 = vmatpush.msra.mxu0 %v936
      %963 = vmatmul.f32.gmra.mxu0 %v933
      %v964 = vpop.f32.mrf.mxu0
      %v965 = vadd.f32 0.0, %v964
      %966 = vdwg.mxu0
      %967 = vmatpush.msra.mxu0 0.0
      %968 = vmatpush.msra.mxu0 0.0
      %969 = vmatpush.msra.mxu0 0.0
      %970 = vmatpush.msra.mxu0 0.0
      %971 = vmatpush.msra.mxu0 0.0
      %972 = vmatpush.msra.mxu0 0.0
      %973 = vmatpush.msra.mxu0 0.0
      %974 = vmatpush.msra.mxu0 0.0
      %975 = vmatpush.msra.mxu0 0.0
      %976 = vmatpush.msra.mxu0 0.0
      %977 = vmatpush.msra.mxu0 0.0
      %978 = vmatpush.msra.mxu0 0.0
      %979 = vmatpush.msra.mxu0 0.0
      %980 = vmatpush.msra.mxu0 0.0
      %981 = vmatpush.msra.mxu0 0.0
      %982 = vmatpush.msra.mxu0 %v939
      %983 = vmatmul.f32.gmra.mxu0 %v933
      %v984 = vpop.f32.mrf.mxu0
      %v985 = vadd.f32 0.0, %v984
      %986 = vdwg.mxu0
      %987 = vmatpush.msra.mxu0 0.0
      %988 = vmatpush.msra.mxu0 0.0
      %989 = vmatpush.msra.mxu0 0.0
      %990 = vmatpush.msra.mxu0 0.0
      %991 = vmatpush.msra.mxu0 0.0
      %992 = vmatpush.msra.mxu0 0.0
      %993 = vmatpush.msra.mxu0 0.0
      %994 = vmatpush.msra.mxu0 0.0
      %995 = vmatpush.msra.mxu0 0.0
      %996 = vmatpush.msra.mxu0 0.0
      %997 = vmatpush.msra.mxu0 0.0
      %998 = vmatpush.msra.mxu0 0.0
      %999 = vmatpush.msra.mxu0 0.0
      %1000 = vmatpush.msra.mxu0 0.0
      %1001 = vmatpush.msra.mxu0 0.0
      %1002 = vmatpush.msra.mxu0 %v942
      %1003 = vmatmul.f32.gmra.mxu0 %v933
      %v1004 = vpop.f32.mrf.mxu0
      %v1005 = vadd.f32 0.0, %v1004
      %1006 = vdwg.mxu0
      %1007 = vmatpush.msra.mxu0 0.0
      %1008 = vmatpush.msra.mxu0 0.0
      %1009 = vmatpush.msra.mxu0 0.0
      %1010 = vmatpush.msra.mxu0 0.0
      %1011 = vmatpush.msra.mxu0 0.0
      %1012 = vmatpush.msra.mxu0 0.0
      %1013 = vmatpush.msra.mxu0 0.0
      %1014 = vmatpush.msra.mxu0 0.0
      %1015 = vmatpush.msra.mxu0 0.0
      %1016 = vmatpush.msra.mxu0 0.0
      %1017 = vmatpush.msra.mxu0 0.0
      %1018 = vmatpush.msra.mxu0 0.0
      %1019 = vmatpush.msra.mxu0 0.0
      %1020 = vmatpush.msra.mxu0 0.0
      %1021 = vmatpush.msra.mxu0 0.0
      %1022 = vmatpush.msra.mxu0 %v945
      %1023 = vmatmul.f32.gmra.mxu0 %v933
      %v1024 = vpop.f32.mrf.mxu0
      %v1025 = vadd.f32 0.0, %v1024
      %1026 = vdwg.mxu0
      %v1027 = vadd.f32 %v881, %v965
      %v1028 = vadd.f32 %v882, %v985
      %v1029 = vadd.f32 %v883, %v1005
      %v1030 = vadd.f32 %v884, %v1025
      %1031 = vst [vmem:[#allocation1] ss:$2 sm:$0xff] %v253
      %v1032 = vld.sshfl [vmem:[#allocation1 + $0x8] sm:$0xff pattern:$0x75316420]
      %1033 = vrot.lane.b32.xlu0 %v1032, 64
      %v1034 = vpop.permute.xlu0 %1033
      %1036 = vst [vmem:[#allocation1] ss:$2 sm:$0xff] %v252
      %s1037 = scalar_lea.vmem [#allocation1], 16
      %1038 = vst [vmem:[%s1037] ss:$2 sm:$0xff] %v253
      %v1039 = vld.sshfl [vmem:[#allocation1] sm:$0xff pattern:$0x75316420]
      %v1040 = vld.sshfl [vmem:[#allocation1 + $0x8] sm:$0xff pattern:$0x75316420]
      %v1041 = vld.sshfl [vmem:[#allocation1 + $0x10] sm:$0xff pattern:$0x75316420]
      %v1042 = vld.sshfl [vmem:[#allocation1 + $0x18] sm:$0xff pattern:$0x75316420]
      %1043 = vrot.lane.b32.xlu0 %v1039, 64
      %v1044 = vpop.permute.xlu0 %1043
      %1045 = vrot.lane.b32.xlu0 %v1040, 64
      %v1046 = vpop.permute.xlu0 %1045
      %1047 = vrot.lane.b32.xlu0 %v1041, 64
      %v1048 = vpop.permute.xlu0 %1047
      %1049 = vrot.lane.b32.xlu0 %v1042, 64
      %v1050 = vpop.permute.xlu0 %1049
      %vm1051 = vcmask 523264
      %v1052 = vsel %vm1051, %v1044, %v1046
      %v1053 = vsel %vm1051, %v1046, %v1048
      %v1054 = vsel %vm1051, %v1048, %v1050
      %v1059 = vsel %vm1051, %v1034, %v1044
      %v1060 = vsel %vm432, 1, 0
      %v1061 = vsel %vm433, 1, 0
      %v1062 = vsel %vm434, 1, 0
      %v1063 = vsel %vm435, 1, 0
      %vm1064 = vcmp.eq.s32.totalorder %v1060, 1
      %vm1065 = vcmp.eq.s32.totalorder %v1061, 1
      %vm1066 = vcmp.eq.s32.totalorder %v1062, 1
      %vm1067 = vcmp.eq.s32.totalorder %v1063, 1
      %v1068 = vsel %vm1064, %v1059, %v430
      %v1069 = vsel %vm1065, %v1052, %v430
      %v1070 = vsel %vm1066, %v1053, %v430
      %v1071 = vsel %vm1067, %v1054, %v430
      %s1072 = scalar_lea.vmem %s2, 32
      %v1073 = vld [vmem:[%s1072] sm:$0xff]
      %v1075 = vsel %vm270, %v1073, 0
      %v1078 = vsel %vm274, %v1068, 0
      %v1081 = vsel %vm274, %v1069, 0
      %v1084 = vsel %vm274, %v1070, 0
      %v1087 = vsel %vm274, %v1071, 0
      %1089 = vmatpush.msra.mxu0 0.0
      %1090 = vmatpush.msra.mxu0 0.0
      %1091 = vmatpush.msra.mxu0 0.0
      %1092 = vmatpush.msra.mxu0 0.0
      %1093 = vmatpush.msra.mxu0 0.0
      %1094 = vmatpush.msra.mxu0 0.0
      %1095 = vmatpush.msra.mxu0 0.0
      %1096 = vmatpush.msra.mxu0 0.0
      %1097 = vmatpush.msra.mxu0 0.0
      %1098 = vmatpush.msra.mxu0 0.0
      %1099 = vmatpush.msra.mxu0 0.0
      %1100 = vmatpush.msra.mxu0 0.0
      %1101 = vmatpush.msra.mxu0 0.0
      %1102 = vmatpush.msra.mxu0 0.0
      %1103 = vmatpush.msra.mxu0 0.0
      %1104 = vmatpush.msra.mxu0 %v1078
      %1105 = vmatmul.f32.gmra.mxu0 %v1075
      %v1106 = vpop.f32.mrf.mxu0
      %v1107 = vadd.f32 0.0, %v1106
      %1108 = vdwg.mxu0
      %1109 = vmatpush.msra.mxu0 0.0
      %1110 = vmatpush.msra.mxu0 0.0
      %1111 = vmatpush.msra.mxu0 0.0
      %1112 = vmatpush.msra.mxu0 0.0
      %1113 = vmatpush.msra.mxu0 0.0
      %1114 = vmatpush.msra.mxu0 0.0
      %1115 = vmatpush.msra.mxu0 0.0
      %1116 = vmatpush.msra.mxu0 0.0
      %1117 = vmatpush.msra.mxu0 0.0
      %1118 = vmatpush.msra.mxu0 0.0
      %1119 = vmatpush.msra.mxu0 0.0
      %1120 = vmatpush.msra.mxu0 0.0
      %1121 = vmatpush.msra.mxu0 0.0
      %1122 = vmatpush.msra.mxu0 0.0
      %1123 = vmatpush.msra.mxu0 0.0
      %1124 = vmatpush.msra.mxu0 %v1081
      %1125 = vmatmul.f32.gmra.mxu0 %v1075
      %v1126 = vpop.f32.mrf.mxu0
      %v1127 = vadd.f32 0.0, %v1126
      %1128 = vdwg.mxu0
      %1129 = vmatpush.msra.mxu0 0.0
      %1130 = vmatpush.msra.mxu0 0.0
      %1131 = vmatpush.msra.mxu0 0.0
      %1132 = vmatpush.msra.mxu0 0.0
      %1133 = vmatpush.msra.mxu0 0.0
      %1134 = vmatpush.msra.mxu0 0.0
      %1135 = vmatpush.msra.mxu0 0.0
      %1136 = vmatpush.msra.mxu0 0.0
      %1137 = vmatpush.msra.mxu0 0.0
      %1138 = vmatpush.msra.mxu0 0.0
      %1139 = vmatpush.msra.mxu0 0.0
      %1140 = vmatpush.msra.mxu0 0.0
      %1141 = vmatpush.msra.mxu0 0.0
      %1142 = vmatpush.msra.mxu0 0.0
      %1143 = vmatpush.msra.mxu0 0.0
      %1144 = vmatpush.msra.mxu0 %v1084
      %1145 = vmatmul.f32.gmra.mxu0 %v1075
      %v1146 = vpop.f32.mrf.mxu0
      %v1147 = vadd.f32 0.0, %v1146
      %1148 = vdwg.mxu0
      %1149 = vmatpush.msra.mxu0 0.0
      %1150 = vmatpush.msra.mxu0 0.0
      %1151 = vmatpush.msra.mxu0 0.0
      %1152 = vmatpush.msra.mxu0 0.0
      %1153 = vmatpush.msra.mxu0 0.0
      %1154 = vmatpush.msra.mxu0 0.0
      %1155 = vmatpush.msra.mxu0 0.0
      %1156 = vmatpush.msra.mxu0 0.0
      %1157 = vmatpush.msra.mxu0 0.0
      %1158 = vmatpush.msra.mxu0 0.0
      %1159 = vmatpush.msra.mxu0 0.0
      %1160 = vmatpush.msra.mxu0 0.0
      %1161 = vmatpush.msra.mxu0 0.0
      %1162 = vmatpush.msra.mxu0 0.0
      %1163 = vmatpush.msra.mxu0 0.0
      %1164 = vmatpush.msra.mxu0 %v1087
      %1165 = vmatmul.f32.gmra.mxu0 %v1075
      %v1166 = vpop.f32.mrf.mxu0
      %v1167 = vadd.f32 0.0, %v1166
      %1168 = vdwg.mxu0
      %v1169 = vadd.f32 %v1027, %v1107
      %v1170 = vadd.f32 %v1028, %v1127
      %v1171 = vadd.f32 %v1029, %v1147
      %v1172 = vadd.f32 %v1030, %v1167
      %1173 = vst [vmem:[#allocation1] ss:$2 sm:$0xff] %v253
      %v1174 = vld.sshfl [vmem:[#allocation1 + $0x8] sm:$0xff pattern:$0x75316420]
      %1175 = vrot.lane.b32.xlu0 %v1174, 63
      %v1176 = vpop.permute.xlu0 %1175
      %1178 = vst [vmem:[#allocation1] ss:$2 sm:$0xff] %v252
      %s1179 = scalar_lea.vmem [#allocation1], 16
      %1180 = vst [vmem:[%s1179] ss:$2 sm:$0xff] %v253
      %v1181 = vld.sshfl [vmem:[#allocation1] sm:$0xff pattern:$0x75316420]
      %v1182 = vld.sshfl [vmem:[#allocation1 + $0x8] sm:$0xff pattern:$0x75316420]
      %v1183 = vld.sshfl [vmem:[#allocation1 + $0x10] sm:$0xff pattern:$0x75316420]
      %v1184 = vld.sshfl [vmem:[#allocation1 + $0x18] sm:$0xff pattern:$0x75316420]
      %1185 = vrot.lane.b32.xlu0 %v1181, 63
      %v1186 = vpop.permute.xlu0 %1185
      %1187 = vrot.lane.b32.xlu0 %v1182, 63
      %v1188 = vpop.permute.xlu0 %1187
      %1189 = vrot.lane.b32.xlu0 %v1183, 63
      %v1190 = vpop.permute.xlu0 %1189
      %1191 = vrot.lane.b32.xlu0 %v1184, 63
      %v1192 = vpop.permute.xlu0 %1191
      %vm1193 = vcmask 515072
      %v1194 = vsel %vm1193, %v1186, %v1188
      %v1195 = vsel %vm1193, %v1188, %v1190
      %v1196 = vsel %vm1193, %v1190, %v1192
      %v1201 = vsel %vm1193, %v1176, %v1186
      %vm1202 = vmand %vm432, %vm452
      %vm1203 = vmand %vm433, %vm453
      %vm1204 = vmand %vm434, %vm454
      %vm1205 = vmand %vm435, %vm455
      %v1206 = vsel %vm1202, 1, 0
      %v1207 = vsel %vm1203, 1, 0
      %v1208 = vsel %vm1204, 1, 0
      %v1209 = vsel %vm1205, 1, 0
      %vm1210 = vcmp.eq.s32.totalorder %v1206, 1
      %vm1211 = vcmp.eq.s32.totalorder %v1207, 1
      %vm1212 = vcmp.eq.s32.totalorder %v1208, 1
      %vm1213 = vcmp.eq.s32.totalorder %v1209, 1
      %v1214 = vsel %vm1210, %v1201, %v430
      %v1215 = vsel %vm1211, %v1194, %v430
      %v1216 = vsel %vm1212, %v1195, %v430
      %v1217 = vsel %vm1213, %v1196, %v430
      %s1218 = scalar_lea.vmem %s2, 40
      %v1219 = vld [vmem:[%s1218] sm:$0xff]
      %v1221 = vsel %vm270, %v1219, 0
      %v1224 = vsel %vm274, %v1214, 0
      %v1227 = vsel %vm274, %v1215, 0
      %v1230 = vsel %vm274, %v1216, 0
      %v1233 = vsel %vm274, %v1217, 0
      %1235 = vmatpush.msra.mxu0 0.0
      %1236 = vmatpush.msra.mxu0 0.0
      %1237 = vmatpush.msra.mxu0 0.0
      %1238 = vmatpush.msra.mxu0 0.0
      %1239 = vmatpush.msra.mxu0 0.0
      %1240 = vmatpush.msra.mxu0 0.0
      %1241 = vmatpush.msra.mxu0 0.0
      %1242 = vmatpush.msra.mxu0 0.0
      %1243 = vmatpush.msra.mxu0 0.0
      %1244 = vmatpush.msra.mxu0 0.0
      %1245 = vmatpush.msra.mxu0 0.0
      %1246 = vmatpush.msra.mxu0 0.0
      %1247 = vmatpush.msra.mxu0 0.0
      %1248 = vmatpush.msra.mxu0 0.0
      %1249 = vmatpush.msra.mxu0 0.0
      %1250 = vmatpush.msra.mxu0 %v1224
      %1251 = vmatmul.f32.gmra.mxu0 %v1221
      %v1252 = vpop.f32.mrf.mxu0
      %v1253 = vadd.f32 0.0, %v1252
      %1254 = vdwg.mxu0
      %1255 = vmatpush.msra.mxu0 0.0
      %1256 = vmatpush.msra.mxu0 0.0
      %1257 = vmatpush.msra.mxu0 0.0
      %1258 = vmatpush.msra.mxu0 0.0
      %1259 = vmatpush.msra.mxu0 0.0
      %1260 = vmatpush.msra.mxu0 0.0
      %1261 = vmatpush.msra.mxu0 0.0
      %1262 = vmatpush.msra.mxu0 0.0
      %1263 = vmatpush.msra.mxu0 0.0
      %1264 = vmatpush.msra.mxu0 0.0
      %1265 = vmatpush.msra.mxu0 0.0
      %1266 = vmatpush.msra.mxu0 0.0
      %1267 = vmatpush.msra.mxu0 0.0
      %1268 = vmatpush.msra.mxu0 0.0
      %1269 = vmatpush.msra.mxu0 0.0
      %1270 = vmatpush.msra.mxu0 %v1227
      %1271 = vmatmul.f32.gmra.mxu0 %v1221
      %v1272 = vpop.f32.mrf.mxu0
      %v1273 = vadd.f32 0.0, %v1272
      %1274 = vdwg.mxu0
      %1275 = vmatpush.msra.mxu0 0.0
      %1276 = vmatpush.msra.mxu0 0.0
      %1277 = vmatpush.msra.mxu0 0.0
      %1278 = vmatpush.msra.mxu0 0.0
      %1279 = vmatpush.msra.mxu0 0.0
      %1280 = vmatpush.msra.mxu0 0.0
      %1281 = vmatpush.msra.mxu0 0.0
      %1282 = vmatpush.msra.mxu0 0.0
      %1283 = vmatpush.msra.mxu0 0.0
      %1284 = vmatpush.msra.mxu0 0.0
      %1285 = vmatpush.msra.mxu0 0.0
      %1286 = vmatpush.msra.mxu0 0.0
      %1287 = vmatpush.msra.mxu0 0.0
      %1288 = vmatpush.msra.mxu0 0.0
      %1289 = vmatpush.msra.mxu0 0.0
      %1290 = vmatpush.msra.mxu0 %v1230
      %1291 = vmatmul.f32.gmra.mxu0 %v1221
      %v1292 = vpop.f32.mrf.mxu0
      %v1293 = vadd.f32 0.0, %v1292
      %1294 = vdwg.mxu0
      %1295 = vmatpush.msra.mxu0 0.0
      %1296 = vmatpush.msra.mxu0 0.0
      %1297 = vmatpush.msra.mxu0 0.0
      %1298 = vmatpush.msra.mxu0 0.0
      %1299 = vmatpush.msra.mxu0 0.0
      %1300 = vmatpush.msra.mxu0 0.0
      %1301 = vmatpush.msra.mxu0 0.0
      %1302 = vmatpush.msra.mxu0 0.0
      %1303 = vmatpush.msra.mxu0 0.0
      %1304 = vmatpush.msra.mxu0 0.0
      %1305 = vmatpush.msra.mxu0 0.0
      %1306 = vmatpush.msra.mxu0 0.0
      %1307 = vmatpush.msra.mxu0 0.0
      %1308 = vmatpush.msra.mxu0 0.0
      %1309 = vmatpush.msra.mxu0 0.0
      %1310 = vmatpush.msra.mxu0 %v1233
      %1311 = vmatmul.f32.gmra.mxu0 %v1221
      %v1312 = vpop.f32.mrf.mxu0
      %v1313 = vadd.f32 0.0, %v1312
      %1314 = vdwg.mxu0
      %v1315 = vadd.f32 %v1169, %v1253
      %v1316 = vadd.f32 %v1170, %v1273
      %v1317 = vadd.f32 %v1171, %v1293
      %v1318 = vadd.f32 %v1172, %v1313
      %1319 = vst [vmem:[#allocation1] ss:$2 sm:$0xff] %v253
      %v1320 = vld.sshfl [vmem:[#allocation1 + $0x8] sm:$0xff pattern:$0x75316420]
      %1321 = vrot.lane.b32.xlu0 %v1320, 57
      %v1322 = vpop.permute.xlu0 %1321
      %1324 = vst [vmem:[#allocation1] ss:$2 sm:$0xff] %v252
      %s1325 = scalar_lea.vmem [#allocation1], 16
      %1326 = vst [vmem:[%s1325] ss:$2 sm:$0xff] %v253
      %v1327 = vld.sshfl [vmem:[#allocation1] sm:$0xff pattern:$0x75316420]
      %v1328 = vld.sshfl [vmem:[#allocation1 + $0x8] sm:$0xff pattern:$0x75316420]
      %v1329 = vld.sshfl [vmem:[#allocation1 + $0x10] sm:$0xff pattern:$0x75316420]
      %v1330 = vld.sshfl [vmem:[#allocation1 + $0x18] sm:$0xff pattern:$0x75316420]
      %1331 = vrot.lane.b32.xlu0 %v1327, 57
      %v1332 = vpop.permute.xlu0 %1331
      %1333 = vrot.lane.b32.xlu0 %v1328, 57
      %v1334 = vpop.permute.xlu0 %1333
      %1335 = vrot.lane.b32.xlu0 %v1329, 57
      %v1336 = vpop.permute.xlu0 %1335
      %1337 = vrot.lane.b32.xlu0 %v1330, 57
      %v1338 = vpop.permute.xlu0 %1337
      %vm1339 = vcmask 465920
      %v1340 = vsel %vm1339, %v1332, %v1334
      %v1341 = vsel %vm1339, %v1334, %v1336
      %v1342 = vsel %vm1339, %v1336, %v1338
      %v1347 = vsel %vm1339, %v1322, %v1332
      %vm1348 = vmand %vm432, %vm444
      %vm1349 = vmand %vm433, %vm445
      %vm1350 = vmand %vm434, %vm446
      %vm1351 = vmand %vm435, %vm447
      %vm1352 = vmand %vm1348, %vm448
      %vm1353 = vmand %vm1349, %vm449
      %vm1354 = vmand %vm1350, %vm450
      %vm1355 = vmand %vm1351, %vm451
      %v1356 = vsel %vm1352, 1, 0
      %v1357 = vsel %vm1353, 1, 0
      %v1358 = vsel %vm1354, 1, 0
      %v1359 = vsel %vm1355, 1, 0
      %vm1360 = vcmp.eq.s32.totalorder %v1356, 1
      %vm1361 = vcmp.eq.s32.totalorder %v1357, 1
      %vm1362 = vcmp.eq.s32.totalorder %v1358, 1
      %vm1363 = vcmp.eq.s32.totalorder %v1359, 1
      %v1364 = vsel %vm1360, %v1347, %v430
      %v1365 = vsel %vm1361, %v1340, %v430
      %v1366 = vsel %vm1362, %v1341, %v430
      %v1367 = vsel %vm1363, %v1342, %v430
      %s1368 = scalar_lea.vmem %s2, 48
      %v1369 = vld [vmem:[%s1368] sm:$0xff]
      %v1371 = vsel %vm270, %v1369, 0
      %v1374 = vsel %vm274, %v1364, 0
      %v1377 = vsel %vm274, %v1365, 0
      %v1380 = vsel %vm274, %v1366, 0
      %v1383 = vsel %vm274, %v1367, 0
      %1385 = vmatpush.msra.mxu0 0.0
      %1386 = vmatpush.msra.mxu0 0.0
      %1387 = vmatpush.msra.mxu0 0.0
      %1388 = vmatpush.msra.mxu0 0.0
      %1389 = vmatpush.msra.mxu0 0.0
      %1390 = vmatpush.msra.mxu0 0.0
      %1391 = vmatpush.msra.mxu0 0.0
      %1392 = vmatpush.msra.mxu0 0.0
      %1393 = vmatpush.msra.mxu0 0.0
      %1394 = vmatpush.msra.mxu0 0.0
      %1395 = vmatpush.msra.mxu0 0.0
      %1396 = vmatpush.msra.mxu0 0.0
      %1397 = vmatpush.msra.mxu0 0.0
      %1398 = vmatpush.msra.mxu0 0.0
      %1399 = vmatpush.msra.mxu0 0.0
      %1400 = vmatpush.msra.mxu0 %v1374
      %1401 = vmatmul.f32.gmra.mxu0 %v1371
      %v1402 = vpop.f32.mrf.mxu0
      %v1403 = vadd.f32 0.0, %v1402
      %1404 = vdwg.mxu0
      %1405 = vmatpush.msra.mxu0 0.0
      %1406 = vmatpush.msra.mxu0 0.0
      %1407 = vmatpush.msra.mxu0 0.0
      %1408 = vmatpush.msra.mxu0 0.0
      %1409 = vmatpush.msra.mxu0 0.0
      %1410 = vmatpush.msra.mxu0 0.0
      %1411 = vmatpush.msra.mxu0 0.0
      %1412 = vmatpush.msra.mxu0 0.0
      %1413 = vmatpush.msra.mxu0 0.0
      %1414 = vmatpush.msra.mxu0 0.0
      %1415 = vmatpush.msra.mxu0 0.0
      %1416 = vmatpush.msra.mxu0 0.0
      %1417 = vmatpush.msra.mxu0 0.0
      %1418 = vmatpush.msra.mxu0 0.0
      %1419 = vmatpush.msra.mxu0 0.0
      %1420 = vmatpush.msra.mxu0 %v1377
      %1421 = vmatmul.f32.gmra.mxu0 %v1371
      %v1422 = vpop.f32.mrf.mxu0
      %v1423 = vadd.f32 0.0, %v1422
      %1424 = vdwg.mxu0
      %1425 = vmatpush.msra.mxu0 0.0
      %1426 = vmatpush.msra.mxu0 0.0
      %1427 = vmatpush.msra.mxu0 0.0
      %1428 = vmatpush.msra.mxu0 0.0
      %1429 = vmatpush.msra.mxu0 0.0
      %1430 = vmatpush.msra.mxu0 0.0
      %1431 = vmatpush.msra.mxu0 0.0
      %1432 = vmatpush.msra.mxu0 0.0
      %1433 = vmatpush.msra.mxu0 0.0
      %1434 = vmatpush.msra.mxu0 0.0
      %1435 = vmatpush.msra.mxu0 0.0
      %1436 = vmatpush.msra.mxu0 0.0
      %1437 = vmatpush.msra.mxu0 0.0
      %1438 = vmatpush.msra.mxu0 0.0
      %1439 = vmatpush.msra.mxu0 0.0
      %1440 = vmatpush.msra.mxu0 %v1380
      %1441 = vmatmul.f32.gmra.mxu0 %v1371
      %v1442 = vpop.f32.mrf.mxu0
      %v1443 = vadd.f32 0.0, %v1442
      %1444 = vdwg.mxu0
      %1445 = vmatpush.msra.mxu0 0.0
      %1446 = vmatpush.msra.mxu0 0.0
      %1447 = vmatpush.msra.mxu0 0.0
      %1448 = vmatpush.msra.mxu0 0.0
      %1449 = vmatpush.msra.mxu0 0.0
      %1450 = vmatpush.msra.mxu0 0.0
      %1451 = vmatpush.msra.mxu0 0.0
      %1452 = vmatpush.msra.mxu0 0.0
      %1453 = vmatpush.msra.mxu0 0.0
      %1454 = vmatpush.msra.mxu0 0.0
      %1455 = vmatpush.msra.mxu0 0.0
      %1456 = vmatpush.msra.mxu0 0.0
      %1457 = vmatpush.msra.mxu0 0.0
      %1458 = vmatpush.msra.mxu0 0.0
      %1459 = vmatpush.msra.mxu0 0.0
      %1460 = vmatpush.msra.mxu0 %v1383
      %1461 = vmatmul.f32.gmra.mxu0 %v1371
      %v1462 = vpop.f32.mrf.mxu0
      %v1463 = vadd.f32 0.0, %v1462
      %1464 = vdwg.mxu0
      %v1465 = vadd.f32 %v1315, %v1403
      %v1466 = vadd.f32 %v1316, %v1423
      %v1467 = vadd.f32 %v1317, %v1443
      %v1468 = vadd.f32 %v1318, %v1463
      %1469 = vst [vmem:[#allocation1] ss:$2 sm:$0xff] %v253
      %v1470 = vld.sshfl [vmem:[#allocation1 + $0x8] sm:$0xff pattern:$0x75316420]
      %1471 = vrot.lane.b32.xlu0 %v1470, 56
      %v1472 = vpop.permute.xlu0 %1471
      %1474 = vst [vmem:[#allocation1] ss:$2 sm:$0xff] %v252
      %s1475 = scalar_lea.vmem [#allocation1], 16
      %1476 = vst [vmem:[%s1475] ss:$2 sm:$0xff] %v253
      %v1477 = vld.sshfl [vmem:[#allocation1] sm:$0xff pattern:$0x75316420]
      %v1478 = vld.sshfl [vmem:[#allocation1 + $0x8] sm:$0xff pattern:$0x75316420]
      %v1479 = vld.sshfl [vmem:[#allocation1 + $0x10] sm:$0xff pattern:$0x75316420]
      %v1480 = vld.sshfl [vmem:[#allocation1 + $0x18] sm:$0xff pattern:$0x75316420]
      %1481 = vrot.lane.b32.xlu0 %v1477, 56
      %v1482 = vpop.permute.xlu0 %1481
      %1483 = vrot.lane.b32.xlu0 %v1478, 56
      %v1484 = vpop.permute.xlu0 %1483
      %1485 = vrot.lane.b32.xlu0 %v1479, 56
      %v1486 = vpop.permute.xlu0 %1485
      %1487 = vrot.lane.b32.xlu0 %v1480, 56
      %v1488 = vpop.permute.xlu0 %1487
      %vm1489 = vcmask 457728
      %v1490 = vsel %vm1489, %v1482, %v1484
      %v1491 = vsel %vm1489, %v1484, %v1486
      %v1492 = vsel %vm1489, %v1486, %v1488
      %v1497 = vsel %vm1489, %v1472, %v1482
      %v1498 = vsel %vm1348, 1, 0
      %v1499 = vsel %vm1349, 1, 0
      %v1500 = vsel %vm1350, 1, 0
      %v1501 = vsel %vm1351, 1, 0
      %vm1502 = vcmp.eq.s32.totalorder %v1498, 1
      %vm1503 = vcmp.eq.s32.totalorder %v1499, 1
      %vm1504 = vcmp.eq.s32.totalorder %v1500, 1
      %vm1505 = vcmp.eq.s32.totalorder %v1501, 1
      %v1506 = vsel %vm1502, %v1497, %v430
      %v1507 = vsel %vm1503, %v1490, %v430
      %v1508 = vsel %vm1504, %v1491, %v430
      %v1509 = vsel %vm1505, %v1492, %v430
      %s1510 = scalar_lea.vmem %s2, 56
      %v1511 = vld [vmem:[%s1510] sm:$0xff]
      %v1513 = vsel %vm270, %v1511, 0
      %v1516 = vsel %vm274, %v1506, 0
      %v1519 = vsel %vm274, %v1507, 0
      %v1522 = vsel %vm274, %v1508, 0
      %v1525 = vsel %vm274, %v1509, 0
      %1527 = vmatpush.msra.mxu0 0.0
      %1528 = vmatpush.msra.mxu0 0.0
      %1529 = vmatpush.msra.mxu0 0.0
      %1530 = vmatpush.msra.mxu0 0.0
      %1531 = vmatpush.msra.mxu0 0.0
      %1532 = vmatpush.msra.mxu0 0.0
      %1533 = vmatpush.msra.mxu0 0.0
      %1534 = vmatpush.msra.mxu0 0.0
      %1535 = vmatpush.msra.mxu0 0.0
      %1536 = vmatpush.msra.mxu0 0.0
      %1537 = vmatpush.msra.mxu0 0.0
      %1538 = vmatpush.msra.mxu0 0.0
      %1539 = vmatpush.msra.mxu0 0.0
      %1540 = vmatpush.msra.mxu0 0.0
      %1541 = vmatpush.msra.mxu0 0.0
      %1542 = vmatpush.msra.mxu0 %v1516
      %1543 = vmatmul.f32.gmra.mxu0 %v1513
      %v1544 = vpop.f32.mrf.mxu0
      %v1545 = vadd.f32 0.0, %v1544
      %1546 = vdwg.mxu0
      %1547 = vmatpush.msra.mxu0 0.0
      %1548 = vmatpush.msra.mxu0 0.0
      %1549 = vmatpush.msra.mxu0 0.0
      %1550 = vmatpush.msra.mxu0 0.0
      %1551 = vmatpush.msra.mxu0 0.0
      %1552 = vmatpush.msra.mxu0 0.0
      %1553 = vmatpush.msra.mxu0 0.0
      %1554 = vmatpush.msra.mxu0 0.0
      %1555 = vmatpush.msra.mxu0 0.0
      %1556 = vmatpush.msra.mxu0 0.0
      %1557 = vmatpush.msra.mxu0 0.0
      %1558 = vmatpush.msra.mxu0 0.0
      %1559 = vmatpush.msra.mxu0 0.0
      %1560 = vmatpush.msra.mxu0 0.0
      %1561 = vmatpush.msra.mxu0 0.0
      %1562 = vmatpush.msra.mxu0 %v1519
      %1563 = vmatmul.f32.gmra.mxu0 %v1513
      %v1564 = vpop.f32.mrf.mxu0
      %v1565 = vadd.f32 0.0, %v1564
      %1566 = vdwg.mxu0
      %1567 = vmatpush.msra.mxu0 0.0
      %1568 = vmatpush.msra.mxu0 0.0
      %1569 = vmatpush.msra.mxu0 0.0
      %1570 = vmatpush.msra.mxu0 0.0
      %1571 = vmatpush.msra.mxu0 0.0
      %1572 = vmatpush.msra.mxu0 0.0
      %1573 = vmatpush.msra.mxu0 0.0
      %1574 = vmatpush.msra.mxu0 0.0
      %1575 = vmatpush.msra.mxu0 0.0
      %1576 = vmatpush.msra.mxu0 0.0
      %1577 = vmatpush.msra.mxu0 0.0
      %1578 = vmatpush.msra.mxu0 0.0
      %1579 = vmatpush.msra.mxu0 0.0
      %1580 = vmatpush.msra.mxu0 0.0
      %1581 = vmatpush.msra.mxu0 0.0
      %1582 = vmatpush.msra.mxu0 %v1522
      %1583 = vmatmul.f32.gmra.mxu0 %v1513
      %v1584 = vpop.f32.mrf.mxu0
      %v1585 = vadd.f32 0.0, %v1584
      %1586 = vdwg.mxu0
      %1587 = vmatpush.msra.mxu0 0.0
      %1588 = vmatpush.msra.mxu0 0.0
      %1589 = vmatpush.msra.mxu0 0.0
      %1590 = vmatpush.msra.mxu0 0.0
      %1591 = vmatpush.msra.mxu0 0.0
      %1592 = vmatpush.msra.mxu0 0.0
      %1593 = vmatpush.msra.mxu0 0.0
      %1594 = vmatpush.msra.mxu0 0.0
      %1595 = vmatpush.msra.mxu0 0.0
      %1596 = vmatpush.msra.mxu0 0.0
      %1597 = vmatpush.msra.mxu0 0.0
      %1598 = vmatpush.msra.mxu0 0.0
      %1599 = vmatpush.msra.mxu0 0.0
      %1600 = vmatpush.msra.mxu0 0.0
      %1601 = vmatpush.msra.mxu0 0.0
      %1602 = vmatpush.msra.mxu0 %v1525
      %1603 = vmatmul.f32.gmra.mxu0 %v1513
      %v1604 = vpop.f32.mrf.mxu0
      %v1605 = vadd.f32 0.0, %v1604
      %1606 = vdwg.mxu0
      %v1607 = vadd.f32 %v1465, %v1545
      %v1608 = vadd.f32 %v1466, %v1565
      %v1609 = vadd.f32 %v1467, %v1585
      %v1610 = vadd.f32 %v1468, %v1605
      %1611 = vst [vmem:[#allocation1] ss:$2 sm:$0xff] %v253
      %v1612 = vld.sshfl [vmem:[#allocation1 + $0x8] sm:$0xff pattern:$0x75316420]
      %1613 = vrot.lane.b32.xlu0 %v1612, 55
      %v1614 = vpop.permute.xlu0 %1613
      %1616 = vst [vmem:[#allocation1] ss:$2 sm:$0xff] %v252
      %s1617 = scalar_lea.vmem [#allocation1], 16
      %1618 = vst [vmem:[%s1617] ss:$2 sm:$0xff] %v253
      %v1619 = vld.sshfl [vmem:[#allocation1] sm:$0xff pattern:$0x75316420]
      %v1620 = vld.sshfl [vmem:[#allocation1 + $0x8] sm:$0xff pattern:$0x75316420]
      %v1621 = vld.sshfl [vmem:[#allocation1 + $0x10] sm:$0xff pattern:$0x75316420]
      %v1622 = vld.sshfl [vmem:[#allocation1 + $0x18] sm:$0xff pattern:$0x75316420]
      %1623 = vrot.lane.b32.xlu0 %v1619, 55
      %v1624 = vpop.permute.xlu0 %1623
      %1625 = vrot.lane.b32.xlu0 %v1620, 55
      %v1626 = vpop.permute.xlu0 %1625
      %1627 = vrot.lane.b32.xlu0 %v1621, 55
      %v1628 = vpop.permute.xlu0 %1627
      %1629 = vrot.lane.b32.xlu0 %v1622, 55
      %v1630 = vpop.permute.xlu0 %1629
      %vm1631 = vcmask 449536
      %v1632 = vsel %vm1631, %v1624, %v1626
      %v1633 = vsel %vm1631, %v1626, %v1628
      %v1634 = vsel %vm1631, %v1628, %v1630
      %v1639 = vsel %vm1631, %v1614, %v1624
      %vm1640 = vmand %vm1348, %vm452
      %vm1641 = vmand %vm1349, %vm453
      %vm1642 = vmand %vm1350, %vm454
      %vm1643 = vmand %vm1351, %vm455
      %v1644 = vsel %vm1640, 1, 0
      %v1645 = vsel %vm1641, 1, 0
      %v1646 = vsel %vm1642, 1, 0
      %v1647 = vsel %vm1643, 1, 0
      %vm1648 = vcmp.eq.s32.totalorder %v1644, 1
      %vm1649 = vcmp.eq.s32.totalorder %v1645, 1
      %vm1650 = vcmp.eq.s32.totalorder %v1646, 1
      %vm1651 = vcmp.eq.s32.totalorder %v1647, 1
      %v1652 = vsel %vm1648, %v1639, %v430
      %v1653 = vsel %vm1649, %v1632, %v430
      %v1654 = vsel %vm1650, %v1633, %v430
      %v1655 = vsel %vm1651, %v1634, %v430
      %s1656 = scalar_lea.vmem %s2, 64
      %v1657 = vld [vmem:[%s1656] sm:$0xff]
      %v1659 = vsel %vm270, %v1657, 0
      %v1662 = vsel %vm274, %v1652, 0
      %v1665 = vsel %vm274, %v1653, 0
      %v1668 = vsel %vm274, %v1654, 0
      %v1671 = vsel %vm274, %v1655, 0
      %1673 = vmatpush.msra.mxu0 0.0
      %1674 = vmatpush.msra.mxu0 0.0
      %1675 = vmatpush.msra.mxu0 0.0
      %1676 = vmatpush.msra.mxu0 0.0
      %1677 = vmatpush.msra.mxu0 0.0
      %1678 = vmatpush.msra.mxu0 0.0
      %1679 = vmatpush.msra.mxu0 0.0
      %1680 = vmatpush.msra.mxu0 0.0
      %1681 = vmatpush.msra.mxu0 0.0
      %1682 = vmatpush.msra.mxu0 0.0
      %1683 = vmatpush.msra.mxu0 0.0
      %1684 = vmatpush.msra.mxu0 0.0
      %1685 = vmatpush.msra.mxu0 0.0
      %1686 = vmatpush.msra.mxu0 0.0
      %1687 = vmatpush.msra.mxu0 0.0
      %1688 = vmatpush.msra.mxu0 %v1662
      %1689 = vmatmul.f32.gmra.mxu0 %v1659
      %v1690 = vpop.f32.mrf.mxu0
      %v1691 = vadd.f32 0.0, %v1690
      %1692 = vdwg.mxu0
      %1693 = vmatpush.msra.mxu0 0.0
      %1694 = vmatpush.msra.mxu0 0.0
      %1695 = vmatpush.msra.mxu0 0.0
      %1696 = vmatpush.msra.mxu0 0.0
      %1697 = vmatpush.msra.mxu0 0.0
      %1698 = vmatpush.msra.mxu0 0.0
      %1699 = vmatpush.msra.mxu0 0.0
      %1700 = vmatpush.msra.mxu0 0.0
      %1701 = vmatpush.msra.mxu0 0.0
      %1702 = vmatpush.msra.mxu0 0.0
      %1703 = vmatpush.msra.mxu0 0.0
      %1704 = vmatpush.msra.mxu0 0.0
      %1705 = vmatpush.msra.mxu0 0.0
      %1706 = vmatpush.msra.mxu0 0.0
      %1707 = vmatpush.msra.mxu0 0.0
      %1708 = vmatpush.msra.mxu0 %v1665
      %1709 = vmatmul.f32.gmra.mxu0 %v1659
      %v1710 = vpop.f32.mrf.mxu0
      %v1711 = vadd.f32 0.0, %v1710
      %1712 = vdwg.mxu0
      %1713 = vmatpush.msra.mxu0 0.0
      %1714 = vmatpush.msra.mxu0 0.0
      %1715 = vmatpush.msra.mxu0 0.0
      %1716 = vmatpush.msra.mxu0 0.0
      %1717 = vmatpush.msra.mxu0 0.0
      %1718 = vmatpush.msra.mxu0 0.0
      %1719 = vmatpush.msra.mxu0 0.0
      %1720 = vmatpush.msra.mxu0 0.0
      %1721 = vmatpush.msra.mxu0 0.0
      %1722 = vmatpush.msra.mxu0 0.0
      %1723 = vmatpush.msra.mxu0 0.0
      %1724 = vmatpush.msra.mxu0 0.0
      %1725 = vmatpush.msra.mxu0 0.0
      %1726 = vmatpush.msra.mxu0 0.0
      %1727 = vmatpush.msra.mxu0 0.0
      %1728 = vmatpush.msra.mxu0 %v1668
      %1729 = vmatmul.f32.gmra.mxu0 %v1659
      %v1730 = vpop.f32.mrf.mxu0
      %v1731 = vadd.f32 0.0, %v1730
      %1732 = vdwg.mxu0
      %1733 = vmatpush.msra.mxu0 0.0
      %1734 = vmatpush.msra.mxu0 0.0
      %1735 = vmatpush.msra.mxu0 0.0
      %1736 = vmatpush.msra.mxu0 0.0
      %1737 = vmatpush.msra.mxu0 0.0
      %1738 = vmatpush.msra.mxu0 0.0
      %1739 = vmatpush.msra.mxu0 0.0
      %1740 = vmatpush.msra.mxu0 0.0
      %1741 = vmatpush.msra.mxu0 0.0
      %1742 = vmatpush.msra.mxu0 0.0
      %1743 = vmatpush.msra.mxu0 0.0
      %1744 = vmatpush.msra.mxu0 0.0
      %1745 = vmatpush.msra.mxu0 0.0
      %1746 = vmatpush.msra.mxu0 0.0
      %1747 = vmatpush.msra.mxu0 0.0
      %1748 = vmatpush.msra.mxu0 %v1671
      %1749 = vmatmul.f32.gmra.mxu0 %v1659
      %v1750 = vpop.f32.mrf.mxu0
      %v1751 = vadd.f32 0.0, %v1750
      %1752 = vdwg.mxu0
      %v1753 = vadd.f32 %v1607, %v1691
      %v1754 = vadd.f32 %v1608, %v1711
      %v1755 = vadd.f32 %v1609, %v1731
      %v1756 = vadd.f32 %v1610, %v1751
      %1757 = vst [vmem:[#allocation1] ss:$2 sm:$0xff] %v253
      %v1758 = vld.sshfl [vmem:[#allocation1 + $0x8] sm:$0xff pattern:$0x75316420]
      %1759 = vrot.lane.b32.xlu0 %v1758, 9
      %v1760 = vpop.permute.xlu0 %1759
      %1762 = vst [vmem:[#allocation1] ss:$2 sm:$0xff] %v252
      %s1763 = scalar_lea.vmem [#allocation1], 16
      %1764 = vst [vmem:[%s1763] ss:$2 sm:$0xff] %v253
      %v1765 = vld.sshfl [vmem:[#allocation1] sm:$0xff pattern:$0x75316420]
      %v1766 = vld.sshfl [vmem:[#allocation1 + $0x8] sm:$0xff pattern:$0x75316420]
      %v1767 = vld.sshfl [vmem:[#allocation1 + $0x10] sm:$0xff pattern:$0x75316420]
      %v1768 = vld.sshfl [vmem:[#allocation1 + $0x18] sm:$0xff pattern:$0x75316420]
      %1769 = vrot.lane.b32.xlu0 %v1765, 9
      %v1770 = vpop.permute.xlu0 %1769
      %1771 = vrot.lane.b32.xlu0 %v1766, 9
      %v1772 = vpop.permute.xlu0 %1771
      %1773 = vrot.lane.b32.xlu0 %v1767, 9
      %v1774 = vpop.permute.xlu0 %1773
      %1775 = vrot.lane.b32.xlu0 %v1768, 9
      %v1776 = vpop.permute.xlu0 %1775
      %vm1777 = vcmask 72704
      %v1778 = vsel %vm1777, %v1770, %v1772
      %v1779 = vsel %vm1777, %v1772, %v1774
      %v1780 = vsel %vm1777, %v1774, %v1776
      %v1785 = vsel %vm1777, %v1760, %v1770
      %vm1786 = vmand %vm440, %vm448
      %vm1787 = vmand %vm441, %vm449
      %vm1788 = vmand %vm442, %vm450
      %vm1789 = vmand %vm443, %vm451
      %v1790 = vsel %vm1786, 1, 0
      %v1791 = vsel %vm1787, 1, 0
      %v1792 = vsel %vm1788, 1, 0
      %v1793 = vsel %vm1789, 1, 0
      %vm1794 = vcmp.eq.s32.totalorder %v1790, 1
      %vm1795 = vcmp.eq.s32.totalorder %v1791, 1
      %vm1796 = vcmp.eq.s32.totalorder %v1792, 1
      %vm1797 = vcmp.eq.s32.totalorder %v1793, 1
      %v1798 = vsel %vm1794, %v1785, %v430
      %v1799 = vsel %vm1795, %v1778, %v430
      %v1800 = vsel %vm1796, %v1779, %v430
      %v1801 = vsel %vm1797, %v1780, %v430
      %s1802 = scalar_lea.vmem %s2, 72
      %v1803 = vld [vmem:[%s1802] sm:$0xff]
      %v1805 = vsel %vm270, %v1803, 0
      %v1808 = vsel %vm274, %v1798, 0
      %v1811 = vsel %vm274, %v1799, 0
      %v1814 = vsel %vm274, %v1800, 0
      %v1817 = vsel %vm274, %v1801, 0
      %1819 = vmatpush.msra.mxu0 0.0
      %1820 = vmatpush.msra.mxu0 0.0
      %1821 = vmatpush.msra.mxu0 0.0
      %1822 = vmatpush.msra.mxu0 0.0
      %1823 = vmatpush.msra.mxu0 0.0
      %1824 = vmatpush.msra.mxu0 0.0
      %1825 = vmatpush.msra.mxu0 0.0
      %1826 = vmatpush.msra.mxu0 0.0
      %1827 = vmatpush.msra.mxu0 0.0
      %1828 = vmatpush.msra.mxu0 0.0
      %1829 = vmatpush.msra.mxu0 0.0
      %1830 = vmatpush.msra.mxu0 0.0
      %1831 = vmatpush.msra.mxu0 0.0
      %1832 = vmatpush.msra.mxu0 0.0
      %1833 = vmatpush.msra.mxu0 0.0
      %1834 = vmatpush.msra.mxu0 %v1808
      %1835 = vmatmul.f32.gmra.mxu0 %v1805
      %v1836 = vpop.f32.mrf.mxu0
      %v1837 = vadd.f32 0.0, %v1836
      %1838 = vdwg.mxu0
      %1839 = vmatpush.msra.mxu0 0.0
      %1840 = vmatpush.msra.mxu0 0.0
      %1841 = vmatpush.msra.mxu0 0.0
      %1842 = vmatpush.msra.mxu0 0.0
      %1843 = vmatpush.msra.mxu0 0.0
      %1844 = vmatpush.msra.mxu0 0.0
      %1845 = vmatpush.msra.mxu0 0.0
      %1846 = vmatpush.msra.mxu0 0.0
      %1847 = vmatpush.msra.mxu0 0.0
      %1848 = vmatpush.msra.mxu0 0.0
      %1849 = vmatpush.msra.mxu0 0.0
      %1850 = vmatpush.msra.mxu0 0.0
      %1851 = vmatpush.msra.mxu0 0.0
      %1852 = vmatpush.msra.mxu0 0.0
      %1853 = vmatpush.msra.mxu0 0.0
      %1854 = vmatpush.msra.mxu0 %v1811
      %1855 = vmatmul.f32.gmra.mxu0 %v1805
      %v1856 = vpop.f32.mrf.mxu0
      %v1857 = vadd.f32 0.0, %v1856
      %1858 = vdwg.mxu0
      %1859 = vmatpush.msra.mxu0 0.0
      %1860 = vmatpush.msra.mxu0 0.0
      %1861 = vmatpush.msra.mxu0 0.0
      %1862 = vmatpush.msra.mxu0 0.0
      %1863 = vmatpush.msra.mxu0 0.0
      %1864 = vmatpush.msra.mxu0 0.0
      %1865 = vmatpush.msra.mxu0 0.0
      %1866 = vmatpush.msra.mxu0 0.0
      %1867 = vmatpush.msra.mxu0 0.0
      %1868 = vmatpush.msra.mxu0 0.0
      %1869 = vmatpush.msra.mxu0 0.0
      %1870 = vmatpush.msra.mxu0 0.0
      %1871 = vmatpush.msra.mxu0 0.0
      %1872 = vmatpush.msra.mxu0 0.0
      %1873 = vmatpush.msra.mxu0 0.0
      %1874 = vmatpush.msra.mxu0 %v1814
      %1875 = vmatmul.f32.gmra.mxu0 %v1805
      %v1876 = vpop.f32.mrf.mxu0
      %v1877 = vadd.f32 0.0, %v1876
      %1878 = vdwg.mxu0
      %1879 = vmatpush.msra.mxu0 0.0
      %1880 = vmatpush.msra.mxu0 0.0
      %1881 = vmatpush.msra.mxu0 0.0
      %1882 = vmatpush.msra.mxu0 0.0
      %1883 = vmatpush.msra.mxu0 0.0
      %1884 = vmatpush.msra.mxu0 0.0
      %1885 = vmatpush.msra.mxu0 0.0
      %1886 = vmatpush.msra.mxu0 0.0
      %1887 = vmatpush.msra.mxu0 0.0
      %1888 = vmatpush.msra.mxu0 0.0
      %1889 = vmatpush.msra.mxu0 0.0
      %1890 = vmatpush.msra.mxu0 0.0
      %1891 = vmatpush.msra.mxu0 0.0
      %1892 = vmatpush.msra.mxu0 0.0
      %1893 = vmatpush.msra.mxu0 0.0
      %1894 = vmatpush.msra.mxu0 %v1817
      %1895 = vmatmul.f32.gmra.mxu0 %v1805
      %v1896 = vpop.f32.mrf.mxu0
      %v1897 = vadd.f32 0.0, %v1896
      %1898 = vdwg.mxu0
      %v1899 = vadd.f32 %v1753, %v1837
      %v1900 = vadd.f32 %v1754, %v1857
      %v1901 = vadd.f32 %v1755, %v1877
      %v1902 = vadd.f32 %v1756, %v1897
      %1903 = vst [vmem:[#allocation1] ss:$2 sm:$0xff] %v253
      %v1904 = vld.sshfl [vmem:[#allocation1 + $0x8] sm:$0xff pattern:$0x75316420]
      %1905 = vrot.lane.b32.xlu0 %v1904, 8
      %v1906 = vpop.permute.xlu0 %1905
      %1908 = vst [vmem:[#allocation1] ss:$2 sm:$0xff] %v252
      %s1909 = scalar_lea.vmem [#allocation1], 16
      %1910 = vst [vmem:[%s1909] ss:$2 sm:$0xff] %v253
      %v1911 = vld.sshfl [vmem:[#allocation1] sm:$0xff pattern:$0x75316420]
      %v1912 = vld.sshfl [vmem:[#allocation1 + $0x8] sm:$0xff pattern:$0x75316420]
      %v1913 = vld.sshfl [vmem:[#allocation1 + $0x10] sm:$0xff pattern:$0x75316420]
      %v1914 = vld.sshfl [vmem:[#allocation1 + $0x18] sm:$0xff pattern:$0x75316420]
      %1915 = vrot.lane.b32.xlu0 %v1911, 8
      %v1916 = vpop.permute.xlu0 %1915
      %1917 = vrot.lane.b32.xlu0 %v1912, 8
      %v1918 = vpop.permute.xlu0 %1917
      %1919 = vrot.lane.b32.xlu0 %v1913, 8
      %v1920 = vpop.permute.xlu0 %1919
      %1921 = vrot.lane.b32.xlu0 %v1914, 8
      %v1922 = vpop.permute.xlu0 %1921
      %vm1923 = vcmask 64512
      %v1924 = vsel %vm1923, %v1916, %v1918
      %v1925 = vsel %vm1923, %v1918, %v1920
      %v1926 = vsel %vm1923, %v1920, %v1922
      %v1931 = vsel %vm1923, %v1906, %v1916
      %v1932 = vsel %vm440, 1, 0
      %v1933 = vsel %vm441, 1, 0
      %v1934 = vsel %vm442, 1, 0
      %v1935 = vsel %vm443, 1, 0
      %vm1936 = vcmp.eq.s32.totalorder %v1932, 1
      %vm1937 = vcmp.eq.s32.totalorder %v1933, 1
      %vm1938 = vcmp.eq.s32.totalorder %v1934, 1
      %vm1939 = vcmp.eq.s32.totalorder %v1935, 1
      %v1940 = vsel %vm1936, %v1931, %v430
      %v1941 = vsel %vm1937, %v1924, %v430
      %v1942 = vsel %vm1938, %v1925, %v430
      %v1943 = vsel %vm1939, %v1926, %v430
      %s1944 = scalar_lea.vmem %s2, 80
      %v1945 = vld [vmem:[%s1944] sm:$0xff]
      %v1947 = vsel %vm270, %v1945, 0
      %v1950 = vsel %vm274, %v1940, 0
      %v1953 = vsel %vm274, %v1941, 0
      %v1956 = vsel %vm274, %v1942, 0
      %v1959 = vsel %vm274, %v1943, 0
      %1961 = vmatpush.msra.mxu0 0.0
      %1962 = vmatpush.msra.mxu0 0.0
      %1963 = vmatpush.msra.mxu0 0.0
      %1964 = vmatpush.msra.mxu0 0.0
      %1965 = vmatpush.msra.mxu0 0.0
      %1966 = vmatpush.msra.mxu0 0.0
      %1967 = vmatpush.msra.mxu0 0.0
      %1968 = vmatpush.msra.mxu0 0.0
      %1969 = vmatpush.msra.mxu0 0.0
      %1970 = vmatpush.msra.mxu0 0.0
      %1971 = vmatpush.msra.mxu0 0.0
      %1972 = vmatpush.msra.mxu0 0.0
      %1973 = vmatpush.msra.mxu0 0.0
      %1974 = vmatpush.msra.mxu0 0.0
      %1975 = vmatpush.msra.mxu0 0.0
      %1976 = vmatpush.msra.mxu0 %v1950
      %1977 = vmatmul.f32.gmra.mxu0 %v1947
      %v1978 = vpop.f32.mrf.mxu0
      %v1979 = vadd.f32 0.0, %v1978
      %1980 = vdwg.mxu0
      %1981 = vmatpush.msra.mxu0 0.0
      %1982 = vmatpush.msra.mxu0 0.0
      %1983 = vmatpush.msra.mxu0 0.0
      %1984 = vmatpush.msra.mxu0 0.0
      %1985 = vmatpush.msra.mxu0 0.0
      %1986 = vmatpush.msra.mxu0 0.0
      %1987 = vmatpush.msra.mxu0 0.0
      %1988 = vmatpush.msra.mxu0 0.0
      %1989 = vmatpush.msra.mxu0 0.0
      %1990 = vmatpush.msra.mxu0 0.0
      %1991 = vmatpush.msra.mxu0 0.0
      %1992 = vmatpush.msra.mxu0 0.0
      %1993 = vmatpush.msra.mxu0 0.0
      %1994 = vmatpush.msra.mxu0 0.0
      %1995 = vmatpush.msra.mxu0 0.0
      %1996 = vmatpush.msra.mxu0 %v1953
      %1997 = vmatmul.f32.gmra.mxu0 %v1947
      %v1998 = vpop.f32.mrf.mxu0
      %v1999 = vadd.f32 0.0, %v1998
      %2000 = vdwg.mxu0
      %2001 = vmatpush.msra.mxu0 0.0
      %2002 = vmatpush.msra.mxu0 0.0
      %2003 = vmatpush.msra.mxu0 0.0
      %2004 = vmatpush.msra.mxu0 0.0
      %2005 = vmatpush.msra.mxu0 0.0
      %2006 = vmatpush.msra.mxu0 0.0
      %2007 = vmatpush.msra.mxu0 0.0
      %2008 = vmatpush.msra.mxu0 0.0
      %2009 = vmatpush.msra.mxu0 0.0
      %2010 = vmatpush.msra.mxu0 0.0
      %2011 = vmatpush.msra.mxu0 0.0
      %2012 = vmatpush.msra.mxu0 0.0
      %2013 = vmatpush.msra.mxu0 0.0
      %2014 = vmatpush.msra.mxu0 0.0
      %2015 = vmatpush.msra.mxu0 0.0
      %2016 = vmatpush.msra.mxu0 %v1956
      %2017 = vmatmul.f32.gmra.mxu0 %v1947
      %v2018 = vpop.f32.mrf.mxu0
      %v2019 = vadd.f32 0.0, %v2018
      %2020 = vdwg.mxu0
      %2021 = vmatpush.msra.mxu0 0.0
      %2022 = vmatpush.msra.mxu0 0.0
      %2023 = vmatpush.msra.mxu0 0.0
      %2024 = vmatpush.msra.mxu0 0.0
      %2025 = vmatpush.msra.mxu0 0.0
      %2026 = vmatpush.msra.mxu0 0.0
      %2027 = vmatpush.msra.mxu0 0.0
      %2028 = vmatpush.msra.mxu0 0.0
      %2029 = vmatpush.msra.mxu0 0.0
      %2030 = vmatpush.msra.mxu0 0.0
      %2031 = vmatpush.msra.mxu0 0.0
      %2032 = vmatpush.msra.mxu0 0.0
      %2033 = vmatpush.msra.mxu0 0.0
      %2034 = vmatpush.msra.mxu0 0.0
      %2035 = vmatpush.msra.mxu0 0.0
      %2036 = vmatpush.msra.mxu0 %v1959
      %2037 = vmatmul.f32.gmra.mxu0 %v1947
      %v2038 = vpop.f32.mrf.mxu0
      %v2039 = vadd.f32 0.0, %v2038
      %2040 = vdwg.mxu0
      %v2041 = vadd.f32 %v1899, %v1979
      %v2042 = vadd.f32 %v1900, %v1999
      %v2043 = vadd.f32 %v1901, %v2019
      %v2044 = vadd.f32 %v1902, %v2039
      %2045 = vst [vmem:[#allocation1] ss:$2 sm:$0xff] %v253
      %v2046 = vld.sshfl [vmem:[#allocation1 + $0x8] sm:$0xff pattern:$0x75316420]
      %2047 = vrot.lane.b32.xlu0 %v2046, 7
      %v2048 = vpop.permute.xlu0 %2047
      %2050 = vst [vmem:[#allocation1] ss:$2 sm:$0xff] %v252
      %s2051 = scalar_lea.vmem [#allocation1], 16
      %2052 = vst [vmem:[%s2051] ss:$2 sm:$0xff] %v253
      %v2053 = vld.sshfl [vmem:[#allocation1] sm:$0xff pattern:$0x75316420]
      %v2054 = vld.sshfl [vmem:[#allocation1 + $0x8] sm:$0xff pattern:$0x75316420]
      %v2055 = vld.sshfl [vmem:[#allocation1 + $0x10] sm:$0xff pattern:$0x75316420]
      %v2056 = vld.sshfl [vmem:[#allocation1 + $0x18] sm:$0xff pattern:$0x75316420]
      %2057 = vrot.lane.b32.xlu0 %v2053, 7
      %v2058 = vpop.permute.xlu0 %2057
      %2059 = vrot.lane.b32.xlu0 %v2054, 7
      %v2060 = vpop.permute.xlu0 %2059
      %2061 = vrot.lane.b32.xlu0 %v2055, 7
      %v2062 = vpop.permute.xlu0 %2061
      %2063 = vrot.lane.b32.xlu0 %v2056, 7
      %v2064 = vpop.permute.xlu0 %2063
      %vm2065 = vcmask 56320
      %v2066 = vsel %vm2065, %v2058, %v2060
      %v2067 = vsel %vm2065, %v2060, %v2062
      %v2068 = vsel %vm2065, %v2062, %v2064
      %v2073 = vsel %vm2065, %v2048, %v2058
      %vm2074 = vmand %vm440, %vm452
      %vm2075 = vmand %vm441, %vm453
      %vm2076 = vmand %vm442, %vm454
      %vm2077 = vmand %vm443, %vm455
      %v2078 = vsel %vm2074, 1, 0
      %v2079 = vsel %vm2075, 1, 0
      %v2080 = vsel %vm2076, 1, 0
      %v2081 = vsel %vm2077, 1, 0
      %vm2082 = vcmp.eq.s32.totalorder %v2078, 1
      %vm2083 = vcmp.eq.s32.totalorder %v2079, 1
      %vm2084 = vcmp.eq.s32.totalorder %v2080, 1
      %vm2085 = vcmp.eq.s32.totalorder %v2081, 1
      %v2086 = vsel %vm2082, %v2073, %v430
      %v2087 = vsel %vm2083, %v2066, %v430
      %v2088 = vsel %vm2084, %v2067, %v430
      %v2089 = vsel %vm2085, %v2068, %v430
      %s2090 = scalar_lea.vmem %s2, 88
      %v2091 = vld [vmem:[%s2090] sm:$0xff]
      %v2093 = vsel %vm270, %v2091, 0
      %v2096 = vsel %vm274, %v2086, 0
      %v2099 = vsel %vm274, %v2087, 0
      %v2102 = vsel %vm274, %v2088, 0
      %v2105 = vsel %vm274, %v2089, 0
      %2107 = vmatpush.msra.mxu0 0.0
      %2108 = vmatpush.msra.mxu0 0.0
      %2109 = vmatpush.msra.mxu0 0.0
      %2110 = vmatpush.msra.mxu0 0.0
      %2111 = vmatpush.msra.mxu0 0.0
      %2112 = vmatpush.msra.mxu0 0.0
      %2113 = vmatpush.msra.mxu0 0.0
      %2114 = vmatpush.msra.mxu0 0.0
      %2115 = vmatpush.msra.mxu0 0.0
      %2116 = vmatpush.msra.mxu0 0.0
      %2117 = vmatpush.msra.mxu0 0.0
      %2118 = vmatpush.msra.mxu0 0.0
      %2119 = vmatpush.msra.mxu0 0.0
      %2120 = vmatpush.msra.mxu0 0.0
      %2121 = vmatpush.msra.mxu0 0.0
      %2122 = vmatpush.msra.mxu0 %v2096
      %2123 = vmatmul.f32.gmra.mxu0 %v2093
      %v2124 = vpop.f32.mrf.mxu0
      %v2125 = vadd.f32 0.0, %v2124
      %2126 = vdwg.mxu0
      %2127 = vmatpush.msra.mxu0 0.0
      %2128 = vmatpush.msra.mxu0 0.0
      %2129 = vmatpush.msra.mxu0 0.0
      %2130 = vmatpush.msra.mxu0 0.0
      %2131 = vmatpush.msra.mxu0 0.0
      %2132 = vmatpush.msra.mxu0 0.0
      %2133 = vmatpush.msra.mxu0 0.0
      %2134 = vmatpush.msra.mxu0 0.0
      %2135 = vmatpush.msra.mxu0 0.0
      %2136 = vmatpush.msra.mxu0 0.0
      %2137 = vmatpush.msra.mxu0 0.0
      %2138 = vmatpush.msra.mxu0 0.0
      %2139 = vmatpush.msra.mxu0 0.0
      %2140 = vmatpush.msra.mxu0 0.0
      %2141 = vmatpush.msra.mxu0 0.0
      %2142 = vmatpush.msra.mxu0 %v2099
      %2143 = vmatmul.f32.gmra.mxu0 %v2093
      %v2144 = vpop.f32.mrf.mxu0
      %v2145 = vadd.f32 0.0, %v2144
      %2146 = vdwg.mxu0
      %2147 = vmatpush.msra.mxu0 0.0
      %2148 = vmatpush.msra.mxu0 0.0
      %2149 = vmatpush.msra.mxu0 0.0
      %2150 = vmatpush.msra.mxu0 0.0
      %2151 = vmatpush.msra.mxu0 0.0
      %2152 = vmatpush.msra.mxu0 0.0
      %2153 = vmatpush.msra.mxu0 0.0
      %2154 = vmatpush.msra.mxu0 0.0
      %2155 = vmatpush.msra.mxu0 0.0
      %2156 = vmatpush.msra.mxu0 0.0
      %2157 = vmatpush.msra.mxu0 0.0
      %2158 = vmatpush.msra.mxu0 0.0
      %2159 = vmatpush.msra.mxu0 0.0
      %2160 = vmatpush.msra.mxu0 0.0
      %2161 = vmatpush.msra.mxu0 0.0
      %2162 = vmatpush.msra.mxu0 %v2102
      %2163 = vmatmul.f32.gmra.mxu0 %v2093
      %v2164 = vpop.f32.mrf.mxu0
      %v2165 = vadd.f32 0.0, %v2164
      %2166 = vdwg.mxu0
      %2167 = vmatpush.msra.mxu0 0.0
      %2168 = vmatpush.msra.mxu0 0.0
      %2169 = vmatpush.msra.mxu0 0.0
      %2170 = vmatpush.msra.mxu0 0.0
      %2171 = vmatpush.msra.mxu0 0.0
      %2172 = vmatpush.msra.mxu0 0.0
      %2173 = vmatpush.msra.mxu0 0.0
      %2174 = vmatpush.msra.mxu0 0.0
      %2175 = vmatpush.msra.mxu0 0.0
      %2176 = vmatpush.msra.mxu0 0.0
      %2177 = vmatpush.msra.mxu0 0.0
      %2178 = vmatpush.msra.mxu0 0.0
      %2179 = vmatpush.msra.mxu0 0.0
      %2180 = vmatpush.msra.mxu0 0.0
      %2181 = vmatpush.msra.mxu0 0.0
      %2182 = vmatpush.msra.mxu0 %v2105
      %2183 = vmatmul.f32.gmra.mxu0 %v2093
      %v2184 = vpop.f32.mrf.mxu0
      %v2185 = vadd.f32 0.0, %v2184
      %2186 = vdwg.mxu0
      %v2187 = vadd.f32 %v2041, %v2125
      %v2188 = vadd.f32 %v2042, %v2145
      %v2189 = vadd.f32 %v2043, %v2165
      %v2190 = vadd.f32 %v2044, %v2185
      %2191 = vst [vmem:[#allocation1] ss:$2 sm:$0xff] %v253
      %v2192 = vld.sshfl [vmem:[#allocation1 + $0x8] sm:$0xff pattern:$0x75316420]
      %2193 = vrot.lane.b32.xlu0 %v2192, 1
      %v2194 = vpop.permute.xlu0 %2193
      %2196 = vst [vmem:[#allocation1] ss:$2 sm:$0xff] %v252
      %s2197 = scalar_lea.vmem [#allocation1], 16
      %2198 = vst [vmem:[%s2197] ss:$2 sm:$0xff] %v253
      %v2199 = vld.sshfl [vmem:[#allocation1] sm:$0xff pattern:$0x75316420]
      %v2200 = vld.sshfl [vmem:[#allocation1 + $0x8] sm:$0xff pattern:$0x75316420]
      %v2201 = vld.sshfl [vmem:[#allocation1 + $0x10] sm:$0xff pattern:$0x75316420]
      %v2202 = vld.sshfl [vmem:[#allocation1 + $0x18] sm:$0xff pattern:$0x75316420]
      %2203 = vrot.lane.b32.xlu0 %v2199, 1
      %v2204 = vpop.permute.xlu0 %2203
      %2205 = vrot.lane.b32.xlu0 %v2200, 1
      %v2206 = vpop.permute.xlu0 %2205
      %2207 = vrot.lane.b32.xlu0 %v2201, 1
      %v2208 = vpop.permute.xlu0 %2207
      %2209 = vrot.lane.b32.xlu0 %v2202, 1
      %v2210 = vpop.permute.xlu0 %2209
      %vm2211 = vcmask 7168
      %v2212 = vsel %vm2211, %v2204, %v2206
      %v2213 = vsel %vm2211, %v2206, %v2208
      %v2214 = vsel %vm2211, %v2208, %v2210
      %v2219 = vsel %vm2211, %v2194, %v2204
      %v2220 = vsel %vm448, 1, 0
      %v2221 = vsel %vm449, 1, 0
      %v2222 = vsel %vm450, 1, 0
      %v2223 = vsel %vm451, 1, 0
      %vm2224 = vcmp.eq.s32.totalorder %v2220, 1
      %vm2225 = vcmp.eq.s32.totalorder %v2221, 1
      %vm2226 = vcmp.eq.s32.totalorder %v2222, 1
      %vm2227 = vcmp.eq.s32.totalorder %v2223, 1
      %v2228 = vsel %vm2224, %v2219, %v430
      %v2229 = vsel %vm2225, %v2212, %v430
      %v2230 = vsel %vm2226, %v2213, %v430
      %v2231 = vsel %vm2227, %v2214, %v430
      %s2232 = scalar_lea.vmem %s2, 96
      %v2233 = vld [vmem:[%s2232] sm:$0xff]
      %v2235 = vsel %vm270, %v2233, 0
      %v2238 = vsel %vm274, %v2228, 0
      %v2241 = vsel %vm274, %v2229, 0
      %v2244 = vsel %vm274, %v2230, 0
      %v2247 = vsel %vm274, %v2231, 0
      %2249 = vmatpush.msra.mxu0 0.0
      %2250 = vmatpush.msra.mxu0 0.0
      %2251 = vmatpush.msra.mxu0 0.0
      %2252 = vmatpush.msra.mxu0 0.0
      %2253 = vmatpush.msra.mxu0 0.0
      %2254 = vmatpush.msra.mxu0 0.0
      %2255 = vmatpush.msra.mxu0 0.0
      %2256 = vmatpush.msra.mxu0 0.0
      %2257 = vmatpush.msra.mxu0 0.0
      %2258 = vmatpush.msra.mxu0 0.0
      %2259 = vmatpush.msra.mxu0 0.0
      %2260 = vmatpush.msra.mxu0 0.0
      %2261 = vmatpush.msra.mxu0 0.0
      %2262 = vmatpush.msra.mxu0 0.0
      %2263 = vmatpush.msra.mxu0 0.0
      %2264 = vmatpush.msra.mxu0 %v2238
      %2265 = vmatmul.f32.gmra.mxu0 %v2235
      %v2266 = vpop.f32.mrf.mxu0
      %v2267 = vadd.f32 0.0, %v2266
      %2268 = vdwg.mxu0
      %2269 = vmatpush.msra.mxu0 0.0
      %2270 = vmatpush.msra.mxu0 0.0
      %2271 = vmatpush.msra.mxu0 0.0
      %2272 = vmatpush.msra.mxu0 0.0
      %2273 = vmatpush.msra.mxu0 0.0
      %2274 = vmatpush.msra.mxu0 0.0
      %2275 = vmatpush.msra.mxu0 0.0
      %2276 = vmatpush.msra.mxu0 0.0
      %2277 = vmatpush.msra.mxu0 0.0
      %2278 = vmatpush.msra.mxu0 0.0
      %2279 = vmatpush.msra.mxu0 0.0
      %2280 = vmatpush.msra.mxu0 0.0
      %2281 = vmatpush.msra.mxu0 0.0
      %2282 = vmatpush.msra.mxu0 0.0
      %2283 = vmatpush.msra.mxu0 0.0
      %2284 = vmatpush.msra.mxu0 %v2241
      %2285 = vmatmul.f32.gmra.mxu0 %v2235
      %v2286 = vpop.f32.mrf.mxu0
      %v2287 = vadd.f32 0.0, %v2286
      %2288 = vdwg.mxu0
      %2289 = vmatpush.msra.mxu0 0.0
      %2290 = vmatpush.msra.mxu0 0.0
      %2291 = vmatpush.msra.mxu0 0.0
      %2292 = vmatpush.msra.mxu0 0.0
      %2293 = vmatpush.msra.mxu0 0.0
      %2294 = vmatpush.msra.mxu0 0.0
      %2295 = vmatpush.msra.mxu0 0.0
      %2296 = vmatpush.msra.mxu0 0.0
      %2297 = vmatpush.msra.mxu0 0.0
      %2298 = vmatpush.msra.mxu0 0.0
      %2299 = vmatpush.msra.mxu0 0.0
      %2300 = vmatpush.msra.mxu0 0.0
      %2301 = vmatpush.msra.mxu0 0.0
      %2302 = vmatpush.msra.mxu0 0.0
      %2303 = vmatpush.msra.mxu0 0.0
      %2304 = vmatpush.msra.mxu0 %v2244
      %2305 = vmatmul.f32.gmra.mxu0 %v2235
      %v2306 = vpop.f32.mrf.mxu0
      %v2307 = vadd.f32 0.0, %v2306
      %2308 = vdwg.mxu0
      %2309 = vmatpush.msra.mxu0 0.0
      %2310 = vmatpush.msra.mxu0 0.0
      %2311 = vmatpush.msra.mxu0 0.0
      %2312 = vmatpush.msra.mxu0 0.0
      %2313 = vmatpush.msra.mxu0 0.0
      %2314 = vmatpush.msra.mxu0 0.0
      %2315 = vmatpush.msra.mxu0 0.0
      %2316 = vmatpush.msra.mxu0 0.0
      %2317 = vmatpush.msra.mxu0 0.0
      %2318 = vmatpush.msra.mxu0 0.0
      %2319 = vmatpush.msra.mxu0 0.0
      %2320 = vmatpush.msra.mxu0 0.0
      %2321 = vmatpush.msra.mxu0 0.0
      %2322 = vmatpush.msra.mxu0 0.0
      %2323 = vmatpush.msra.mxu0 0.0
      %2324 = vmatpush.msra.mxu0 %v2247
      %2325 = vmatmul.f32.gmra.mxu0 %v2235
      %v2326 = vpop.f32.mrf.mxu0
      %v2327 = vadd.f32 0.0, %v2326
      %2328 = vdwg.mxu0
      %v2329 = vadd.f32 %v2187, %v2267
      %v2330 = vadd.f32 %v2188, %v2287
      %v2331 = vadd.f32 %v2189, %v2307
      %v2332 = vadd.f32 %v2190, %v2327
      %s2333 = scalar_lea.vmem %s2, 104
      %v2334 = vld [vmem:[%s2333] sm:$0xff]
      %2335 = vst [vmem:[#allocation1] ss:$2 sm:$0xff] %v252
      %s2336 = scalar_lea.vmem [#allocation1], 16
      %2337 = vst [vmem:[%s2336] ss:$2 sm:$0xff] %v253
      %v2338 = vld.sshfl [vmem:[#allocation1] sm:$0xff pattern:$0x75316420]
      %v2339 = vld.sshfl [vmem:[#allocation1 + $0x8] sm:$0xff pattern:$0x75316420]
      %v2340 = vld.sshfl [vmem:[#allocation1 + $0x10] sm:$0xff pattern:$0x75316420]
      %v2341 = vld.sshfl [vmem:[#allocation1 + $0x18] sm:$0xff pattern:$0x75316420]
      %v2343 = vsel %vm270, %v2334, 0
      %v2345 = vsel %vm274, %v2338, 0
      %v2347 = vsel %vm274, %v2339, 0
      %v2349 = vsel %vm274, %v2340, 0
      %v2351 = vsel %vm274, %v2341, 0
      %2353 = vmatpush.msra.mxu0 0.0
      %2354 = vmatpush.msra.mxu0 0.0
      %2355 = vmatpush.msra.mxu0 0.0
      %2356 = vmatpush.msra.mxu0 0.0
      %2357 = vmatpush.msra.mxu0 0.0
      %2358 = vmatpush.msra.mxu0 0.0
      %2359 = vmatpush.msra.mxu0 0.0
      %2360 = vmatpush.msra.mxu0 0.0
      %2361 = vmatpush.msra.mxu0 0.0
      %2362 = vmatpush.msra.mxu0 0.0
      %2363 = vmatpush.msra.mxu0 0.0
      %2364 = vmatpush.msra.mxu0 0.0
      %2365 = vmatpush.msra.mxu0 0.0
      %2366 = vmatpush.msra.mxu0 0.0
      %2367 = vmatpush.msra.mxu0 0.0
      %2368 = vmatpush.msra.mxu0 %v2345
      %2369 = vmatmul.f32.gmra.mxu0 %v2343
      %v2370 = vpop.f32.mrf.mxu0
      %v2371 = vadd.f32 0.0, %v2370
      %2372 = vdwg.mxu0
      %2373 = vmatpush.msra.mxu0 0.0
      %2374 = vmatpush.msra.mxu0 0.0
      %2375 = vmatpush.msra.mxu0 0.0
      %2376 = vmatpush.msra.mxu0 0.0
      %2377 = vmatpush.msra.mxu0 0.0
      %2378 = vmatpush.msra.mxu0 0.0
      %2379 = vmatpush.msra.mxu0 0.0
      %2380 = vmatpush.msra.mxu0 0.0
      %2381 = vmatpush.msra.mxu0 0.0
      %2382 = vmatpush.msra.mxu0 0.0
      %2383 = vmatpush.msra.mxu0 0.0
      %2384 = vmatpush.msra.mxu0 0.0
      %2385 = vmatpush.msra.mxu0 0.0
      %2386 = vmatpush.msra.mxu0 0.0
      %2387 = vmatpush.msra.mxu0 0.0
      %2388 = vmatpush.msra.mxu0 %v2347
      %2389 = vmatmul.f32.gmra.mxu0 %v2343
      %v2390 = vpop.f32.mrf.mxu0
      %v2391 = vadd.f32 0.0, %v2390
      %2392 = vdwg.mxu0
      %2393 = vmatpush.msra.mxu0 0.0
      %2394 = vmatpush.msra.mxu0 0.0
      %2395 = vmatpush.msra.mxu0 0.0
      %2396 = vmatpush.msra.mxu0 0.0
      %2397 = vmatpush.msra.mxu0 0.0
      %2398 = vmatpush.msra.mxu0 0.0
      %2399 = vmatpush.msra.mxu0 0.0
      %2400 = vmatpush.msra.mxu0 0.0
      %2401 = vmatpush.msra.mxu0 0.0
      %2402 = vmatpush.msra.mxu0 0.0
      %2403 = vmatpush.msra.mxu0 0.0
      %2404 = vmatpush.msra.mxu0 0.0
      %2405 = vmatpush.msra.mxu0 0.0
      %2406 = vmatpush.msra.mxu0 0.0
      %2407 = vmatpush.msra.mxu0 0.0
      %2408 = vmatpush.msra.mxu0 %v2349
      %2409 = vmatmul.f32.gmra.mxu0 %v2343
      %v2410 = vpop.f32.mrf.mxu0
      %v2411 = vadd.f32 0.0, %v2410
      %2412 = vdwg.mxu0
      %2413 = vmatpush.msra.mxu0 0.0
      %2414 = vmatpush.msra.mxu0 0.0
      %2415 = vmatpush.msra.mxu0 0.0
      %2416 = vmatpush.msra.mxu0 0.0
      %2417 = vmatpush.msra.mxu0 0.0
      %2418 = vmatpush.msra.mxu0 0.0
      %2419 = vmatpush.msra.mxu0 0.0
      %2420 = vmatpush.msra.mxu0 0.0
      %2421 = vmatpush.msra.mxu0 0.0
      %2422 = vmatpush.msra.mxu0 0.0
      %2423 = vmatpush.msra.mxu0 0.0
      %2424 = vmatpush.msra.mxu0 0.0
      %2425 = vmatpush.msra.mxu0 0.0
      %2426 = vmatpush.msra.mxu0 0.0
      %2427 = vmatpush.msra.mxu0 0.0
      %2428 = vmatpush.msra.mxu0 %v2351
      %2429 = vmatmul.f32.gmra.mxu0 %v2343
      %v2430 = vpop.f32.mrf.mxu0
      %v2431 = vadd.f32 0.0, %v2430
      %2432 = vdwg.mxu0
      %v2433 = vadd.f32 %v2329, %v2371
      %v2434 = vadd.f32 %v2330, %v2391
      %v2435 = vadd.f32 %v2331, %v2411
      %v2436 = vadd.f32 %v2332, %v2431
      %2437 = vst [vmem:[#allocation1] ss:$2 sm:$0xff] %v252
      %s2438 = scalar_lea.vmem [#allocation1], 16
      %2439 = vst [vmem:[%s2438] ss:$2 sm:$0xff] %v253
      %v2440 = vld.sshfl [vmem:[#allocation1] sm:$0xff pattern:$0x75316420]
      %v2441 = vld.sshfl [vmem:[#allocation1 + $0x8] sm:$0xff pattern:$0x75316420]
      %v2442 = vld.sshfl [vmem:[#allocation1 + $0x10] sm:$0xff pattern:$0x75316420]
      %v2443 = vld.sshfl [vmem:[#allocation1 + $0x18] sm:$0xff pattern:$0x75316420]
      %2444 = vrot.lane.b32.xlu0 %v2440, 127
      %v2445 = vpop.permute.xlu0 %2444
      %2446 = vrot.lane.b32.xlu0 %v2441, 127
      %v2447 = vpop.permute.xlu0 %2446
      %2448 = vrot.lane.b32.xlu0 %v2442, 127
      %v2449 = vpop.permute.xlu0 %2448
      %2450 = vrot.lane.b32.xlu0 %v2443, 127
      %v2451 = vpop.permute.xlu0 %2450
      %vm2452 = vcmask 1039360
      %v2453 = vsel %vm2452, %v2445, %v2447
      %v2454 = vsel %vm2452, %v2447, %v2449
      %v2455 = vsel %vm2452, %v2449, %v2451
      %2460 = vst [vmem:[#allocation1] ss:$2 sm:$0xff] %v252
      %v2461 = vld.sshfl [vmem:[#allocation1] sm:$0xff pattern:$0x75316420]
      %2462 = vrot.lane.b32.xlu0 %v2461, 127
      %v2463 = vpop.permute.xlu0 %2462
      %v2465 = vsel %vm2452, %v2451, %v2463
      %v2466 = vsel %vm452, 1, 0
      %v2467 = vsel %vm453, 1, 0
      %v2468 = vsel %vm454, 1, 0
      %v2469 = vsel %vm455, 1, 0
      %vm2470 = vcmp.eq.s32.totalorder %v2466, 1
      %vm2471 = vcmp.eq.s32.totalorder %v2467, 1
      %vm2472 = vcmp.eq.s32.totalorder %v2468, 1
      %vm2473 = vcmp.eq.s32.totalorder %v2469, 1
      %v2474 = vsel %vm2470, %v2453, %v430
      %v2475 = vsel %vm2471, %v2454, %v430
      %v2476 = vsel %vm2472, %v2455, %v430
      %v2477 = vsel %vm2473, %v2465, %v430
      %s2478 = scalar_lea.vmem %s2, 112
      %v2479 = vld [vmem:[%s2478] sm:$0xff]
      %v2481 = vsel %vm270, %v2479, 0
      %v2484 = vsel %vm274, %v2474, 0
      %v2487 = vsel %vm274, %v2475, 0
      %v2490 = vsel %vm274, %v2476, 0
      %v2493 = vsel %vm274, %v2477, 0
      %2495 = vmatpush.msra.mxu0 0.0
      %2496 = vmatpush.msra.mxu0 0.0
      %2497 = vmatpush.msra.mxu0 0.0
      %2498 = vmatpush.msra.mxu0 0.0
      %2499 = vmatpush.msra.mxu0 0.0
      %2500 = vmatpush.msra.mxu0 0.0
      %2501 = vmatpush.msra.mxu0 0.0
      %2502 = vmatpush.msra.mxu0 0.0
      %2503 = vmatpush.msra.mxu0 0.0
      %2504 = vmatpush.msra.mxu0 0.0
      %2505 = vmatpush.msra.mxu0 0.0
      %2506 = vmatpush.msra.mxu0 0.0
      %2507 = vmatpush.msra.mxu0 0.0
      %2508 = vmatpush.msra.mxu0 0.0
      %2509 = vmatpush.msra.mxu0 0.0
      %2510 = vmatpush.msra.mxu0 %v2484
      %2511 = vmatmul.f32.gmra.mxu0 %v2481
      %v2512 = vpop.f32.mrf.mxu0
      %v2513 = vadd.f32 0.0, %v2512
      %2514 = vdwg.mxu0
      %2515 = vmatpush.msra.mxu0 0.0
      %2516 = vmatpush.msra.mxu0 0.0
      %2517 = vmatpush.msra.mxu0 0.0
      %2518 = vmatpush.msra.mxu0 0.0
      %2519 = vmatpush.msra.mxu0 0.0
      %2520 = vmatpush.msra.mxu0 0.0
      %2521 = vmatpush.msra.mxu0 0.0
      %2522 = vmatpush.msra.mxu0 0.0
      %2523 = vmatpush.msra.mxu0 0.0
      %2524 = vmatpush.msra.mxu0 0.0
      %2525 = vmatpush.msra.mxu0 0.0
      %2526 = vmatpush.msra.mxu0 0.0
      %2527 = vmatpush.msra.mxu0 0.0
      %2528 = vmatpush.msra.mxu0 0.0
      %2529 = vmatpush.msra.mxu0 0.0
      %2530 = vmatpush.msra.mxu0 %v2487
      %2531 = vmatmul.f32.gmra.mxu0 %v2481
      %v2532 = vpop.f32.mrf.mxu0
      %v2533 = vadd.f32 0.0, %v2532
      %2534 = vdwg.mxu0
      %2535 = vmatpush.msra.mxu0 0.0
      %2536 = vmatpush.msra.mxu0 0.0
      %2537 = vmatpush.msra.mxu0 0.0
      %2538 = vmatpush.msra.mxu0 0.0
      %2539 = vmatpush.msra.mxu0 0.0
      %2540 = vmatpush.msra.mxu0 0.0
      %2541 = vmatpush.msra.mxu0 0.0
      %2542 = vmatpush.msra.mxu0 0.0
      %2543 = vmatpush.msra.mxu0 0.0
      %2544 = vmatpush.msra.mxu0 0.0
      %2545 = vmatpush.msra.mxu0 0.0
      %2546 = vmatpush.msra.mxu0 0.0
      %2547 = vmatpush.msra.mxu0 0.0
      %2548 = vmatpush.msra.mxu0 0.0
      %2549 = vmatpush.msra.mxu0 0.0
      %2550 = vmatpush.msra.mxu0 %v2490
      %2551 = vmatmul.f32.gmra.mxu0 %v2481
      %v2552 = vpop.f32.mrf.mxu0
      %v2553 = vadd.f32 0.0, %v2552
      %2554 = vdwg.mxu0
      %2555 = vmatpush.msra.mxu0 0.0
      %2556 = vmatpush.msra.mxu0 0.0
      %2557 = vmatpush.msra.mxu0 0.0
      %2558 = vmatpush.msra.mxu0 0.0
      %2559 = vmatpush.msra.mxu0 0.0
      %2560 = vmatpush.msra.mxu0 0.0
      %2561 = vmatpush.msra.mxu0 0.0
      %2562 = vmatpush.msra.mxu0 0.0
      %2563 = vmatpush.msra.mxu0 0.0
      %2564 = vmatpush.msra.mxu0 0.0
      %2565 = vmatpush.msra.mxu0 0.0
      %2566 = vmatpush.msra.mxu0 0.0
      %2567 = vmatpush.msra.mxu0 0.0
      %2568 = vmatpush.msra.mxu0 0.0
      %2569 = vmatpush.msra.mxu0 0.0
      %2570 = vmatpush.msra.mxu0 %v2493
      %2571 = vmatmul.f32.gmra.mxu0 %v2481
      %v2572 = vpop.f32.mrf.mxu0
      %v2573 = vadd.f32 0.0, %v2572
      %2574 = vdwg.mxu0
      %v2575 = vadd.f32 %v2433, %v2513
      %v2576 = vadd.f32 %v2434, %v2533
      %v2577 = vadd.f32 %v2435, %v2553
      %v2578 = vadd.f32 %v2436, %v2573
      %2579 = vst [vmem:[#allocation1] ss:$2 sm:$0xff] %v252
      %s2580 = scalar_lea.vmem [#allocation1], 16
      %2581 = vst [vmem:[%s2580] ss:$2 sm:$0xff] %v253
      %v2582 = vld.sshfl [vmem:[#allocation1] sm:$0xff pattern:$0x75316420]
      %v2583 = vld.sshfl [vmem:[#allocation1 + $0x8] sm:$0xff pattern:$0x75316420]
      %v2584 = vld.sshfl [vmem:[#allocation1 + $0x10] sm:$0xff pattern:$0x75316420]
      %v2585 = vld.sshfl [vmem:[#allocation1 + $0x18] sm:$0xff pattern:$0x75316420]
      %2586 = vrot.lane.b32.xlu0 %v2582, 121
      %v2587 = vpop.permute.xlu0 %2586
      %2588 = vrot.lane.b32.xlu0 %v2583, 121
      %v2589 = vpop.permute.xlu0 %2588
      %2590 = vrot.lane.b32.xlu0 %v2584, 121
      %v2591 = vpop.permute.xlu0 %2590
      %2592 = vrot.lane.b32.xlu0 %v2585, 121
      %v2593 = vpop.permute.xlu0 %2592
      %vm2594 = vcmask 990208
      %v2595 = vsel %vm2594, %v2587, %v2589
      %v2596 = vsel %vm2594, %v2589, %v2591
      %v2597 = vsel %vm2594, %v2591, %v2593
      %2602 = vst [vmem:[#allocation1] ss:$2 sm:$0xff] %v252
      %v2603 = vld.sshfl [vmem:[#allocation1] sm:$0xff pattern:$0x75316420]
      %2604 = vrot.lane.b32.xlu0 %v2603, 121
      %v2605 = vpop.permute.xlu0 %2604
      %v2607 = vsel %vm2594, %v2593, %v2605
      %vm2608 = vmand %vm444, %vm448
      %vm2609 = vmand %vm445, %vm449
      %vm2610 = vmand %vm446, %vm450
      %vm2611 = vmand %vm447, %vm451
      %v2612 = vsel %vm2608, 1, 0
      %v2613 = vsel %vm2609, 1, 0
      %v2614 = vsel %vm2610, 1, 0
      %v2615 = vsel %vm2611, 1, 0
      %vm2616 = vcmp.eq.s32.totalorder %v2612, 1
      %vm2617 = vcmp.eq.s32.totalorder %v2613, 1
      %vm2618 = vcmp.eq.s32.totalorder %v2614, 1
      %vm2619 = vcmp.eq.s32.totalorder %v2615, 1
      %v2620 = vsel %vm2616, %v2595, %v430
      %v2621 = vsel %vm2617, %v2596, %v430
      %v2622 = vsel %vm2618, %v2597, %v430
      %v2623 = vsel %vm2619, %v2607, %v430
      %s2624 = scalar_lea.vmem %s2, 120
      %v2625 = vld [vmem:[%s2624] sm:$0xff]
      %v2627 = vsel %vm270, %v2625, 0
      %v2630 = vsel %vm274, %v2620, 0
      %v2633 = vsel %vm274, %v2621, 0
      %v2636 = vsel %vm274, %v2622, 0
      %v2639 = vsel %vm274, %v2623, 0
      %2641 = vmatpush.msra.mxu0 0.0
      %2642 = vmatpush.msra.mxu0 0.0
      %2643 = vmatpush.msra.mxu0 0.0
      %2644 = vmatpush.msra.mxu0 0.0
      %2645 = vmatpush.msra.mxu0 0.0
      %2646 = vmatpush.msra.mxu0 0.0
      %2647 = vmatpush.msra.mxu0 0.0
      %2648 = vmatpush.msra.mxu0 0.0
      %2649 = vmatpush.msra.mxu0 0.0
      %2650 = vmatpush.msra.mxu0 0.0
      %2651 = vmatpush.msra.mxu0 0.0
      %2652 = vmatpush.msra.mxu0 0.0
      %2653 = vmatpush.msra.mxu0 0.0
      %2654 = vmatpush.msra.mxu0 0.0
      %2655 = vmatpush.msra.mxu0 0.0
      %2656 = vmatpush.msra.mxu0 %v2630
      %2657 = vmatmul.f32.gmra.mxu0 %v2627
      %v2658 = vpop.f32.mrf.mxu0
      %v2659 = vadd.f32 0.0, %v2658
      %2660 = vdwg.mxu0
      %2661 = vmatpush.msra.mxu0 0.0
      %2662 = vmatpush.msra.mxu0 0.0
      %2663 = vmatpush.msra.mxu0 0.0
      %2664 = vmatpush.msra.mxu0 0.0
      %2665 = vmatpush.msra.mxu0 0.0
      %2666 = vmatpush.msra.mxu0 0.0
      %2667 = vmatpush.msra.mxu0 0.0
      %2668 = vmatpush.msra.mxu0 0.0
      %2669 = vmatpush.msra.mxu0 0.0
      %2670 = vmatpush.msra.mxu0 0.0
      %2671 = vmatpush.msra.mxu0 0.0
      %2672 = vmatpush.msra.mxu0 0.0
      %2673 = vmatpush.msra.mxu0 0.0
      %2674 = vmatpush.msra.mxu0 0.0
      %2675 = vmatpush.msra.mxu0 0.0
      %2676 = vmatpush.msra.mxu0 %v2633
      %2677 = vmatmul.f32.gmra.mxu0 %v2627
      %v2678 = vpop.f32.mrf.mxu0
      %v2679 = vadd.f32 0.0, %v2678
      %2680 = vdwg.mxu0
      %2681 = vmatpush.msra.mxu0 0.0
      %2682 = vmatpush.msra.mxu0 0.0
      %2683 = vmatpush.msra.mxu0 0.0
      %2684 = vmatpush.msra.mxu0 0.0
      %2685 = vmatpush.msra.mxu0 0.0
      %2686 = vmatpush.msra.mxu0 0.0
      %2687 = vmatpush.msra.mxu0 0.0
      %2688 = vmatpush.msra.mxu0 0.0
      %2689 = vmatpush.msra.mxu0 0.0
      %2690 = vmatpush.msra.mxu0 0.0
      %2691 = vmatpush.msra.mxu0 0.0
      %2692 = vmatpush.msra.mxu0 0.0
      %2693 = vmatpush.msra.mxu0 0.0
      %2694 = vmatpush.msra.mxu0 0.0
      %2695 = vmatpush.msra.mxu0 0.0
      %2696 = vmatpush.msra.mxu0 %v2636
      %2697 = vmatmul.f32.gmra.mxu0 %v2627
      %v2698 = vpop.f32.mrf.mxu0
      %v2699 = vadd.f32 0.0, %v2698
      %2700 = vdwg.mxu0
      %2701 = vmatpush.msra.mxu0 0.0
      %2702 = vmatpush.msra.mxu0 0.0
      %2703 = vmatpush.msra.mxu0 0.0
      %2704 = vmatpush.msra.mxu0 0.0
      %2705 = vmatpush.msra.mxu0 0.0
      %2706 = vmatpush.msra.mxu0 0.0
      %2707 = vmatpush.msra.mxu0 0.0
      %2708 = vmatpush.msra.mxu0 0.0
      %2709 = vmatpush.msra.mxu0 0.0
      %2710 = vmatpush.msra.mxu0 0.0
      %2711 = vmatpush.msra.mxu0 0.0
      %2712 = vmatpush.msra.mxu0 0.0
      %2713 = vmatpush.msra.mxu0 0.0
      %2714 = vmatpush.msra.mxu0 0.0
      %2715 = vmatpush.msra.mxu0 0.0
      %2716 = vmatpush.msra.mxu0 %v2639
      %2717 = vmatmul.f32.gmra.mxu0 %v2627
      %v2718 = vpop.f32.mrf.mxu0
      %v2719 = vadd.f32 0.0, %v2718
      %2720 = vdwg.mxu0
      %v2721 = vadd.f32 %v2575, %v2659
      %v2722 = vadd.f32 %v2576, %v2679
      %v2723 = vadd.f32 %v2577, %v2699
      %v2724 = vadd.f32 %v2578, %v2719
      %2725 = vst [vmem:[#allocation1] ss:$2 sm:$0xff] %v252
      %s2726 = scalar_lea.vmem [#allocation1], 16
      %2727 = vst [vmem:[%s2726] ss:$2 sm:$0xff] %v253
      %v2728 = vld.sshfl [vmem:[#allocation1] sm:$0xff pattern:$0x75316420]
      %v2729 = vld.sshfl [vmem:[#allocation1 + $0x8] sm:$0xff pattern:$0x75316420]
      %v2730 = vld.sshfl [vmem:[#allocation1 + $0x10] sm:$0xff pattern:$0x75316420]
      %v2731 = vld.sshfl [vmem:[#allocation1 + $0x18] sm:$0xff pattern:$0x75316420]
      %2732 = vrot.lane.b32.xlu0 %v2728, 120
      %v2733 = vpop.permute.xlu0 %2732
      %2734 = vrot.lane.b32.xlu0 %v2729, 120
      %v2735 = vpop.permute.xlu0 %2734
      %2736 = vrot.lane.b32.xlu0 %v2730, 120
      %v2737 = vpop.permute.xlu0 %2736
      %2738 = vrot.lane.b32.xlu0 %v2731, 120
      %v2739 = vpop.permute.xlu0 %2738
      %vm2740 = vcmask 982016
      %v2741 = vsel %vm2740, %v2733, %v2735
      %v2742 = vsel %vm2740, %v2735, %v2737
      %v2743 = vsel %vm2740, %v2737, %v2739
      %2748 = vst [vmem:[#allocation1] ss:$2 sm:$0xff] %v252
      %v2749 = vld.sshfl [vmem:[#allocation1] sm:$0xff pattern:$0x75316420]
      %2750 = vrot.lane.b32.xlu0 %v2749, 120
      %v2751 = vpop.permute.xlu0 %2750
      %v2753 = vsel %vm2740, %v2739, %v2751
      %v2754 = vsel %vm444, 1, 0
      %v2755 = vsel %vm445, 1, 0
      %v2756 = vsel %vm446, 1, 0
      %v2757 = vsel %vm447, 1, 0
      %vm2758 = vcmp.eq.s32.totalorder %v2754, 1
      %vm2759 = vcmp.eq.s32.totalorder %v2755, 1
      %vm2760 = vcmp.eq.s32.totalorder %v2756, 1
      %vm2761 = vcmp.eq.s32.totalorder %v2757, 1
      %v2762 = vsel %vm2758, %v2741, %v430
      %v2763 = vsel %vm2759, %v2742, %v430
      %v2764 = vsel %vm2760, %v2743, %v430
      %v2765 = vsel %vm2761, %v2753, %v430
      %s2766 = scalar_lea.vmem %s2, 128
      %v2767 = vld [vmem:[%s2766] sm:$0xff]
      %v2769 = vsel %vm270, %v2767, 0
      %v2772 = vsel %vm274, %v2762, 0
      %v2775 = vsel %vm274, %v2763, 0
      %v2778 = vsel %vm274, %v2764, 0
      %v2781 = vsel %vm274, %v2765, 0
      %2783 = vmatpush.msra.mxu0 0.0
      %2784 = vmatpush.msra.mxu0 0.0
      %2785 = vmatpush.msra.mxu0 0.0
      %2786 = vmatpush.msra.mxu0 0.0
      %2787 = vmatpush.msra.mxu0 0.0
      %2788 = vmatpush.msra.mxu0 0.0
      %2789 = vmatpush.msra.mxu0 0.0
      %2790 = vmatpush.msra.mxu0 0.0
      %2791 = vmatpush.msra.mxu0 0.0
      %2792 = vmatpush.msra.mxu0 0.0
      %2793 = vmatpush.msra.mxu0 0.0
      %2794 = vmatpush.msra.mxu0 0.0
      %2795 = vmatpush.msra.mxu0 0.0
      %2796 = vmatpush.msra.mxu0 0.0
      %2797 = vmatpush.msra.mxu0 0.0
      %2798 = vmatpush.msra.mxu0 %v2772
      %2799 = vmatmul.f32.gmra.mxu0 %v2769
      %v2800 = vpop.f32.mrf.mxu0
      %v2801 = vadd.f32 0.0, %v2800
      %2802 = vdwg.mxu0
      %2803 = vmatpush.msra.mxu0 0.0
      %2804 = vmatpush.msra.mxu0 0.0
      %2805 = vmatpush.msra.mxu0 0.0
      %2806 = vmatpush.msra.mxu0 0.0
      %2807 = vmatpush.msra.mxu0 0.0
      %2808 = vmatpush.msra.mxu0 0.0
      %2809 = vmatpush.msra.mxu0 0.0
      %2810 = vmatpush.msra.mxu0 0.0
      %2811 = vmatpush.msra.mxu0 0.0
      %2812 = vmatpush.msra.mxu0 0.0
      %2813 = vmatpush.msra.mxu0 0.0
      %2814 = vmatpush.msra.mxu0 0.0
      %2815 = vmatpush.msra.mxu0 0.0
      %2816 = vmatpush.msra.mxu0 0.0
      %2817 = vmatpush.msra.mxu0 0.0
      %2818 = vmatpush.msra.mxu0 %v2775
      %2819 = vmatmul.f32.gmra.mxu0 %v2769
      %v2820 = vpop.f32.mrf.mxu0
      %v2821 = vadd.f32 0.0, %v2820
      %2822 = vdwg.mxu0
      %2823 = vmatpush.msra.mxu0 0.0
      %2824 = vmatpush.msra.mxu0 0.0
      %2825 = vmatpush.msra.mxu0 0.0
      %2826 = vmatpush.msra.mxu0 0.0
      %2827 = vmatpush.msra.mxu0 0.0
      %2828 = vmatpush.msra.mxu0 0.0
      %2829 = vmatpush.msra.mxu0 0.0
      %2830 = vmatpush.msra.mxu0 0.0
      %2831 = vmatpush.msra.mxu0 0.0
      %2832 = vmatpush.msra.mxu0 0.0
      %2833 = vmatpush.msra.mxu0 0.0
      %2834 = vmatpush.msra.mxu0 0.0
      %2835 = vmatpush.msra.mxu0 0.0
      %2836 = vmatpush.msra.mxu0 0.0
      %2837 = vmatpush.msra.mxu0 0.0
      %2838 = vmatpush.msra.mxu0 %v2778
      %2839 = vmatmul.f32.gmra.mxu0 %v2769
      %v2840 = vpop.f32.mrf.mxu0
      %v2841 = vadd.f32 0.0, %v2840
      %2842 = vdwg.mxu0
      %2843 = vmatpush.msra.mxu0 0.0
      %2844 = vmatpush.msra.mxu0 0.0
      %2845 = vmatpush.msra.mxu0 0.0
      %2846 = vmatpush.msra.mxu0 0.0
      %2847 = vmatpush.msra.mxu0 0.0
      %2848 = vmatpush.msra.mxu0 0.0
      %2849 = vmatpush.msra.mxu0 0.0
      %2850 = vmatpush.msra.mxu0 0.0
      %2851 = vmatpush.msra.mxu0 0.0
      %2852 = vmatpush.msra.mxu0 0.0
      %2853 = vmatpush.msra.mxu0 0.0
      %2854 = vmatpush.msra.mxu0 0.0
      %2855 = vmatpush.msra.mxu0 0.0
      %2856 = vmatpush.msra.mxu0 0.0
      %2857 = vmatpush.msra.mxu0 0.0
      %2858 = vmatpush.msra.mxu0 %v2781
      %2859 = vmatmul.f32.gmra.mxu0 %v2769
      %v2860 = vpop.f32.mrf.mxu0
      %v2861 = vadd.f32 0.0, %v2860
      %2862 = vdwg.mxu0
      %v2863 = vadd.f32 %v2721, %v2801
      %v2864 = vadd.f32 %v2722, %v2821
      %v2865 = vadd.f32 %v2723, %v2841
      %v2866 = vadd.f32 %v2724, %v2861
      %2867 = vst [vmem:[#allocation1] ss:$2 sm:$0xff] %v252
      %s2868 = scalar_lea.vmem [#allocation1], 16
      %2869 = vst [vmem:[%s2868] ss:$2 sm:$0xff] %v253
      %v2870 = vld.sshfl [vmem:[#allocation1] sm:$0xff pattern:$0x75316420]
      %v2871 = vld.sshfl [vmem:[#allocation1 + $0x8] sm:$0xff pattern:$0x75316420]
      %v2872 = vld.sshfl [vmem:[#allocation1 + $0x10] sm:$0xff pattern:$0x75316420]
      %v2873 = vld.sshfl [vmem:[#allocation1 + $0x18] sm:$0xff pattern:$0x75316420]
      %2874 = vrot.lane.b32.xlu0 %v2870, 119
      %v2875 = vpop.permute.xlu0 %2874
      %2876 = vrot.lane.b32.xlu0 %v2871, 119
      %v2877 = vpop.permute.xlu0 %2876
      %2878 = vrot.lane.b32.xlu0 %v2872, 119
      %v2879 = vpop.permute.xlu0 %2878
      %2880 = vrot.lane.b32.xlu0 %v2873, 119
      %v2881 = vpop.permute.xlu0 %2880
      %vm2882 = vcmask 973824
      %v2883 = vsel %vm2882, %v2875, %v2877
      %v2884 = vsel %vm2882, %v2877, %v2879
      %v2885 = vsel %vm2882, %v2879, %v2881
      %2890 = vst [vmem:[#allocation1] ss:$2 sm:$0xff] %v252
      %v2891 = vld.sshfl [vmem:[#allocation1] sm:$0xff pattern:$0x75316420]
      %2892 = vrot.lane.b32.xlu0 %v2891, 119
      %v2893 = vpop.permute.xlu0 %2892
      %v2895 = vsel %vm2882, %v2881, %v2893
      %vm2896 = vmand %vm444, %vm452
      %vm2897 = vmand %vm445, %vm453
      %vm2898 = vmand %vm446, %vm454
      %vm2899 = vmand %vm447, %vm455
      %v2900 = vsel %vm2896, 1, 0
      %v2901 = vsel %vm2897, 1, 0
      %v2902 = vsel %vm2898, 1, 0
      %v2903 = vsel %vm2899, 1, 0
      %vm2904 = vcmp.eq.s32.totalorder %v2900, 1
      %vm2905 = vcmp.eq.s32.totalorder %v2901, 1
      %vm2906 = vcmp.eq.s32.totalorder %v2902, 1
      %vm2907 = vcmp.eq.s32.totalorder %v2903, 1
      %v2908 = vsel %vm2904, %v2883, %v430
      %v2909 = vsel %vm2905, %v2884, %v430
      %v2910 = vsel %vm2906, %v2885, %v430
      %v2911 = vsel %vm2907, %v2895, %v430
      %s2912 = scalar_lea.vmem %s2, 136
      %v2913 = vld [vmem:[%s2912] sm:$0xff]
      %v2915 = vsel %vm270, %v2913, 0
      %v2918 = vsel %vm274, %v2908, 0
      %v2921 = vsel %vm274, %v2909, 0
      %v2924 = vsel %vm274, %v2910, 0
      %v2927 = vsel %vm274, %v2911, 0
      %2929 = vmatpush.msra.mxu0 0.0
      %2930 = vmatpush.msra.mxu0 0.0
      %2931 = vmatpush.msra.mxu0 0.0
      %2932 = vmatpush.msra.mxu0 0.0
      %2933 = vmatpush.msra.mxu0 0.0
      %2934 = vmatpush.msra.mxu0 0.0
      %2935 = vmatpush.msra.mxu0 0.0
      %2936 = vmatpush.msra.mxu0 0.0
      %2937 = vmatpush.msra.mxu0 0.0
      %2938 = vmatpush.msra.mxu0 0.0
      %2939 = vmatpush.msra.mxu0 0.0
      %2940 = vmatpush.msra.mxu0 0.0
      %2941 = vmatpush.msra.mxu0 0.0
      %2942 = vmatpush.msra.mxu0 0.0
      %2943 = vmatpush.msra.mxu0 0.0
      %2944 = vmatpush.msra.mxu0 %v2918
      %2945 = vmatmul.f32.gmra.mxu0 %v2915
      %v2946 = vpop.f32.mrf.mxu0
      %v2947 = vadd.f32 0.0, %v2946
      %2948 = vdwg.mxu0
      %2949 = vmatpush.msra.mxu0 0.0
      %2950 = vmatpush.msra.mxu0 0.0
      %2951 = vmatpush.msra.mxu0 0.0
      %2952 = vmatpush.msra.mxu0 0.0
      %2953 = vmatpush.msra.mxu0 0.0
      %2954 = vmatpush.msra.mxu0 0.0
      %2955 = vmatpush.msra.mxu0 0.0
      %2956 = vmatpush.msra.mxu0 0.0
      %2957 = vmatpush.msra.mxu0 0.0
      %2958 = vmatpush.msra.mxu0 0.0
      %2959 = vmatpush.msra.mxu0 0.0
      %2960 = vmatpush.msra.mxu0 0.0
      %2961 = vmatpush.msra.mxu0 0.0
      %2962 = vmatpush.msra.mxu0 0.0
      %2963 = vmatpush.msra.mxu0 0.0
      %2964 = vmatpush.msra.mxu0 %v2921
      %2965 = vmatmul.f32.gmra.mxu0 %v2915
      %v2966 = vpop.f32.mrf.mxu0
      %v2967 = vadd.f32 0.0, %v2966
      %2968 = vdwg.mxu0
      %2969 = vmatpush.msra.mxu0 0.0
      %2970 = vmatpush.msra.mxu0 0.0
      %2971 = vmatpush.msra.mxu0 0.0
      %2972 = vmatpush.msra.mxu0 0.0
      %2973 = vmatpush.msra.mxu0 0.0
      %2974 = vmatpush.msra.mxu0 0.0
      %2975 = vmatpush.msra.mxu0 0.0
      %2976 = vmatpush.msra.mxu0 0.0
      %2977 = vmatpush.msra.mxu0 0.0
      %2978 = vmatpush.msra.mxu0 0.0
      %2979 = vmatpush.msra.mxu0 0.0
      %2980 = vmatpush.msra.mxu0 0.0
      %2981 = vmatpush.msra.mxu0 0.0
      %2982 = vmatpush.msra.mxu0 0.0
      %2983 = vmatpush.msra.mxu0 0.0
      %2984 = vmatpush.msra.mxu0 %v2924
      %2985 = vmatmul.f32.gmra.mxu0 %v2915
      %v2986 = vpop.f32.mrf.mxu0
      %v2987 = vadd.f32 0.0, %v2986
      %2988 = vdwg.mxu0
      %2989 = vmatpush.msra.mxu0 0.0
      %2990 = vmatpush.msra.mxu0 0.0
      %2991 = vmatpush.msra.mxu0 0.0
      %2992 = vmatpush.msra.mxu0 0.0
      %2993 = vmatpush.msra.mxu0 0.0
      %2994 = vmatpush.msra.mxu0 0.0
      %2995 = vmatpush.msra.mxu0 0.0
      %2996 = vmatpush.msra.mxu0 0.0
      %2997 = vmatpush.msra.mxu0 0.0
      %2998 = vmatpush.msra.mxu0 0.0
      %2999 = vmatpush.msra.mxu0 0.0
      %3000 = vmatpush.msra.mxu0 0.0
      %3001 = vmatpush.msra.mxu0 0.0
      %3002 = vmatpush.msra.mxu0 0.0
      %3003 = vmatpush.msra.mxu0 0.0
      %3004 = vmatpush.msra.mxu0 %v2927
      %3005 = vmatmul.f32.gmra.mxu0 %v2915
      %v3006 = vpop.f32.mrf.mxu0
      %v3007 = vadd.f32 0.0, %v3006
      %3008 = vdwg.mxu0
      %v3009 = vadd.f32 %v2863, %v2947
      %v3010 = vadd.f32 %v2864, %v2967
      %v3011 = vadd.f32 %v2865, %v2987
      %v3012 = vadd.f32 %v2866, %v3007
      %3013 = vst [vmem:[#allocation1] ss:$2 sm:$0xff] %v252
      %s3014 = scalar_lea.vmem [#allocation1], 16
      %3015 = vst [vmem:[%s3014] ss:$2 sm:$0xff] %v253
      %v3016 = vld.sshfl [vmem:[#allocation1] sm:$0xff pattern:$0x75316420]
      %v3017 = vld.sshfl [vmem:[#allocation1 + $0x8] sm:$0xff pattern:$0x75316420]
      %v3018 = vld.sshfl [vmem:[#allocation1 + $0x10] sm:$0xff pattern:$0x75316420]
      %v3019 = vld.sshfl [vmem:[#allocation1 + $0x18] sm:$0xff pattern:$0x75316420]
      %3020 = vrot.lane.b32.xlu0 %v3016, 73
      %v3021 = vpop.permute.xlu0 %3020
      %3022 = vrot.lane.b32.xlu0 %v3017, 73
      %v3023 = vpop.permute.xlu0 %3022
      %3024 = vrot.lane.b32.xlu0 %v3018, 73
      %v3025 = vpop.permute.xlu0 %3024
      %3026 = vrot.lane.b32.xlu0 %v3019, 73
      %v3027 = vpop.permute.xlu0 %3026
      %v3028 = vsel %vm476, %v3021, %v3023
      %v3029 = vsel %vm476, %v3023, %v3025
      %v3030 = vsel %vm476, %v3025, %v3027
      %3035 = vst [vmem:[#allocation1] ss:$2 sm:$0xff] %v252
      %v3036 = vld.sshfl [vmem:[#allocation1] sm:$0xff pattern:$0x75316420]
      %3037 = vrot.lane.b32.xlu0 %v3036, 73
      %v3038 = vpop.permute.xlu0 %3037
      %v3040 = vsel %vm476, %v3027, %v3038
      %vm3041 = vmand %vm436, %vm440
      %vm3042 = vmand %vm437, %vm441
      %vm3043 = vmand %vm438, %vm442
      %vm3044 = vmand %vm439, %vm443
      %vm3045 = vmand %vm3041, %vm448
      %vm3046 = vmand %vm3042, %vm449
      %vm3047 = vmand %vm3043, %vm450
      %vm3048 = vmand %vm3044, %vm451
      %v3049 = vsel %vm3045, 1, 0
      %v3050 = vsel %vm3046, 1, 0
      %v3051 = vsel %vm3047, 1, 0
      %v3052 = vsel %vm3048, 1, 0
      %vm3053 = vcmp.eq.s32.totalorder %v3049, 1
      %vm3054 = vcmp.eq.s32.totalorder %v3050, 1
      %vm3055 = vcmp.eq.s32.totalorder %v3051, 1
      %vm3056 = vcmp.eq.s32.totalorder %v3052, 1
      %v3057 = vsel %vm3053, %v3028, %v430
      %v3058 = vsel %vm3054, %v3029, %v430
      %v3059 = vsel %vm3055, %v3030, %v430
      %v3060 = vsel %vm3056, %v3040, %v430
      %s3061 = scalar_lea.vmem %s2, 144
      %v3062 = vld [vmem:[%s3061] sm:$0xff]
      %v3064 = vsel %vm270, %v3062, 0
      %v3067 = vsel %vm274, %v3057, 0
      %v3070 = vsel %vm274, %v3058, 0
      %v3073 = vsel %vm274, %v3059, 0
      %v3076 = vsel %vm274, %v3060, 0
      %3078 = vmatpush.msra.mxu0 0.0
      %3079 = vmatpush.msra.mxu0 0.0
      %3080 = vmatpush.msra.mxu0 0.0
      %3081 = vmatpush.msra.mxu0 0.0
      %3082 = vmatpush.msra.mxu0 0.0
      %3083 = vmatpush.msra.mxu0 0.0
      %3084 = vmatpush.msra.mxu0 0.0
      %3085 = vmatpush.msra.mxu0 0.0
      %3086 = vmatpush.msra.mxu0 0.0
      %3087 = vmatpush.msra.mxu0 0.0
      %3088 = vmatpush.msra.mxu0 0.0
      %3089 = vmatpush.msra.mxu0 0.0
      %3090 = vmatpush.msra.mxu0 0.0
      %3091 = vmatpush.msra.mxu0 0.0
      %3092 = vmatpush.msra.mxu0 0.0
      %3093 = vmatpush.msra.mxu0 %v3067
      %3094 = vmatmul.f32.gmra.mxu0 %v3064
      %v3095 = vpop.f32.mrf.mxu0
      %v3096 = vadd.f32 0.0, %v3095
      %3097 = vdwg.mxu0
      %3098 = vmatpush.msra.mxu0 0.0
      %3099 = vmatpush.msra.mxu0 0.0
      %3100 = vmatpush.msra.mxu0 0.0
      %3101 = vmatpush.msra.mxu0 0.0
      %3102 = vmatpush.msra.mxu0 0.0
      %3103 = vmatpush.msra.mxu0 0.0
      %3104 = vmatpush.msra.mxu0 0.0
      %3105 = vmatpush.msra.mxu0 0.0
      %3106 = vmatpush.msra.mxu0 0.0
      %3107 = vmatpush.msra.mxu0 0.0
      %3108 = vmatpush.msra.mxu0 0.0
      %3109 = vmatpush.msra.mxu0 0.0
      %3110 = vmatpush.msra.mxu0 0.0
      %3111 = vmatpush.msra.mxu0 0.0
      %3112 = vmatpush.msra.mxu0 0.0
      %3113 = vmatpush.msra.mxu0 %v3070
      %3114 = vmatmul.f32.gmra.mxu0 %v3064
      %v3115 = vpop.f32.mrf.mxu0
      %v3116 = vadd.f32 0.0, %v3115
      %3117 = vdwg.mxu0
      %3118 = vmatpush.msra.mxu0 0.0
      %3119 = vmatpush.msra.mxu0 0.0
      %3120 = vmatpush.msra.mxu0 0.0
      %3121 = vmatpush.msra.mxu0 0.0
      %3122 = vmatpush.msra.mxu0 0.0
      %3123 = vmatpush.msra.mxu0 0.0
      %3124 = vmatpush.msra.mxu0 0.0
      %3125 = vmatpush.msra.mxu0 0.0
      %3126 = vmatpush.msra.mxu0 0.0
      %3127 = vmatpush.msra.mxu0 0.0
      %3128 = vmatpush.msra.mxu0 0.0
      %3129 = vmatpush.msra.mxu0 0.0
      %3130 = vmatpush.msra.mxu0 0.0
      %3131 = vmatpush.msra.mxu0 0.0
      %3132 = vmatpush.msra.mxu0 0.0
      %3133 = vmatpush.msra.mxu0 %v3073
      %3134 = vmatmul.f32.gmra.mxu0 %v3064
      %v3135 = vpop.f32.mrf.mxu0
      %v3136 = vadd.f32 0.0, %v3135
      %3137 = vdwg.mxu0
      %3138 = vmatpush.msra.mxu0 0.0
      %3139 = vmatpush.msra.mxu0 0.0
      %3140 = vmatpush.msra.mxu0 0.0
      %3141 = vmatpush.msra.mxu0 0.0
      %3142 = vmatpush.msra.mxu0 0.0
      %3143 = vmatpush.msra.mxu0 0.0
      %3144 = vmatpush.msra.mxu0 0.0
      %3145 = vmatpush.msra.mxu0 0.0
      %3146 = vmatpush.msra.mxu0 0.0
      %3147 = vmatpush.msra.mxu0 0.0
      %3148 = vmatpush.msra.mxu0 0.0
      %3149 = vmatpush.msra.mxu0 0.0
      %3150 = vmatpush.msra.mxu0 0.0
      %3151 = vmatpush.msra.mxu0 0.0
      %3152 = vmatpush.msra.mxu0 0.0
      %3153 = vmatpush.msra.mxu0 %v3076
      %3154 = vmatmul.f32.gmra.mxu0 %v3064
      %v3155 = vpop.f32.mrf.mxu0
      %v3156 = vadd.f32 0.0, %v3155
      %3157 = vdwg.mxu0
      %v3158 = vadd.f32 %v3009, %v3096
      %v3159 = vadd.f32 %v3010, %v3116
      %v3160 = vadd.f32 %v3011, %v3136
      %v3161 = vadd.f32 %v3012, %v3156
      %3162 = vst [vmem:[#allocation1] ss:$2 sm:$0xff] %v252
      %s3163 = scalar_lea.vmem [#allocation1], 16
      %3164 = vst [vmem:[%s3163] ss:$2 sm:$0xff] %v253
      %v3165 = vld.sshfl [vmem:[#allocation1] sm:$0xff pattern:$0x75316420]
      %v3166 = vld.sshfl [vmem:[#allocation1 + $0x8] sm:$0xff pattern:$0x75316420]
      %v3167 = vld.sshfl [vmem:[#allocation1 + $0x10] sm:$0xff pattern:$0x75316420]
      %v3168 = vld.sshfl [vmem:[#allocation1 + $0x18] sm:$0xff pattern:$0x75316420]
      %3169 = vrot.lane.b32.xlu0 %v3165, 72
      %v3170 = vpop.permute.xlu0 %3169
      %3171 = vrot.lane.b32.xlu0 %v3166, 72
      %v3172 = vpop.permute.xlu0 %3171
      %3173 = vrot.lane.b32.xlu0 %v3167, 72
      %v3174 = vpop.permute.xlu0 %3173
      %3175 = vrot.lane.b32.xlu0 %v3168, 72
      %v3176 = vpop.permute.xlu0 %3175
      %v3177 = vsel %vm526, %v3170, %v3172
      %v3178 = vsel %vm526, %v3172, %v3174
      %v3179 = vsel %vm526, %v3174, %v3176
      %3184 = vst [vmem:[#allocation1] ss:$2 sm:$0xff] %v252
      %v3185 = vld.sshfl [vmem:[#allocation1] sm:$0xff pattern:$0x75316420]
      %3186 = vrot.lane.b32.xlu0 %v3185, 72
      %v3187 = vpop.permute.xlu0 %3186
      %v3189 = vsel %vm526, %v3176, %v3187
      %v3190 = vsel %vm3041, 1, 0
      %v3191 = vsel %vm3042, 1, 0
      %v3192 = vsel %vm3043, 1, 0
      %v3193 = vsel %vm3044, 1, 0
      %vm3194 = vcmp.eq.s32.totalorder %v3190, 1
      %vm3195 = vcmp.eq.s32.totalorder %v3191, 1
      %vm3196 = vcmp.eq.s32.totalorder %v3192, 1
      %vm3197 = vcmp.eq.s32.totalorder %v3193, 1
      %v3198 = vsel %vm3194, %v3177, %v430
      %v3199 = vsel %vm3195, %v3178, %v430
      %v3200 = vsel %vm3196, %v3179, %v430
      %v3201 = vsel %vm3197, %v3189, %v430
      %s3202 = scalar_lea.vmem %s2, 152
      %v3203 = vld [vmem:[%s3202] sm:$0xff]
      %v3205 = vsel %vm270, %v3203, 0
      %v3208 = vsel %vm274, %v3198, 0
      %v3211 = vsel %vm274, %v3199, 0
      %v3214 = vsel %vm274, %v3200, 0
      %v3217 = vsel %vm274, %v3201, 0
      %3219 = vmatpush.msra.mxu0 0.0
      %3220 = vmatpush.msra.mxu0 0.0
      %3221 = vmatpush.msra.mxu0 0.0
      %3222 = vmatpush.msra.mxu0 0.0
      %3223 = vmatpush.msra.mxu0 0.0
      %3224 = vmatpush.msra.mxu0 0.0
      %3225 = vmatpush.msra.mxu0 0.0
      %3226 = vmatpush.msra.mxu0 0.0
      %3227 = vmatpush.msra.mxu0 0.0
      %3228 = vmatpush.msra.mxu0 0.0
      %3229 = vmatpush.msra.mxu0 0.0
      %3230 = vmatpush.msra.mxu0 0.0
      %3231 = vmatpush.msra.mxu0 0.0
      %3232 = vmatpush.msra.mxu0 0.0
      %3233 = vmatpush.msra.mxu0 0.0
      %3234 = vmatpush.msra.mxu0 %v3208
      %3235 = vmatmul.f32.gmra.mxu0 %v3205
      %v3236 = vpop.f32.mrf.mxu0
      %v3237 = vadd.f32 0.0, %v3236
      %3238 = vdwg.mxu0
      %3239 = vmatpush.msra.mxu0 0.0
      %3240 = vmatpush.msra.mxu0 0.0
      %3241 = vmatpush.msra.mxu0 0.0
      %3242 = vmatpush.msra.mxu0 0.0
      %3243 = vmatpush.msra.mxu0 0.0
      %3244 = vmatpush.msra.mxu0 0.0
      %3245 = vmatpush.msra.mxu0 0.0
      %3246 = vmatpush.msra.mxu0 0.0
      %3247 = vmatpush.msra.mxu0 0.0
      %3248 = vmatpush.msra.mxu0 0.0
      %3249 = vmatpush.msra.mxu0 0.0
      %3250 = vmatpush.msra.mxu0 0.0
      %3251 = vmatpush.msra.mxu0 0.0
      %3252 = vmatpush.msra.mxu0 0.0
      %3253 = vmatpush.msra.mxu0 0.0
      %3254 = vmatpush.msra.mxu0 %v3211
      %3255 = vmatmul.f32.gmra.mxu0 %v3205
      %v3256 = vpop.f32.mrf.mxu0
      %v3257 = vadd.f32 0.0, %v3256
      %3258 = vdwg.mxu0
      %3259 = vmatpush.msra.mxu0 0.0
      %3260 = vmatpush.msra.mxu0 0.0
      %3261 = vmatpush.msra.mxu0 0.0
      %3262 = vmatpush.msra.mxu0 0.0
      %3263 = vmatpush.msra.mxu0 0.0
      %3264 = vmatpush.msra.mxu0 0.0
      %3265 = vmatpush.msra.mxu0 0.0
      %3266 = vmatpush.msra.mxu0 0.0
      %3267 = vmatpush.msra.mxu0 0.0
      %3268 = vmatpush.msra.mxu0 0.0
      %3269 = vmatpush.msra.mxu0 0.0
      %3270 = vmatpush.msra.mxu0 0.0
      %3271 = vmatpush.msra.mxu0 0.0
      %3272 = vmatpush.msra.mxu0 0.0
      %3273 = vmatpush.msra.mxu0 0.0
      %3274 = vmatpush.msra.mxu0 %v3214
      %3275 = vmatmul.f32.gmra.mxu0 %v3205
      %v3276 = vpop.f32.mrf.mxu0
      %v3277 = vadd.f32 0.0, %v3276
      %3278 = vdwg.mxu0
      %3279 = vmatpush.msra.mxu0 0.0
      %3280 = vmatpush.msra.mxu0 0.0
      %3281 = vmatpush.msra.mxu0 0.0
      %3282 = vmatpush.msra.mxu0 0.0
      %3283 = vmatpush.msra.mxu0 0.0
      %3284 = vmatpush.msra.mxu0 0.0
      %3285 = vmatpush.msra.mxu0 0.0
      %3286 = vmatpush.msra.mxu0 0.0
      %3287 = vmatpush.msra.mxu0 0.0
      %3288 = vmatpush.msra.mxu0 0.0
      %3289 = vmatpush.msra.mxu0 0.0
      %3290 = vmatpush.msra.mxu0 0.0
      %3291 = vmatpush.msra.mxu0 0.0
      %3292 = vmatpush.msra.mxu0 0.0
      %3293 = vmatpush.msra.mxu0 0.0
      %3294 = vmatpush.msra.mxu0 %v3217
      %3295 = vmatmul.f32.gmra.mxu0 %v3205
      %v3296 = vpop.f32.mrf.mxu0
      %v3297 = vadd.f32 0.0, %v3296
      %3298 = vdwg.mxu0
      %v3299 = vadd.f32 %v3158, %v3237
      %v3300 = vadd.f32 %v3159, %v3257
      %v3301 = vadd.f32 %v3160, %v3277
      %v3302 = vadd.f32 %v3161, %v3297
      %3303 = vst [vmem:[#allocation1] ss:$2 sm:$0xff] %v252
      %s3304 = scalar_lea.vmem [#allocation1], 16
      %3305 = vst [vmem:[%s3304] ss:$2 sm:$0xff] %v253
      %v3306 = vld.sshfl [vmem:[#allocation1] sm:$0xff pattern:$0x75316420]
      %v3307 = vld.sshfl [vmem:[#allocation1 + $0x8] sm:$0xff pattern:$0x75316420]
      %v3308 = vld.sshfl [vmem:[#allocation1 + $0x10] sm:$0xff pattern:$0x75316420]
      %v3309 = vld.sshfl [vmem:[#allocation1 + $0x18] sm:$0xff pattern:$0x75316420]
      %3310 = vrot.lane.b32.xlu0 %v3306, 71
      %v3311 = vpop.permute.xlu0 %3310
      %3312 = vrot.lane.b32.xlu0 %v3307, 71
      %v3313 = vpop.permute.xlu0 %3312
      %3314 = vrot.lane.b32.xlu0 %v3308, 71
      %v3315 = vpop.permute.xlu0 %3314
      %3316 = vrot.lane.b32.xlu0 %v3309, 71
      %v3317 = vpop.permute.xlu0 %3316
      %v3318 = vsel %vm759, %v3311, %v3313
      %v3319 = vsel %vm759, %v3313, %v3315
      %v3320 = vsel %vm759, %v3315, %v3317
      %3325 = vst [vmem:[#allocation1] ss:$2 sm:$0xff] %v252
      %v3326 = vld.sshfl [vmem:[#allocation1] sm:$0xff pattern:$0x75316420]
      %3327 = vrot.lane.b32.xlu0 %v3326, 71
      %v3328 = vpop.permute.xlu0 %3327
      %v3330 = vsel %vm759, %v3317, %v3328
      %vm3331 = vmand %vm3041, %vm452
      %vm3332 = vmand %vm3042, %vm453
      %vm3333 = vmand %vm3043, %vm454
      %vm3334 = vmand %vm3044, %vm455
      %v3335 = vsel %vm3331, 1, 0
      %v3336 = vsel %vm3332, 1, 0
      %v3337 = vsel %vm3333, 1, 0
      %v3338 = vsel %vm3334, 1, 0
      %vm3339 = vcmp.eq.s32.totalorder %v3335, 1
      %vm3340 = vcmp.eq.s32.totalorder %v3336, 1
      %vm3341 = vcmp.eq.s32.totalorder %v3337, 1
      %vm3342 = vcmp.eq.s32.totalorder %v3338, 1
      %v3343 = vsel %vm3339, %v3318, %v430
      %v3344 = vsel %vm3340, %v3319, %v430
      %v3345 = vsel %vm3341, %v3320, %v430
      %v3346 = vsel %vm3342, %v3330, %v430
      %s3347 = scalar_lea.vmem %s2, 160
      %v3348 = vld [vmem:[%s3347] sm:$0xff]
      %v3350 = vsel %vm270, %v3348, 0
      %v3353 = vsel %vm274, %v3343, 0
      %v3356 = vsel %vm274, %v3344, 0
      %v3359 = vsel %vm274, %v3345, 0
      %v3362 = vsel %vm274, %v3346, 0
      %3364 = vmatpush.msra.mxu0 0.0
      %3365 = vmatpush.msra.mxu0 0.0
      %3366 = vmatpush.msra.mxu0 0.0
      %3367 = vmatpush.msra.mxu0 0.0
      %3368 = vmatpush.msra.mxu0 0.0
      %3369 = vmatpush.msra.mxu0 0.0
      %3370 = vmatpush.msra.mxu0 0.0
      %3371 = vmatpush.msra.mxu0 0.0
      %3372 = vmatpush.msra.mxu0 0.0
      %3373 = vmatpush.msra.mxu0 0.0
      %3374 = vmatpush.msra.mxu0 0.0
      %3375 = vmatpush.msra.mxu0 0.0
      %3376 = vmatpush.msra.mxu0 0.0
      %3377 = vmatpush.msra.mxu0 0.0
      %3378 = vmatpush.msra.mxu0 0.0
      %3379 = vmatpush.msra.mxu0 %v3353
      %3380 = vmatmul.f32.gmra.mxu0 %v3350
      %v3381 = vpop.f32.mrf.mxu0
      %v3382 = vadd.f32 0.0, %v3381
      %3383 = vdwg.mxu0
      %3384 = vmatpush.msra.mxu0 0.0
      %3385 = vmatpush.msra.mxu0 0.0
      %3386 = vmatpush.msra.mxu0 0.0
      %3387 = vmatpush.msra.mxu0 0.0
      %3388 = vmatpush.msra.mxu0 0.0
      %3389 = vmatpush.msra.mxu0 0.0
      %3390 = vmatpush.msra.mxu0 0.0
      %3391 = vmatpush.msra.mxu0 0.0
      %3392 = vmatpush.msra.mxu0 0.0
      %3393 = vmatpush.msra.mxu0 0.0
      %3394 = vmatpush.msra.mxu0 0.0
      %3395 = vmatpush.msra.mxu0 0.0
      %3396 = vmatpush.msra.mxu0 0.0
      %3397 = vmatpush.msra.mxu0 0.0
      %3398 = vmatpush.msra.mxu0 0.0
      %3399 = vmatpush.msra.mxu0 %v3356
      %3400 = vmatmul.f32.gmra.mxu0 %v3350
      %v3401 = vpop.f32.mrf.mxu0
      %v3402 = vadd.f32 0.0, %v3401
      %3403 = vdwg.mxu0
      %3404 = vmatpush.msra.mxu0 0.0
      %3405 = vmatpush.msra.mxu0 0.0
      %3406 = vmatpush.msra.mxu0 0.0
      %3407 = vmatpush.msra.mxu0 0.0
      %3408 = vmatpush.msra.mxu0 0.0
      %3409 = vmatpush.msra.mxu0 0.0
      %3410 = vmatpush.msra.mxu0 0.0
      %3411 = vmatpush.msra.mxu0 0.0
      %3412 = vmatpush.msra.mxu0 0.0
      %3413 = vmatpush.msra.mxu0 0.0
      %3414 = vmatpush.msra.mxu0 0.0
      %3415 = vmatpush.msra.mxu0 0.0
      %3416 = vmatpush.msra.mxu0 0.0
      %3417 = vmatpush.msra.mxu0 0.0
      %3418 = vmatpush.msra.mxu0 0.0
      %3419 = vmatpush.msra.mxu0 %v3359
      %3420 = vmatmul.f32.gmra.mxu0 %v3350
      %v3421 = vpop.f32.mrf.mxu0
      %v3422 = vadd.f32 0.0, %v3421
      %3423 = vdwg.mxu0
      %3424 = vmatpush.msra.mxu0 0.0
      %3425 = vmatpush.msra.mxu0 0.0
      %3426 = vmatpush.msra.mxu0 0.0
      %3427 = vmatpush.msra.mxu0 0.0
      %3428 = vmatpush.msra.mxu0 0.0
      %3429 = vmatpush.msra.mxu0 0.0
      %3430 = vmatpush.msra.mxu0 0.0
      %3431 = vmatpush.msra.mxu0 0.0
      %3432 = vmatpush.msra.mxu0 0.0
      %3433 = vmatpush.msra.mxu0 0.0
      %3434 = vmatpush.msra.mxu0 0.0
      %3435 = vmatpush.msra.mxu0 0.0
      %3436 = vmatpush.msra.mxu0 0.0
      %3437 = vmatpush.msra.mxu0 0.0
      %3438 = vmatpush.msra.mxu0 0.0
      %3439 = vmatpush.msra.mxu0 %v3362
      %3440 = vmatmul.f32.gmra.mxu0 %v3350
      %v3441 = vpop.f32.mrf.mxu0
      %v3442 = vadd.f32 0.0, %v3441
      %3443 = vdwg.mxu0
      %v3444 = vadd.f32 %v3299, %v3382
      %v3445 = vadd.f32 %v3300, %v3402
      %v3446 = vadd.f32 %v3301, %v3422
      %v3447 = vadd.f32 %v3302, %v3442
      %3448 = vst [vmem:[#allocation1] ss:$2 sm:$0xff] %v252
      %s3449 = scalar_lea.vmem [#allocation1], 16
      %3450 = vst [vmem:[%s3449] ss:$2 sm:$0xff] %v253
      %v3451 = vld.sshfl [vmem:[#allocation1] sm:$0xff pattern:$0x75316420]
      %v3452 = vld.sshfl [vmem:[#allocation1 + $0x8] sm:$0xff pattern:$0x75316420]
      %v3453 = vld.sshfl [vmem:[#allocation1 + $0x10] sm:$0xff pattern:$0x75316420]
      %v3454 = vld.sshfl [vmem:[#allocation1 + $0x18] sm:$0xff pattern:$0x75316420]
      %3455 = vrot.lane.b32.xlu0 %v3451, 65
      %v3456 = vpop.permute.xlu0 %3455
      %3457 = vrot.lane.b32.xlu0 %v3452, 65
      %v3458 = vpop.permute.xlu0 %3457
      %3459 = vrot.lane.b32.xlu0 %v3453, 65
      %v3460 = vpop.permute.xlu0 %3459
      %3461 = vrot.lane.b32.xlu0 %v3454, 65
      %v3462 = vpop.permute.xlu0 %3461
      %v3463 = vsel %vm905, %v3456, %v3458
      %v3464 = vsel %vm905, %v3458, %v3460
      %v3465 = vsel %vm905, %v3460, %v3462
      %3470 = vst [vmem:[#allocation1] ss:$2 sm:$0xff] %v252
      %v3471 = vld.sshfl [vmem:[#allocation1] sm:$0xff pattern:$0x75316420]
      %3472 = vrot.lane.b32.xlu0 %v3471, 65
      %v3473 = vpop.permute.xlu0 %3472
      %v3475 = vsel %vm905, %v3462, %v3473
      %vm3476 = vmand %vm436, %vm448
      %vm3477 = vmand %vm437, %vm449
      %vm3478 = vmand %vm438, %vm450
      %vm3479 = vmand %vm439, %vm451
      %v3480 = vsel %vm3476, 1, 0
      %v3481 = vsel %vm3477, 1, 0
      %v3482 = vsel %vm3478, 1, 0
      %v3483 = vsel %vm3479, 1, 0
      %vm3484 = vcmp.eq.s32.totalorder %v3480, 1
      %vm3485 = vcmp.eq.s32.totalorder %v3481, 1
      %vm3486 = vcmp.eq.s32.totalorder %v3482, 1
      %vm3487 = vcmp.eq.s32.totalorder %v3483, 1
      %v3488 = vsel %vm3484, %v3463, %v430
      %v3489 = vsel %vm3485, %v3464, %v430
      %v3490 = vsel %vm3486, %v3465, %v430
      %v3491 = vsel %vm3487, %v3475, %v430
      %s3492 = scalar_lea.vmem %s2, 168
      %v3493 = vld [vmem:[%s3492] sm:$0xff]
      %v3495 = vsel %vm270, %v3493, 0
      %v3498 = vsel %vm274, %v3488, 0
      %v3501 = vsel %vm274, %v3489, 0
      %v3504 = vsel %vm274, %v3490, 0
      %v3507 = vsel %vm274, %v3491, 0
      %3509 = vmatpush.msra.mxu0 0.0
      %3510 = vmatpush.msra.mxu0 0.0
      %3511 = vmatpush.msra.mxu0 0.0
      %3512 = vmatpush.msra.mxu0 0.0
      %3513 = vmatpush.msra.mxu0 0.0
      %3514 = vmatpush.msra.mxu0 0.0
      %3515 = vmatpush.msra.mxu0 0.0
      %3516 = vmatpush.msra.mxu0 0.0
      %3517 = vmatpush.msra.mxu0 0.0
      %3518 = vmatpush.msra.mxu0 0.0
      %3519 = vmatpush.msra.mxu0 0.0
      %3520 = vmatpush.msra.mxu0 0.0
      %3521 = vmatpush.msra.mxu0 0.0
      %3522 = vmatpush.msra.mxu0 0.0
      %3523 = vmatpush.msra.mxu0 0.0
      %3524 = vmatpush.msra.mxu0 %v3498
      %3525 = vmatmul.f32.gmra.mxu0 %v3495
      %v3526 = vpop.f32.mrf.mxu0
      %v3527 = vadd.f32 0.0, %v3526
      %3528 = vdwg.mxu0
      %3529 = vmatpush.msra.mxu0 0.0
      %3530 = vmatpush.msra.mxu0 0.0
      %3531 = vmatpush.msra.mxu0 0.0
      %3532 = vmatpush.msra.mxu0 0.0
      %3533 = vmatpush.msra.mxu0 0.0
      %3534 = vmatpush.msra.mxu0 0.0
      %3535 = vmatpush.msra.mxu0 0.0
      %3536 = vmatpush.msra.mxu0 0.0
      %3537 = vmatpush.msra.mxu0 0.0
      %3538 = vmatpush.msra.mxu0 0.0
      %3539 = vmatpush.msra.mxu0 0.0
      %3540 = vmatpush.msra.mxu0 0.0
      %3541 = vmatpush.msra.mxu0 0.0
      %3542 = vmatpush.msra.mxu0 0.0
      %3543 = vmatpush.msra.mxu0 0.0
      %3544 = vmatpush.msra.mxu0 %v3501
      %3545 = vmatmul.f32.gmra.mxu0 %v3495
      %v3546 = vpop.f32.mrf.mxu0
      %v3547 = vadd.f32 0.0, %v3546
      %3548 = vdwg.mxu0
      %3549 = vmatpush.msra.mxu0 0.0
      %3550 = vmatpush.msra.mxu0 0.0
      %3551 = vmatpush.msra.mxu0 0.0
      %3552 = vmatpush.msra.mxu0 0.0
      %3553 = vmatpush.msra.mxu0 0.0
      %3554 = vmatpush.msra.mxu0 0.0
      %3555 = vmatpush.msra.mxu0 0.0
      %3556 = vmatpush.msra.mxu0 0.0
      %3557 = vmatpush.msra.mxu0 0.0
      %3558 = vmatpush.msra.mxu0 0.0
      %3559 = vmatpush.msra.mxu0 0.0
      %3560 = vmatpush.msra.mxu0 0.0
      %3561 = vmatpush.msra.mxu0 0.0
      %3562 = vmatpush.msra.mxu0 0.0
      %3563 = vmatpush.msra.mxu0 0.0
      %3564 = vmatpush.msra.mxu0 %v3504
      %3565 = vmatmul.f32.gmra.mxu0 %v3495
      %v3566 = vpop.f32.mrf.mxu0
      %v3567 = vadd.f32 0.0, %v3566
      %3568 = vdwg.mxu0
      %3569 = vmatpush.msra.mxu0 0.0
      %3570 = vmatpush.msra.mxu0 0.0
      %3571 = vmatpush.msra.mxu0 0.0
      %3572 = vmatpush.msra.mxu0 0.0
      %3573 = vmatpush.msra.mxu0 0.0
      %3574 = vmatpush.msra.mxu0 0.0
      %3575 = vmatpush.msra.mxu0 0.0
      %3576 = vmatpush.msra.mxu0 0.0
      %3577 = vmatpush.msra.mxu0 0.0
      %3578 = vmatpush.msra.mxu0 0.0
      %3579 = vmatpush.msra.mxu0 0.0
      %3580 = vmatpush.msra.mxu0 0.0
      %3581 = vmatpush.msra.mxu0 0.0
      %3582 = vmatpush.msra.mxu0 0.0
      %3583 = vmatpush.msra.mxu0 0.0
      %3584 = vmatpush.msra.mxu0 %v3507
      %3585 = vmatmul.f32.gmra.mxu0 %v3495
      %v3586 = vpop.f32.mrf.mxu0
      %v3587 = vadd.f32 0.0, %v3586
      %3588 = vdwg.mxu0
      %v3589 = vadd.f32 %v3444, %v3527
      %v3590 = vadd.f32 %v3445, %v3547
      %v3591 = vadd.f32 %v3446, %v3567
      %v3592 = vadd.f32 %v3447, %v3587
      %3593 = vst [vmem:[#allocation1] ss:$2 sm:$0xff] %v252
      %s3594 = scalar_lea.vmem [#allocation1], 16
      %3595 = vst [vmem:[%s3594] ss:$2 sm:$0xff] %v253
      %v3596 = vld.sshfl [vmem:[#allocation1] sm:$0xff pattern:$0x75316420]
      %v3597 = vld.sshfl [vmem:[#allocation1 + $0x8] sm:$0xff pattern:$0x75316420]
      %v3598 = vld.sshfl [vmem:[#allocation1 + $0x10] sm:$0xff pattern:$0x75316420]
      %v3599 = vld.sshfl [vmem:[#allocation1 + $0x18] sm:$0xff pattern:$0x75316420]
      %3600 = vrot.lane.b32.xlu0 %v3596, 64
      %v3601 = vpop.permute.xlu0 %3600
      %3602 = vrot.lane.b32.xlu0 %v3597, 64
      %v3603 = vpop.permute.xlu0 %3602
      %3604 = vrot.lane.b32.xlu0 %v3598, 64
      %v3605 = vpop.permute.xlu0 %3604
      %3606 = vrot.lane.b32.xlu0 %v3599, 64
      %v3607 = vpop.permute.xlu0 %3606
      %v3608 = vsel %vm1051, %v3601, %v3603
      %v3609 = vsel %vm1051, %v3603, %v3605
      %v3610 = vsel %vm1051, %v3605, %v3607
      %3615 = vst [vmem:[#allocation1] ss:$2 sm:$0xff] %v252
      %v3616 = vld.sshfl [vmem:[#allocation1] sm:$0xff pattern:$0x75316420]
      %3617 = vrot.lane.b32.xlu0 %v3616, 64
      %v3618 = vpop.permute.xlu0 %3617
      %v3620 = vsel %vm1051, %v3607, %v3618
      %v3621 = vsel %vm436, 1, 0
      %v3622 = vsel %vm437, 1, 0
      %v3623 = vsel %vm438, 1, 0
      %v3624 = vsel %vm439, 1, 0
      %vm3625 = vcmp.eq.s32.totalorder %v3621, 1
      %vm3626 = vcmp.eq.s32.totalorder %v3622, 1
      %vm3627 = vcmp.eq.s32.totalorder %v3623, 1
      %vm3628 = vcmp.eq.s32.totalorder %v3624, 1
      %v3629 = vsel %vm3625, %v3608, %v430
      %v3630 = vsel %vm3626, %v3609, %v430
      %v3631 = vsel %vm3627, %v3610, %v430
      %v3632 = vsel %vm3628, %v3620, %v430
      %s3633 = scalar_lea.vmem %s2, 176
      %v3634 = vld [vmem:[%s3633] sm:$0xff]
      %v3636 = vsel %vm270, %v3634, 0
      %v3639 = vsel %vm274, %v3629, 0
      %v3642 = vsel %vm274, %v3630, 0
      %v3645 = vsel %vm274, %v3631, 0
      %v3648 = vsel %vm274, %v3632, 0
      %3650 = vmatpush.msra.mxu0 0.0
      %3651 = vmatpush.msra.mxu0 0.0
      %3652 = vmatpush.msra.mxu0 0.0
      %3653 = vmatpush.msra.mxu0 0.0
      %3654 = vmatpush.msra.mxu0 0.0
      %3655 = vmatpush.msra.mxu0 0.0
      %3656 = vmatpush.msra.mxu0 0.0
      %3657 = vmatpush.msra.mxu0 0.0
      %3658 = vmatpush.msra.mxu0 0.0
      %3659 = vmatpush.msra.mxu0 0.0
      %3660 = vmatpush.msra.mxu0 0.0
      %3661 = vmatpush.msra.mxu0 0.0
      %3662 = vmatpush.msra.mxu0 0.0
      %3663 = vmatpush.msra.mxu0 0.0
      %3664 = vmatpush.msra.mxu0 0.0
      %3665 = vmatpush.msra.mxu0 %v3639
      %3666 = vmatmul.f32.gmra.mxu0 %v3636
      %v3667 = vpop.f32.mrf.mxu0
      %v3668 = vadd.f32 0.0, %v3667
      %3669 = vdwg.mxu0
      %3670 = vmatpush.msra.mxu0 0.0
      %3671 = vmatpush.msra.mxu0 0.0
      %3672 = vmatpush.msra.mxu0 0.0
      %3673 = vmatpush.msra.mxu0 0.0
      %3674 = vmatpush.msra.mxu0 0.0
      %3675 = vmatpush.msra.mxu0 0.0
      %3676 = vmatpush.msra.mxu0 0.0
      %3677 = vmatpush.msra.mxu0 0.0
      %3678 = vmatpush.msra.mxu0 0.0
      %3679 = vmatpush.msra.mxu0 0.0
      %3680 = vmatpush.msra.mxu0 0.0
      %3681 = vmatpush.msra.mxu0 0.0
      %3682 = vmatpush.msra.mxu0 0.0
      %3683 = vmatpush.msra.mxu0 0.0
      %3684 = vmatpush.msra.mxu0 0.0
      %3685 = vmatpush.msra.mxu0 %v3642
      %3686 = vmatmul.f32.gmra.mxu0 %v3636
      %v3687 = vpop.f32.mrf.mxu0
      %v3688 = vadd.f32 0.0, %v3687
      %3689 = vdwg.mxu0
      %3690 = vmatpush.msra.mxu0 0.0
      %3691 = vmatpush.msra.mxu0 0.0
      %3692 = vmatpush.msra.mxu0 0.0
      %3693 = vmatpush.msra.mxu0 0.0
      %3694 = vmatpush.msra.mxu0 0.0
      %3695 = vmatpush.msra.mxu0 0.0
      %3696 = vmatpush.msra.mxu0 0.0
      %3697 = vmatpush.msra.mxu0 0.0
      %3698 = vmatpush.msra.mxu0 0.0
      %3699 = vmatpush.msra.mxu0 0.0
      %3700 = vmatpush.msra.mxu0 0.0
      %3701 = vmatpush.msra.mxu0 0.0
      %3702 = vmatpush.msra.mxu0 0.0
      %3703 = vmatpush.msra.mxu0 0.0
      %3704 = vmatpush.msra.mxu0 0.0
      %3705 = vmatpush.msra.mxu0 %v3645
      %3706 = vmatmul.f32.gmra.mxu0 %v3636
      %v3707 = vpop.f32.mrf.mxu0
      %v3708 = vadd.f32 0.0, %v3707
      %3709 = vdwg.mxu0
      %3710 = vmatpush.msra.mxu0 0.0
      %3711 = vmatpush.msra.mxu0 0.0
      %3712 = vmatpush.msra.mxu0 0.0
      %3713 = vmatpush.msra.mxu0 0.0
      %3714 = vmatpush.msra.mxu0 0.0
      %3715 = vmatpush.msra.mxu0 0.0
      %3716 = vmatpush.msra.mxu0 0.0
      %3717 = vmatpush.msra.mxu0 0.0
      %3718 = vmatpush.msra.mxu0 0.0
      %3719 = vmatpush.msra.mxu0 0.0
      %3720 = vmatpush.msra.mxu0 0.0
      %3721 = vmatpush.msra.mxu0 0.0
      %3722 = vmatpush.msra.mxu0 0.0
      %3723 = vmatpush.msra.mxu0 0.0
      %3724 = vmatpush.msra.mxu0 0.0
      %3725 = vmatpush.msra.mxu0 %v3648
      %3726 = vmatmul.f32.gmra.mxu0 %v3636
      %v3727 = vpop.f32.mrf.mxu0
      %v3728 = vadd.f32 0.0, %v3727
      %3729 = vdwg.mxu0
      %v3730 = vadd.f32 %v3589, %v3668
      %v3731 = vadd.f32 %v3590, %v3688
      %v3732 = vadd.f32 %v3591, %v3708
      %v3733 = vadd.f32 %v3592, %v3728
      %3734 = vst [vmem:[#allocation1] ss:$2 sm:$0xff] %v252
      %s3735 = scalar_lea.vmem [#allocation1], 16
      %3736 = vst [vmem:[%s3735] ss:$2 sm:$0xff] %v253
      %v3737 = vld.sshfl [vmem:[#allocation1] sm:$0xff pattern:$0x75316420]
      %v3738 = vld.sshfl [vmem:[#allocation1 + $0x8] sm:$0xff pattern:$0x75316420]
      %v3739 = vld.sshfl [vmem:[#allocation1 + $0x10] sm:$0xff pattern:$0x75316420]
      %v3740 = vld.sshfl [vmem:[#allocation1 + $0x18] sm:$0xff pattern:$0x75316420]
      %3741 = vrot.lane.b32.xlu0 %v3737, 63
      %v3742 = vpop.permute.xlu0 %3741
      %3743 = vrot.lane.b32.xlu0 %v3738, 63
      %v3744 = vpop.permute.xlu0 %3743
      %3745 = vrot.lane.b32.xlu0 %v3739, 63
      %v3746 = vpop.permute.xlu0 %3745
      %3747 = vrot.lane.b32.xlu0 %v3740, 63
      %v3748 = vpop.permute.xlu0 %3747
      %v3749 = vsel %vm1193, %v3742, %v3744
      %v3750 = vsel %vm1193, %v3744, %v3746
      %v3751 = vsel %vm1193, %v3746, %v3748
      %3756 = vst [vmem:[#allocation1] ss:$2 sm:$0xff] %v252
      %v3757 = vld.sshfl [vmem:[#allocation1] sm:$0xff pattern:$0x75316420]
      %3758 = vrot.lane.b32.xlu0 %v3757, 63
      %v3759 = vpop.permute.xlu0 %3758
      %v3761 = vsel %vm1193, %v3748, %v3759
      %vm3762 = vmand %vm436, %vm452
      %vm3763 = vmand %vm437, %vm453
      %vm3764 = vmand %vm438, %vm454
      %vm3765 = vmand %vm439, %vm455
      %v3766 = vsel %vm3762, 1, 0
      %v3767 = vsel %vm3763, 1, 0
      %v3768 = vsel %vm3764, 1, 0
      %v3769 = vsel %vm3765, 1, 0
      %vm3770 = vcmp.eq.s32.totalorder %v3766, 1
      %vm3771 = vcmp.eq.s32.totalorder %v3767, 1
      %vm3772 = vcmp.eq.s32.totalorder %v3768, 1
      %vm3773 = vcmp.eq.s32.totalorder %v3769, 1
      %v3774 = vsel %vm3770, %v3749, %v430
      %v3775 = vsel %vm3771, %v3750, %v430
      %v3776 = vsel %vm3772, %v3751, %v430
      %v3777 = vsel %vm3773, %v3761, %v430
      %s3778 = scalar_lea.vmem %s2, 184
      %v3779 = vld [vmem:[%s3778] sm:$0xff]
      %v3781 = vsel %vm270, %v3779, 0
      %v3784 = vsel %vm274, %v3774, 0
      %v3787 = vsel %vm274, %v3775, 0
      %v3790 = vsel %vm274, %v3776, 0
      %v3793 = vsel %vm274, %v3777, 0
      %3795 = vmatpush.msra.mxu0 0.0
      %3796 = vmatpush.msra.mxu0 0.0
      %3797 = vmatpush.msra.mxu0 0.0
      %3798 = vmatpush.msra.mxu0 0.0
      %3799 = vmatpush.msra.mxu0 0.0
      %3800 = vmatpush.msra.mxu0 0.0
      %3801 = vmatpush.msra.mxu0 0.0
      %3802 = vmatpush.msra.mxu0 0.0
      %3803 = vmatpush.msra.mxu0 0.0
      %3804 = vmatpush.msra.mxu0 0.0
      %3805 = vmatpush.msra.mxu0 0.0
      %3806 = vmatpush.msra.mxu0 0.0
      %3807 = vmatpush.msra.mxu0 0.0
      %3808 = vmatpush.msra.mxu0 0.0
      %3809 = vmatpush.msra.mxu0 0.0
      %3810 = vmatpush.msra.mxu0 %v3784
      %3811 = vmatmul.f32.gmra.mxu0 %v3781
      %v3812 = vpop.f32.mrf.mxu0
      %v3813 = vadd.f32 0.0, %v3812
      %3814 = vdwg.mxu0
      %3815 = vmatpush.msra.mxu0 0.0
      %3816 = vmatpush.msra.mxu0 0.0
      %3817 = vmatpush.msra.mxu0 0.0
      %3818 = vmatpush.msra.mxu0 0.0
      %3819 = vmatpush.msra.mxu0 0.0
      %3820 = vmatpush.msra.mxu0 0.0
      %3821 = vmatpush.msra.mxu0 0.0
      %3822 = vmatpush.msra.mxu0 0.0
      %3823 = vmatpush.msra.mxu0 0.0
      %3824 = vmatpush.msra.mxu0 0.0
      %3825 = vmatpush.msra.mxu0 0.0
      %3826 = vmatpush.msra.mxu0 0.0
      %3827 = vmatpush.msra.mxu0 0.0
      %3828 = vmatpush.msra.mxu0 0.0
      %3829 = vmatpush.msra.mxu0 0.0
      %3830 = vmatpush.msra.mxu0 %v3787
      %3831 = vmatmul.f32.gmra.mxu0 %v3781
      %v3832 = vpop.f32.mrf.mxu0
      %v3833 = vadd.f32 0.0, %v3832
      %3834 = vdwg.mxu0
      %3835 = vmatpush.msra.mxu0 0.0
      %3836 = vmatpush.msra.mxu0 0.0
      %3837 = vmatpush.msra.mxu0 0.0
      %3838 = vmatpush.msra.mxu0 0.0
      %3839 = vmatpush.msra.mxu0 0.0
      %3840 = vmatpush.msra.mxu0 0.0
      %3841 = vmatpush.msra.mxu0 0.0
      %3842 = vmatpush.msra.mxu0 0.0
      %3843 = vmatpush.msra.mxu0 0.0
      %3844 = vmatpush.msra.mxu0 0.0
      %3845 = vmatpush.msra.mxu0 0.0
      %3846 = vmatpush.msra.mxu0 0.0
      %3847 = vmatpush.msra.mxu0 0.0
      %3848 = vmatpush.msra.mxu0 0.0
      %3849 = vmatpush.msra.mxu0 0.0
      %3850 = vmatpush.msra.mxu0 %v3790
      %3851 = vmatmul.f32.gmra.mxu0 %v3781
      %v3852 = vpop.f32.mrf.mxu0
      %v3853 = vadd.f32 0.0, %v3852
      %3854 = vdwg.mxu0
      %3855 = vmatpush.msra.mxu0 0.0
      %3856 = vmatpush.msra.mxu0 0.0
      %3857 = vmatpush.msra.mxu0 0.0
      %3858 = vmatpush.msra.mxu0 0.0
      %3859 = vmatpush.msra.mxu0 0.0
      %3860 = vmatpush.msra.mxu0 0.0
      %3861 = vmatpush.msra.mxu0 0.0
      %3862 = vmatpush.msra.mxu0 0.0
      %3863 = vmatpush.msra.mxu0 0.0
      %3864 = vmatpush.msra.mxu0 0.0
      %3865 = vmatpush.msra.mxu0 0.0
      %3866 = vmatpush.msra.mxu0 0.0
      %3867 = vmatpush.msra.mxu0 0.0
      %3868 = vmatpush.msra.mxu0 0.0
      %3869 = vmatpush.msra.mxu0 0.0
      %3870 = vmatpush.msra.mxu0 %v3793
      %3871 = vmatmul.f32.gmra.mxu0 %v3781
      %v3872 = vpop.f32.mrf.mxu0
      %v3873 = vadd.f32 0.0, %v3872
      %3874 = vdwg.mxu0
      %v3875 = vadd.f32 %v3730, %v3813
      %v3876 = vadd.f32 %v3731, %v3833
      %v3877 = vadd.f32 %v3732, %v3853
      %v3878 = vadd.f32 %v3733, %v3873
      %3879 = vst [vmem:[#allocation1] ss:$2 sm:$0xff] %v252
      %s3880 = scalar_lea.vmem [#allocation1], 16
      %3881 = vst [vmem:[%s3880] ss:$2 sm:$0xff] %v253
      %v3882 = vld.sshfl [vmem:[#allocation1] sm:$0xff pattern:$0x75316420]
      %v3883 = vld.sshfl [vmem:[#allocation1 + $0x8] sm:$0xff pattern:$0x75316420]
      %v3884 = vld.sshfl [vmem:[#allocation1 + $0x10] sm:$0xff pattern:$0x75316420]
      %v3885 = vld.sshfl [vmem:[#allocation1 + $0x18] sm:$0xff pattern:$0x75316420]
      %3886 = vrot.lane.b32.xlu0 %v3882, 57
      %v3887 = vpop.permute.xlu0 %3886
      %3888 = vrot.lane.b32.xlu0 %v3883, 57
      %v3889 = vpop.permute.xlu0 %3888
      %3890 = vrot.lane.b32.xlu0 %v3884, 57
      %v3891 = vpop.permute.xlu0 %3890
      %3892 = vrot.lane.b32.xlu0 %v3885, 57
      %v3893 = vpop.permute.xlu0 %3892
      %v3894 = vsel %vm1339, %v3887, %v3889
      %v3895 = vsel %vm1339, %v3889, %v3891
      %v3896 = vsel %vm1339, %v3891, %v3893
      %3901 = vst [vmem:[#allocation1] ss:$2 sm:$0xff] %v252
      %v3902 = vld.sshfl [vmem:[#allocation1] sm:$0xff pattern:$0x75316420]
      %3903 = vrot.lane.b32.xlu0 %v3902, 57
      %v3904 = vpop.permute.xlu0 %3903
      %v3906 = vsel %vm1339, %v3893, %v3904
      %vm3907 = vmand %vm436, %vm444
      %vm3908 = vmand %vm437, %vm445
      %vm3909 = vmand %vm438, %vm446
      %vm3910 = vmand %vm439, %vm447
      %vm3911 = vmand %vm3907, %vm448
      %vm3912 = vmand %vm3908, %vm449
      %vm3913 = vmand %vm3909, %vm450
      %vm3914 = vmand %vm3910, %vm451
      %v3915 = vsel %vm3911, 1, 0
      %v3916 = vsel %vm3912, 1, 0
      %v3917 = vsel %vm3913, 1, 0
      %v3918 = vsel %vm3914, 1, 0
      %vm3919 = vcmp.eq.s32.totalorder %v3915, 1
      %vm3920 = vcmp.eq.s32.totalorder %v3916, 1
      %vm3921 = vcmp.eq.s32.totalorder %v3917, 1
      %vm3922 = vcmp.eq.s32.totalorder %v3918, 1
      %v3923 = vsel %vm3919, %v3894, %v430
      %v3924 = vsel %vm3920, %v3895, %v430
      %v3925 = vsel %vm3921, %v3896, %v430
      %v3926 = vsel %vm3922, %v3906, %v430
      %s3927 = scalar_lea.vmem %s2, 192
      %v3928 = vld [vmem:[%s3927] sm:$0xff]
      %v3930 = vsel %vm270, %v3928, 0
      %v3933 = vsel %vm274, %v3923, 0
      %v3936 = vsel %vm274, %v3924, 0
      %v3939 = vsel %vm274, %v3925, 0
      %v3942 = vsel %vm274, %v3926, 0
      %3944 = vmatpush.msra.mxu0 0.0
      %3945 = vmatpush.msra.mxu0 0.0
      %3946 = vmatpush.msra.mxu0 0.0
      %3947 = vmatpush.msra.mxu0 0.0
      %3948 = vmatpush.msra.mxu0 0.0
      %3949 = vmatpush.msra.mxu0 0.0
      %3950 = vmatpush.msra.mxu0 0.0
      %3951 = vmatpush.msra.mxu0 0.0
      %3952 = vmatpush.msra.mxu0 0.0
      %3953 = vmatpush.msra.mxu0 0.0
      %3954 = vmatpush.msra.mxu0 0.0
      %3955 = vmatpush.msra.mxu0 0.0
      %3956 = vmatpush.msra.mxu0 0.0
      %3957 = vmatpush.msra.mxu0 0.0
      %3958 = vmatpush.msra.mxu0 0.0
      %3959 = vmatpush.msra.mxu0 %v3933
      %3960 = vmatmul.f32.gmra.mxu0 %v3930
      %v3961 = vpop.f32.mrf.mxu0
      %v3962 = vadd.f32 0.0, %v3961
      %3963 = vdwg.mxu0
      %3964 = vmatpush.msra.mxu0 0.0
      %3965 = vmatpush.msra.mxu0 0.0
      %3966 = vmatpush.msra.mxu0 0.0
      %3967 = vmatpush.msra.mxu0 0.0
      %3968 = vmatpush.msra.mxu0 0.0
      %3969 = vmatpush.msra.mxu0 0.0
      %3970 = vmatpush.msra.mxu0 0.0
      %3971 = vmatpush.msra.mxu0 0.0
      %3972 = vmatpush.msra.mxu0 0.0
      %3973 = vmatpush.msra.mxu0 0.0
      %3974 = vmatpush.msra.mxu0 0.0
      %3975 = vmatpush.msra.mxu0 0.0
      %3976 = vmatpush.msra.mxu0 0.0
      %3977 = vmatpush.msra.mxu0 0.0
      %3978 = vmatpush.msra.mxu0 0.0
      %3979 = vmatpush.msra.mxu0 %v3936
      %3980 = vmatmul.f32.gmra.mxu0 %v3930
      %v3981 = vpop.f32.mrf.mxu0
      %v3982 = vadd.f32 0.0, %v3981
      %3983 = vdwg.mxu0
      %3984 = vmatpush.msra.mxu0 0.0
      %3985 = vmatpush.msra.mxu0 0.0
      %3986 = vmatpush.msra.mxu0 0.0
      %3987 = vmatpush.msra.mxu0 0.0
      %3988 = vmatpush.msra.mxu0 0.0
      %3989 = vmatpush.msra.mxu0 0.0
      %3990 = vmatpush.msra.mxu0 0.0
      %3991 = vmatpush.msra.mxu0 0.0
      %3992 = vmatpush.msra.mxu0 0.0
      %3993 = vmatpush.msra.mxu0 0.0
      %3994 = vmatpush.msra.mxu0 0.0
      %3995 = vmatpush.msra.mxu0 0.0
      %3996 = vmatpush.msra.mxu0 0.0
      %3997 = vmatpush.msra.mxu0 0.0
      %3998 = vmatpush.msra.mxu0 0.0
      %3999 = vmatpush.msra.mxu0 %v3939
      %4000 = vmatmul.f32.gmra.mxu0 %v3930
      %v4001 = vpop.f32.mrf.mxu0
      %v4002 = vadd.f32 0.0, %v4001
      %4003 = vdwg.mxu0
      %4004 = vmatpush.msra.mxu0 0.0
      %4005 = vmatpush.msra.mxu0 0.0
      %4006 = vmatpush.msra.mxu0 0.0
      %4007 = vmatpush.msra.mxu0 0.0
      %4008 = vmatpush.msra.mxu0 0.0
      %4009 = vmatpush.msra.mxu0 0.0
      %4010 = vmatpush.msra.mxu0 0.0
      %4011 = vmatpush.msra.mxu0 0.0
      %4012 = vmatpush.msra.mxu0 0.0
      %4013 = vmatpush.msra.mxu0 0.0
      %4014 = vmatpush.msra.mxu0 0.0
      %4015 = vmatpush.msra.mxu0 0.0
      %4016 = vmatpush.msra.mxu0 0.0
      %4017 = vmatpush.msra.mxu0 0.0
      %4018 = vmatpush.msra.mxu0 0.0
      %4019 = vmatpush.msra.mxu0 %v3942
      %4020 = vmatmul.f32.gmra.mxu0 %v3930
      %v4021 = vpop.f32.mrf.mxu0
      %v4022 = vadd.f32 0.0, %v4021
      %4023 = vdwg.mxu0
      %v4024 = vadd.f32 %v3875, %v3962
      %v4025 = vadd.f32 %v3876, %v3982
      %v4026 = vadd.f32 %v3877, %v4002
      %v4027 = vadd.f32 %v3878, %v4022
      %4028 = vst [vmem:[#allocation1] ss:$2 sm:$0xff] %v252
      %s4029 = scalar_lea.vmem [#allocation1], 16
      %4030 = vst [vmem:[%s4029] ss:$2 sm:$0xff] %v253
      %v4031 = vld.sshfl [vmem:[#allocation1] sm:$0xff pattern:$0x75316420]
      %v4032 = vld.sshfl [vmem:[#allocation1 + $0x8] sm:$0xff pattern:$0x75316420]
      %v4033 = vld.sshfl [vmem:[#allocation1 + $0x10] sm:$0xff pattern:$0x75316420]
      %v4034 = vld.sshfl [vmem:[#allocation1 + $0x18] sm:$0xff pattern:$0x75316420]
      %4035 = vrot.lane.b32.xlu0 %v4031, 56
      %v4036 = vpop.permute.xlu0 %4035
      %4037 = vrot.lane.b32.xlu0 %v4032, 56
      %v4038 = vpop.permute.xlu0 %4037
      %4039 = vrot.lane.b32.xlu0 %v4033, 56
      %v4040 = vpop.permute.xlu0 %4039
      %4041 = vrot.lane.b32.xlu0 %v4034, 56
      %v4042 = vpop.permute.xlu0 %4041
      %v4043 = vsel %vm1489, %v4036, %v4038
      %v4044 = vsel %vm1489, %v4038, %v4040
      %v4045 = vsel %vm1489, %v4040, %v4042
      %4050 = vst [vmem:[#allocation1] ss:$2 sm:$0xff] %v252
      %v4051 = vld.sshfl [vmem:[#allocation1] sm:$0xff pattern:$0x75316420]
      %4052 = vrot.lane.b32.xlu0 %v4051, 56
      %v4053 = vpop.permute.xlu0 %4052
      %v4055 = vsel %vm1489, %v4042, %v4053
      %v4056 = vsel %vm3907, 1, 0
      %v4057 = vsel %vm3908, 1, 0
      %v4058 = vsel %vm3909, 1, 0
      %v4059 = vsel %vm3910, 1, 0
      %vm4060 = vcmp.eq.s32.totalorder %v4056, 1
      %vm4061 = vcmp.eq.s32.totalorder %v4057, 1
      %vm4062 = vcmp.eq.s32.totalorder %v4058, 1
      %vm4063 = vcmp.eq.s32.totalorder %v4059, 1
      %v4064 = vsel %vm4060, %v4043, %v430
      %v4065 = vsel %vm4061, %v4044, %v430
      %v4066 = vsel %vm4062, %v4045, %v430
      %v4067 = vsel %vm4063, %v4055, %v430
      %s4068 = scalar_lea.vmem %s2, 200
      %v4069 = vld [vmem:[%s4068] sm:$0xff]
      %v4071 = vsel %vm270, %v4069, 0
      %v4074 = vsel %vm274, %v4064, 0
      %v4077 = vsel %vm274, %v4065, 0
      %v4080 = vsel %vm274, %v4066, 0
      %v4083 = vsel %vm274, %v4067, 0
      %4085 = vmatpush.msra.mxu0 0.0
      %4086 = vmatpush.msra.mxu0 0.0
      %4087 = vmatpush.msra.mxu0 0.0
      %4088 = vmatpush.msra.mxu0 0.0
      %4089 = vmatpush.msra.mxu0 0.0
      %4090 = vmatpush.msra.mxu0 0.0
      %4091 = vmatpush.msra.mxu0 0.0
      %4092 = vmatpush.msra.mxu0 0.0
      %4093 = vmatpush.msra.mxu0 0.0
      %4094 = vmatpush.msra.mxu0 0.0
      %4095 = vmatpush.msra.mxu0 0.0
      %4096 = vmatpush.msra.mxu0 0.0
      %4097 = vmatpush.msra.mxu0 0.0
      %4098 = vmatpush.msra.mxu0 0.0
      %4099 = vmatpush.msra.mxu0 0.0
      %4100 = vmatpush.msra.mxu0 %v4074
      %4101 = vmatmul.f32.gmra.mxu0 %v4071
      %v4102 = vpop.f32.mrf.mxu0
      %v4103 = vadd.f32 0.0, %v4102
      %4104 = vdwg.mxu0
      %4105 = vmatpush.msra.mxu0 0.0
      %4106 = vmatpush.msra.mxu0 0.0
      %4107 = vmatpush.msra.mxu0 0.0
      %4108 = vmatpush.msra.mxu0 0.0
      %4109 = vmatpush.msra.mxu0 0.0
      %4110 = vmatpush.msra.mxu0 0.0
      %4111 = vmatpush.msra.mxu0 0.0
      %4112 = vmatpush.msra.mxu0 0.0
      %4113 = vmatpush.msra.mxu0 0.0
      %4114 = vmatpush.msra.mxu0 0.0
      %4115 = vmatpush.msra.mxu0 0.0
      %4116 = vmatpush.msra.mxu0 0.0
      %4117 = vmatpush.msra.mxu0 0.0
      %4118 = vmatpush.msra.mxu0 0.0
      %4119 = vmatpush.msra.mxu0 0.0
      %4120 = vmatpush.msra.mxu0 %v4077
      %4121 = vmatmul.f32.gmra.mxu0 %v4071
      %v4122 = vpop.f32.mrf.mxu0
      %v4123 = vadd.f32 0.0, %v4122
      %4124 = vdwg.mxu0
      %4125 = vmatpush.msra.mxu0 0.0
      %4126 = vmatpush.msra.mxu0 0.0
      %4127 = vmatpush.msra.mxu0 0.0
      %4128 = vmatpush.msra.mxu0 0.0
      %4129 = vmatpush.msra.mxu0 0.0
      %4130 = vmatpush.msra.mxu0 0.0
      %4131 = vmatpush.msra.mxu0 0.0
      %4132 = vmatpush.msra.mxu0 0.0
      %4133 = vmatpush.msra.mxu0 0.0
      %4134 = vmatpush.msra.mxu0 0.0
      %4135 = vmatpush.msra.mxu0 0.0
      %4136 = vmatpush.msra.mxu0 0.0
      %4137 = vmatpush.msra.mxu0 0.0
      %4138 = vmatpush.msra.mxu0 0.0
      %4139 = vmatpush.msra.mxu0 0.0
      %4140 = vmatpush.msra.mxu0 %v4080
      %4141 = vmatmul.f32.gmra.mxu0 %v4071
      %v4142 = vpop.f32.mrf.mxu0
      %v4143 = vadd.f32 0.0, %v4142
      %4144 = vdwg.mxu0
      %4145 = vmatpush.msra.mxu0 0.0
      %4146 = vmatpush.msra.mxu0 0.0
      %4147 = vmatpush.msra.mxu0 0.0
      %4148 = vmatpush.msra.mxu0 0.0
      %4149 = vmatpush.msra.mxu0 0.0
      %4150 = vmatpush.msra.mxu0 0.0
      %4151 = vmatpush.msra.mxu0 0.0
      %4152 = vmatpush.msra.mxu0 0.0
      %4153 = vmatpush.msra.mxu0 0.0
      %4154 = vmatpush.msra.mxu0 0.0
      %4155 = vmatpush.msra.mxu0 0.0
      %4156 = vmatpush.msra.mxu0 0.0
      %4157 = vmatpush.msra.mxu0 0.0
      %4158 = vmatpush.msra.mxu0 0.0
      %4159 = vmatpush.msra.mxu0 0.0
      %4160 = vmatpush.msra.mxu0 %v4083
      %4161 = vmatmul.f32.gmra.mxu0 %v4071
      %v4162 = vpop.f32.mrf.mxu0
      %v4163 = vadd.f32 0.0, %v4162
      %4164 = vdwg.mxu0
      %v4165 = vadd.f32 %v4024, %v4103
      %v4166 = vadd.f32 %v4025, %v4123
      %v4167 = vadd.f32 %v4026, %v4143
      %v4168 = vadd.f32 %v4027, %v4163
      %4169 = vst [vmem:[#allocation1] ss:$2 sm:$0xff] %v252
      %s4170 = scalar_lea.vmem [#allocation1], 16
      %4171 = vst [vmem:[%s4170] ss:$2 sm:$0xff] %v253
      %v4172 = vld.sshfl [vmem:[#allocation1] sm:$0xff pattern:$0x75316420]
      %v4173 = vld.sshfl [vmem:[#allocation1 + $0x8] sm:$0xff pattern:$0x75316420]
      %v4174 = vld.sshfl [vmem:[#allocation1 + $0x10] sm:$0xff pattern:$0x75316420]
      %v4175 = vld.sshfl [vmem:[#allocation1 + $0x18] sm:$0xff pattern:$0x75316420]
      %4176 = vrot.lane.b32.xlu0 %v4172, 55
      %v4177 = vpop.permute.xlu0 %4176
      %4178 = vrot.lane.b32.xlu0 %v4173, 55
      %v4179 = vpop.permute.xlu0 %4178
      %4180 = vrot.lane.b32.xlu0 %v4174, 55
      %v4181 = vpop.permute.xlu0 %4180
      %4182 = vrot.lane.b32.xlu0 %v4175, 55
      %v4183 = vpop.permute.xlu0 %4182
      %v4184 = vsel %vm1631, %v4177, %v4179
      %v4185 = vsel %vm1631, %v4179, %v4181
      %v4186 = vsel %vm1631, %v4181, %v4183
      %4191 = vst [vmem:[#allocation1] ss:$2 sm:$0xff] %v252
      %v4192 = vld.sshfl [vmem:[#allocation1] sm:$0xff pattern:$0x75316420]
      %4193 = vrot.lane.b32.xlu0 %v4192, 55
      %v4194 = vpop.permute.xlu0 %4193
      %v4196 = vsel %vm1631, %v4183, %v4194
      %vm4197 = vmand %vm3907, %vm452
      %vm4198 = vmand %vm3908, %vm453
      %vm4199 = vmand %vm3909, %vm454
      %vm4200 = vmand %vm3910, %vm455
      %v4201 = vsel %vm4197, 1, 0
      %v4202 = vsel %vm4198, 1, 0
      %v4203 = vsel %vm4199, 1, 0
      %v4204 = vsel %vm4200, 1, 0
      %vm4205 = vcmp.eq.s32.totalorder %v4201, 1
      %vm4206 = vcmp.eq.s32.totalorder %v4202, 1
      %vm4207 = vcmp.eq.s32.totalorder %v4203, 1
      %vm4208 = vcmp.eq.s32.totalorder %v4204, 1
      %v4209 = vsel %vm4205, %v4184, %v430
      %v4210 = vsel %vm4206, %v4185, %v430
      %v4211 = vsel %vm4207, %v4186, %v430
      %v4212 = vsel %vm4208, %v4196, %v430
      %s4213 = scalar_lea.vmem %s2, 208
      %v4214 = vld [vmem:[%s4213] sm:$0xff]
      %v4216 = vsel %vm270, %v4214, 0
      %v4219 = vsel %vm274, %v4209, 0
      %v4222 = vsel %vm274, %v4210, 0
      %v4225 = vsel %vm274, %v4211, 0
      %v4228 = vsel %vm274, %v4212, 0
      %4230 = vmatpush.msra.mxu0 0.0
      %4231 = vmatpush.msra.mxu0 0.0
      %4232 = vmatpush.msra.mxu0 0.0
      %4233 = vmatpush.msra.mxu0 0.0
      %4234 = vmatpush.msra.mxu0 0.0
      %4235 = vmatpush.msra.mxu0 0.0
      %4236 = vmatpush.msra.mxu0 0.0
      %4237 = vmatpush.msra.mxu0 0.0
      %4238 = vmatpush.msra.mxu0 0.0
      %4239 = vmatpush.msra.mxu0 0.0
      %4240 = vmatpush.msra.mxu0 0.0
      %4241 = vmatpush.msra.mxu0 0.0
      %4242 = vmatpush.msra.mxu0 0.0
      %4243 = vmatpush.msra.mxu0 0.0
      %4244 = vmatpush.msra.mxu0 0.0
      %4245 = vmatpush.msra.mxu0 %v4219
      %4246 = vmatmul.f32.gmra.mxu0 %v4216
      %v4247 = vpop.f32.mrf.mxu0
      %v4248 = vadd.f32 0.0, %v4247
      %4249 = vdwg.mxu0
      %4250 = vmatpush.msra.mxu0 0.0
      %4251 = vmatpush.msra.mxu0 0.0
      %4252 = vmatpush.msra.mxu0 0.0
      %4253 = vmatpush.msra.mxu0 0.0
      %4254 = vmatpush.msra.mxu0 0.0
      %4255 = vmatpush.msra.mxu0 0.0
      %4256 = vmatpush.msra.mxu0 0.0
      %4257 = vmatpush.msra.mxu0 0.0
      %4258 = vmatpush.msra.mxu0 0.0
      %4259 = vmatpush.msra.mxu0 0.0
      %4260 = vmatpush.msra.mxu0 0.0
      %4261 = vmatpush.msra.mxu0 0.0
      %4262 = vmatpush.msra.mxu0 0.0
      %4263 = vmatpush.msra.mxu0 0.0
      %4264 = vmatpush.msra.mxu0 0.0
      %4265 = vmatpush.msra.mxu0 %v4222
      %4266 = vmatmul.f32.gmra.mxu0 %v4216
      %v4267 = vpop.f32.mrf.mxu0
      %v4268 = vadd.f32 0.0, %v4267
      %4269 = vdwg.mxu0
      %4270 = vmatpush.msra.mxu0 0.0
      %4271 = vmatpush.msra.mxu0 0.0
      %4272 = vmatpush.msra.mxu0 0.0
      %4273 = vmatpush.msra.mxu0 0.0
      %4274 = vmatpush.msra.mxu0 0.0
      %4275 = vmatpush.msra.mxu0 0.0
      %4276 = vmatpush.msra.mxu0 0.0
      %4277 = vmatpush.msra.mxu0 0.0
      %4278 = vmatpush.msra.mxu0 0.0
      %4279 = vmatpush.msra.mxu0 0.0
      %4280 = vmatpush.msra.mxu0 0.0
      %4281 = vmatpush.msra.mxu0 0.0
      %4282 = vmatpush.msra.mxu0 0.0
      %4283 = vmatpush.msra.mxu0 0.0
      %4284 = vmatpush.msra.mxu0 0.0
      %4285 = vmatpush.msra.mxu0 %v4225
      %4286 = vmatmul.f32.gmra.mxu0 %v4216
      %v4287 = vpop.f32.mrf.mxu0
      %v4288 = vadd.f32 0.0, %v4287
      %4289 = vdwg.mxu0
      %4290 = vmatpush.msra.mxu0 0.0
      %4291 = vmatpush.msra.mxu0 0.0
      %4292 = vmatpush.msra.mxu0 0.0
      %4293 = vmatpush.msra.mxu0 0.0
      %4294 = vmatpush.msra.mxu0 0.0
      %4295 = vmatpush.msra.mxu0 0.0
      %4296 = vmatpush.msra.mxu0 0.0
      %4297 = vmatpush.msra.mxu0 0.0
      %4298 = vmatpush.msra.mxu0 0.0
      %4299 = vmatpush.msra.mxu0 0.0
      %4300 = vmatpush.msra.mxu0 0.0
      %4301 = vmatpush.msra.mxu0 0.0
      %4302 = vmatpush.msra.mxu0 0.0
      %4303 = vmatpush.msra.mxu0 0.0
      %4304 = vmatpush.msra.mxu0 0.0
      %4305 = vmatpush.msra.mxu0 %v4228
      %4306 = vmatmul.f32.gmra.mxu0 %v4216
      %v4307 = vpop.f32.mrf.mxu0
      %v4308 = vadd.f32 0.0, %v4307
      %4309 = vdwg.mxu0
      %v4310 = vadd.f32 %v4165, %v4248
      %v4311 = vadd.f32 %v4166, %v4268
      %v4312 = vadd.f32 %v4167, %v4288
      %v4313 = vadd.f32 %v4168, %v4308
      %v4314 = vld [vmem:[%s4] sm:$0xff]
      %4316 = vset.pattern.permute.xlu0 0
      %4317 = vperm.xlu0 %4316, %v4314
      %v4318 = vpop.permute.xlu0 %4317
      %v4320 = vadd.f32 %v4310, %v4318
      %v4321 = vadd.f32 %v4311, %v4318
      %v4322 = vadd.f32 %v4312, %v4318
      %v4323 = vadd.f32 %v4313, %v4318
      %v4324 = vmax.f32 %v4320, 0.0
      %v4325 = vmax.f32 %v4321, 0.0
      %v4326 = vmax.f32 %v4322, 0.0
      %v4327 = vmax.f32 %v4323, 0.0
      %s4328 = scalar_lea.vmem %s251, 32
      %4329 = vst [vmem:[%s4328] sm:$0xff] %v4324
      %4330 = vst [vmem:[%s4328 + $0x8] sm:$0xff] %v4325
      %4331 = vst [vmem:[%s4328 + $0x10] sm:$0xff] %v4326
      %4332 = vst [vmem:[%s4328 + $0x18] sm:$0xff] %v4327
      %p4333 = scmp.lt.s32.totalorder %s17, 1
      %s4334 = scalar_select %p4333, %s17, 1
      %s4335 = smul.addr %s4334, 8
      %s4336 = smul.addr %s4335, 8
      %s4337 = scalar_lea.vmem %s6, %s4336
      // Predicated region
      $region45: #{fire_module_3d.3} parent=43 // pred_check
        %p4338 = pneg %p166
      $region46: #{fire_module_3d.3} parent=43 // pred_check_branch
        %4340 = sbr.rel (%p4338) target = $region48
      $region47: #{fire_module_3d.3} parent=43 // pred_region
        _
      $region48: #{fire_module_3d.3} parent=43 // pred_fallthru
        _
    $region44: #{fire_module_3d.3} parent=5 // pred_fallthru
      _
    %p4341 = scmp.le.s32.totalorder 2, %s12
    // Predicated region
    $region49: #{fire_module_3d.3} parent=5 // pred_check
      %p4342 = pneg %p4341
    $region50: #{fire_module_3d.3} parent=5 // pred_check_branch
      %4344 = sbr.rel (%p4342) target = $region52
    $region51: #{fire_module_3d.3} parent=5 // pred_region
      %s4345 = ssub.s32 %s12, 2
      // Predicated region
      $region53: #{fire_module_3d.3} parent=51 // pred_check
        %p4346 = pneg %p172
      $region54: #{fire_module_3d.3} parent=51 // pred_check_branch
        %4348 = sbr.rel (%p4346) target = $region56
      $region55: #{fire_module_3d.3} parent=51 // pred_region
        %p4349 = scmp.lt.s32.totalorder %s18, 1
        %s4350 = scalar_select %p4349, %s18, 1
        %s4351 = smul.addr %s4350, 8
        %s4352 = smul.addr %s4351, 8
        %s4353 = scalar_lea.vmem %s6, %s4352
      $region56: #{fire_module_3d.3} parent=51 // pred_fallthru
        _
    $region52: #{fire_module_3d.3} parent=5 // pred_fallthru
      _
  $region6: #{fire_module_3d.3} parent=0 // loop_footer
    %s16 = sadd.s32 1, %s12
  $region7: #{fire_module_3d.3} parent=0 // loop_footer_branch
    %11 = sbr.rel target = $region3
  $region8: #{fire_module_3d.3} parent=0 // loop_exit
    _

</llo_original>
